<compile_context>
chip_gen: v7x
topology: tpu7x:2x2x1
jax: 0.10.0
libtpu: 0.0.40
codegen_flags: <defaults>
</compile_context>

<pallas_src>
import functools

import jax
import jax.numpy as jnp
import numpy as np
from jax import lax
from jax.experimental import pallas as pl
from jax.experimental.pallas import tpu as pltpu


def _sepconv_kernel(Hout, Wout, Cin, Cout, K,
                    x_ref, dw_ref, pw_ref, out_ref):
    """One batch element per grid step.

    x_ref : (1, Hout+K-1, Wout+K-1, Cin)  zero-padded input block (VMEM)
    dw_ref: (K*K, Cin)                    depthwise taps
    pw_ref: (Cin, Cout)                   pointwise weights
    out_ref: (1, Hout, Wout, Cout)
    """
    xp = x_ref[0]          # (Hp, Wp, Cin); stays on the register side
    dw = dw_ref[...]       # (K*K, Cin)

    # Depthwise KxK conv: K*K static in-register slices + VPU FMAs (no scratch pads,
    # no misaligned VMEM stores).
    acc = jnp.zeros((Hout, Wout, Cin), jnp.float32)
    for dy in range(K):
        for dx in range(K):
            tap = dw[K * dy + dx:K * dy + dx + 1, :]              # (1, Cin)
            acc = acc + xp[dy:dy + Hout, dx:dx + Wout, :] * tap

    # Pointwise 1x1 conv: a single MXU matmul over the channel dimension.
    y = jnp.dot(acc.reshape(Hout * Wout, Cin), pw_ref[...],
                preferred_element_type=jnp.float32,
                precision=lax.Precision.HIGHEST)
    out_ref[...] = y.reshape(1, Hout, Wout, Cout)


def separable_conv2d(x_nhwc, dw, pw, *, kernel_size=3, padding=1):
    """SeparableConv2d forward (stride=1, dilation=1, bias=False), NHWC layout.

    dw: (K*K, Cin)  with dw[kh*K + kw, c] == torch_conv1.weight[c, 0, kh, kw]
    pw: (Cin, Cout) with pw[i, o]         == torch_pointwise.weight[o, i, 0, 0]
    """
    N, H, W, Cin = x_nhwc.shape
    K = kernel_size
    Cout = pw.shape[1]
    Hout = H + 2 * padding - K + 1
    Wout = W + 2 * padding - K + 1
    assert Hout > 0 and Wout > 0, "kernel larger than padded input"
    assert dw.shape == (K * K, Cin) and pw.shape[0] == Cin

    # Zero-pad the spatial dims once on the host (one fused XLA pad); the kernel
    # then needs only static register slices instead of padded VMEM scratch.
    xpad = jnp.pad(x_nhwc.astype(jnp.float32),
                   ((0, 0), (padding, padding), (padding, padding), (0, 0)))
    Hp, Wp = H + 2 * padding, W + 2 * padding

    kernel = functools.partial(_sepconv_kernel, Hout, Wout, Cin, Cout, K)
    return pl.pallas_call(
        kernel,
        out_shape=jax.ShapeDtypeStruct((N, Hout, Wout, Cout), jnp.float32),
        grid_spec=pltpu.PrefetchScalarGridSpec(
            num_scalar_prefetch=0,
            grid=(N,),
            in_specs=[
                pl.BlockSpec((1, Hp, Wp, Cin), lambda b: (b, 0, 0, 0)),
                pl.BlockSpec((K * K, Cin), lambda b: (0, 0)),
                pl.BlockSpec((Cin, Cout), lambda b: (0, 0)),
            ],
            out_specs=pl.BlockSpec((1, Hout, Wout, Cout),
                                   lambda b: (b, 0, 0, 0)),
        ),
        compiler_params=pltpu.CompilerParams(
            dimension_semantics=("parallel",),
            vmem_limit_bytes=32 * 1024 * 1024,
        ),
    )(xpad, dw.astype(jnp.float32), pw.astype(jnp.float32))


# ---------------- pure-JAX (XLA) reference for verification ----------------
def reference_nhwc(x, dw, pw, kernel_size, padding):
    K = kernel_size
    Cin = x.shape[-1]
    Cout = pw.shape[1]
    w_dw = dw.reshape(K, K, 1, Cin)              # HWIO, feature_group_count=Cin
    w_pw = pw.reshape(1, 1, Cin, Cout)           # HWIO
    h = lax.conv_general_dilated(
        x, w_dw, (1, 1), ((padding, padding), (padding, padding)),
        feature_group_count=Cin,
        dimension_numbers=("NHWC", "HWIO", "NHWC"),
        precision=lax.Precision.HIGHEST)
    return lax.conv_general_dilated(
        h, w_pw, (1, 1), "VALID",
        dimension_numbers=("NHWC", "HWIO", "NHWC"),
        precision=lax.Precision.HIGHEST)


if __name__ == "__main__":
    # SeparableConv2d(in_channels=8, out_channels=16, kernel_size=3, padding=1,
    #                 stride=1, dilation=1, bias=False)  -- Xception's usage.
    N, Cin, Cout, H, W, K, P = 4, 8, 16, 16, 16, 3, 1
    key = jax.random.PRNGKey(0)
    kx, kd, kp = jax.random.split(key, 3)

    # Parameters in the PyTorch module's native layouts, converted once.
    w_dw_pt = 0.2 * jax.random.normal(kd, (Cin, 1, K, K), jnp.float32)     # conv1.weight
    w_pw_pt = 0.2 * jax.random.normal(kp, (Cout, Cin, 1, 1), jnp.float32)  # pointwise.weight
    dw = jnp.transpose(w_dw_pt[:, 0, :, :].reshape(Cin, K * K), (1, 0))    # (K*K, Cin)
    pw = jnp.transpose(w_pw_pt[:, :, 0, 0], (1, 0))                        # (Cin, Cout)

    # Kernel works in NHWC (PyTorch NCHW users transpose once at the model boundary).
    x = jax.random.normal(kx, (N, H, W, Cin), jnp.float32)

    out = jax.block_until_ready(
        separable_conv2d(x, dw, pw, kernel_size=K, padding=P))
    assert out.shape == (N, H, W, Cout)

    ref = reference_nhwc(x, dw, pw, K, P)
    np.testing.assert_allclose(np.asarray(out), np.asarray(ref),
                               atol=1e-3, rtol=1e-3)
    print("KERNEL_OK")
</pallas_src>

<mosaic_0001>
module attributes {stable_mosaic.version = 11 : i64} {
  func.func @_sepconv_kernel(%arg0: i32, %arg1: memref<1x18x18x8xf32, #tpu.memory_space<vmem>>, %arg2: memref<9x8xf32, #tpu.memory_space<vmem>>, %arg3: memref<8x16xf32, #tpu.memory_space<vmem>>, %arg4: memref<1x16x16x16xf32, #tpu.memory_space<vmem>>) attributes {dimension_semantics = [#tpu.dimension_semantics<parallel>], iteration_bounds = array<i64: 4>, scalar_prefetch = 0 : i64, scratch_operands = 0 : i64, tpu.core_type = #tpu.core_type<tc>, window_params = [{transform_indices = @transform_0, window_bounds = array<i64: 1, 18, 18, 8>}, {pipeline_mode = #tpu.pipeline_mode<synchronous>, transform_indices = @transform_1, window_bounds = array<i64: 9, 8>}, {pipeline_mode = #tpu.pipeline_mode<synchronous>, transform_indices = @transform_2, window_bounds = array<i64: 8, 16>}, {transform_indices = @transform_3, window_bounds = array<i64: 1, 16, 16, 16>}]} {
    %c0 = arith.constant 0 : index
    %c0_0 = arith.constant 0 : index
    %c0_1 = arith.constant 0 : index
    %c0_2 = arith.constant 0 : index
    %0 = vector.load %arg1[%c0, %c0_0, %c0_1, %c0_2] : memref<1x18x18x8xf32, #tpu.memory_space<vmem>>, vector<1x18x18x8xf32>
    %1 = vector.shape_cast %0 : vector<1x18x18x8xf32> to vector<18x18x8xf32>
    %c0_3 = arith.constant 0 : index
    %c0_4 = arith.constant 0 : index
    %2 = vector.load %arg2[%c0_3, %c0_4] : memref<9x8xf32, #tpu.memory_space<vmem>>, vector<9x8xf32>
    %cst = arith.constant 0.000000e+00 : f32
    %3 = vector.broadcast %cst : f32 to vector<16x16x8xf32>
    %4 = vector.extract_strided_slice %2 {offsets = [0, 0], sizes = [1, 8], strides = [1, 1]} : vector<9x8xf32> to vector<1x8xf32>
    %5 = vector.extract_strided_slice %1 {offsets = [0, 0, 0], sizes = [16, 16, 8], strides = [1, 1, 1]} : vector<18x18x8xf32> to vector<16x16x8xf32>
    %6 = vector.shape_cast %4 : vector<1x8xf32> to vector<1x1x8xf32>
    %7 = vector.broadcast %6 : vector<1x1x8xf32> to vector<16x16x8xf32>
    %8 = arith.mulf %5, %7 : vector<16x16x8xf32>
    %9 = arith.addf %3, %8 : vector<16x16x8xf32>
    %10 = vector.extract_strided_slice %2 {offsets = [1, 0], sizes = [1, 8], strides = [1, 1]} : vector<9x8xf32> to vector<1x8xf32>
    %11 = vector.extract_strided_slice %1 {offsets = [0, 1, 0], sizes = [16, 16, 8], strides = [1, 1, 1]} : vector<18x18x8xf32> to vector<16x16x8xf32>
    %12 = vector.shape_cast %10 : vector<1x8xf32> to vector<1x1x8xf32>
    %13 = vector.broadcast %12 : vector<1x1x8xf32> to vector<16x16x8xf32>
    %14 = arith.mulf %11, %13 : vector<16x16x8xf32>
    %15 = arith.addf %9, %14 : vector<16x16x8xf32>
    %16 = vector.extract_strided_slice %2 {offsets = [2, 0], sizes = [1, 8], strides = [1, 1]} : vector<9x8xf32> to vector<1x8xf32>
    %17 = vector.extract_strided_slice %1 {offsets = [0, 2, 0], sizes = [16, 16, 8], strides = [1, 1, 1]} : vector<18x18x8xf32> to vector<16x16x8xf32>
    %18 = vector.shape_cast %16 : vector<1x8xf32> to vector<1x1x8xf32>
    %19 = vector.broadcast %18 : vector<1x1x8xf32> to vector<16x16x8xf32>
    %20 = arith.mulf %17, %19 : vector<16x16x8xf32>
    %21 = arith.addf %15, %20 : vector<16x16x8xf32>
    %22 = vector.extract_strided_slice %2 {offsets = [3, 0], sizes = [1, 8], strides = [1, 1]} : vector<9x8xf32> to vector<1x8xf32>
    %23 = vector.extract_strided_slice %1 {offsets = [1, 0, 0], sizes = [16, 16, 8], strides = [1, 1, 1]} : vector<18x18x8xf32> to vector<16x16x8xf32>
    %24 = vector.shape_cast %22 : vector<1x8xf32> to vector<1x1x8xf32>
    %25 = vector.broadcast %24 : vector<1x1x8xf32> to vector<16x16x8xf32>
    %26 = arith.mulf %23, %25 : vector<16x16x8xf32>
    %27 = arith.addf %21, %26 : vector<16x16x8xf32>
    %28 = vector.extract_strided_slice %2 {offsets = [4, 0], sizes = [1, 8], strides = [1, 1]} : vector<9x8xf32> to vector<1x8xf32>
    %29 = vector.extract_strided_slice %1 {offsets = [1, 1, 0], sizes = [16, 16, 8], strides = [1, 1, 1]} : vector<18x18x8xf32> to vector<16x16x8xf32>
    %30 = vector.shape_cast %28 : vector<1x8xf32> to vector<1x1x8xf32>
    %31 = vector.broadcast %30 : vector<1x1x8xf32> to vector<16x16x8xf32>
    %32 = arith.mulf %29, %31 : vector<16x16x8xf32>
    %33 = arith.addf %27, %32 : vector<16x16x8xf32>
    %34 = vector.extract_strided_slice %2 {offsets = [5, 0], sizes = [1, 8], strides = [1, 1]} : vector<9x8xf32> to vector<1x8xf32>
    %35 = vector.extract_strided_slice %1 {offsets = [1, 2, 0], sizes = [16, 16, 8], strides = [1, 1, 1]} : vector<18x18x8xf32> to vector<16x16x8xf32>
    %36 = vector.shape_cast %34 : vector<1x8xf32> to vector<1x1x8xf32>
    %37 = vector.broadcast %36 : vector<1x1x8xf32> to vector<16x16x8xf32>
    %38 = arith.mulf %35, %37 : vector<16x16x8xf32>
    %39 = arith.addf %33, %38 : vector<16x16x8xf32>
    %40 = vector.extract_strided_slice %2 {offsets = [6, 0], sizes = [1, 8], strides = [1, 1]} : vector<9x8xf32> to vector<1x8xf32>
    %41 = vector.extract_strided_slice %1 {offsets = [2, 0, 0], sizes = [16, 16, 8], strides = [1, 1, 1]} : vector<18x18x8xf32> to vector<16x16x8xf32>
    %42 = vector.shape_cast %40 : vector<1x8xf32> to vector<1x1x8xf32>
    %43 = vector.broadcast %42 : vector<1x1x8xf32> to vector<16x16x8xf32>
    %44 = arith.mulf %41, %43 : vector<16x16x8xf32>
    %45 = arith.addf %39, %44 : vector<16x16x8xf32>
    %46 = vector.extract_strided_slice %2 {offsets = [7, 0], sizes = [1, 8], strides = [1, 1]} : vector<9x8xf32> to vector<1x8xf32>
    %47 = vector.extract_strided_slice %1 {offsets = [2, 1, 0], sizes = [16, 16, 8], strides = [1, 1, 1]} : vector<18x18x8xf32> to vector<16x16x8xf32>
    %48 = vector.shape_cast %46 : vector<1x8xf32> to vector<1x1x8xf32>
    %49 = vector.broadcast %48 : vector<1x1x8xf32> to vector<16x16x8xf32>
    %50 = arith.mulf %47, %49 : vector<16x16x8xf32>
    %51 = arith.addf %45, %50 : vector<16x16x8xf32>
    %52 = vector.extract_strided_slice %2 {offsets = [8, 0], sizes = [1, 8], strides = [1, 1]} : vector<9x8xf32> to vector<1x8xf32>
    %53 = vector.extract_strided_slice %1 {offsets = [2, 2, 0], sizes = [16, 16, 8], strides = [1, 1, 1]} : vector<18x18x8xf32> to vector<16x16x8xf32>
    %54 = vector.shape_cast %52 : vector<1x8xf32> to vector<1x1x8xf32>
    %55 = vector.broadcast %54 : vector<1x1x8xf32> to vector<16x16x8xf32>
    %56 = arith.mulf %53, %55 : vector<16x16x8xf32>
    %57 = arith.addf %51, %56 : vector<16x16x8xf32>
    %58 = vector.shape_cast %57 : vector<16x16x8xf32> to vector<256x8xf32>
    %c0_5 = arith.constant 0 : index
    %c0_6 = arith.constant 0 : index
    %59 = vector.load %arg3[%c0_5, %c0_6] : memref<8x16xf32, #tpu.memory_space<vmem>>, vector<8x16xf32>
    %cst_7 = arith.constant dense<0.000000e+00> : vector<256x16xf32>
    %60 = tpu.matmul %58, %59, %cst_7 {dimension_numbers = #tpu.dot_dimension_numbers<[1], [0], [0], [1], [0, 0, 1, 1], [], []>, precision = #tpu.contract_precision<fp32>} : vector<256x8xf32>, vector<8x16xf32>, vector<256x16xf32> -> vector<256x16xf32>
    %61 = vector.shape_cast %60 : vector<256x16xf32> to vector<1x16x16x16xf32>
    %c0_8 = arith.constant 0 : index
    %c0_9 = arith.constant 0 : index
    %c0_10 = arith.constant 0 : index
    %c0_11 = arith.constant 0 : index
    %62 = vector.load %arg4[%c0_8, %c0_9, %c0_10, %c0_11] : memref<1x16x16x16xf32, #tpu.memory_space<vmem>>, vector<1x16x16x16xf32>
    tpu.vector_store %arg4[%c0_8, %c0_9, %c0_10, %c0_11], %61 {strides = array<i32>} : memref<1x16x16x16xf32, #tpu.memory_space<vmem>>, vector<1x16x16x16xf32>,
    return
  }
  func.func @transform_0(%arg0: i32) -> (i32, i32, i32, i32) {
    %c0_i32 = arith.constant 0 : i32
    %c0_i32_0 = arith.constant 0 : i32
    %c0_i32_1 = arith.constant 0 : i32
    %c0_i32_2 = arith.constant 0 : i32
    return %arg0, %c0_i32, %c0_i32_0, %c0_i32_1 : i32, i32, i32, i32
  }
  func.func @transform_1(%arg0: i32) -> (i32, i32) {
    %c0_i32 = arith.constant 0 : i32
    %c0_i32_0 = arith.constant 0 : i32
    %c0_i32_1 = arith.constant 0 : i32
    return %c0_i32, %c0_i32_0 : i32, i32
  }
  func.func @transform_2(%arg0: i32) -> (i32, i32) {
    %c0_i32 = arith.constant 0 : i32
    %c0_i32_0 = arith.constant 0 : i32
    %c0_i32_1 = arith.constant 0 : i32
    return %c0_i32, %c0_i32_0 : i32, i32
  }
  func.func @transform_3(%arg0: i32) -> (i32, i32, i32, i32) {
    %c0_i32 = arith.constant 0 : i32
    %c0_i32_0 = arith.constant 0 : i32
    %c0_i32_1 = arith.constant 0 : i32
    %c0_i32_2 = arith.constant 0 : i32
    return %arg0, %c0_i32, %c0_i32_0, %c0_i32_1 : i32, i32, i32, i32
  }
}

</mosaic_0001>

<llo_original>
// kernel: tpu_custom_call.1
$region0: #{tpu_custom_call.1}
  #allocation0 [shape = 'u32[]', space=smem, size = 0x4, offset = 0x4, fixed_abs, tag = 'smem constant byte address 0x4 - core index']
  #allocation1 [shape = 'u32[144,128]{1,0:T(1,128)}', space=vmem, size = 0x12000, scoped, tag = 'internal scratch']
  %s0 = inlined_call_operand.vmem [shape: f32[4,18,18,8], index: 0, kind: input, shape index: {}]
  %s1 = inlined_call_operand.vmem [shape: f32[9,8], index: 1, kind: input, shape index: {}]
  %s2 = inlined_call_operand.vmem [shape: f32[8,16], index: 2, kind: input, shape index: {}]
  %s3 = inlined_call_operand.hbm [shape: f32[4,16,16,16], index: 3, kind: output, shape index: {}]
  %s4 = sld [smem:[#allocation0]]
  $region45: #{tpu_custom_call.1} parent=0
    _
  %s6 = ssub.s32 1, %s4
  %s7 = scalar_select 0, %s6, %s4
  $region1: #{tpu_custom_call.1} parent=0
    #allocation2 [shape = 'u8[262144]{0}', space=vmem, size = 0x40000, scoped, tag = 'output window, operand 0']
    #allocation3 [shape = 's32[2]{0}', space=sflag, size = 0x8, scoped, tag = 'scoped memory for tpu_custom_call.1']
    %8 = vsyncpa [#allocation3], 0
    %s9 = scalar_lea.sflag [#allocation3], 1
    %10 = vsyncpa %s9, 0
    loop: start=0, step=1, limit=6
    $region2: #{tpu_custom_call.1} parent=1 // loop_pre_header
      _
    $region3: #{tpu_custom_call.1} parent=1 // loop_header
      %s12 = sphi 0, %s16
      %p13 = scmp.ge.s32.totalorder %s12, 6
      %s22 = sphi 0, %s24
      %s25 = sphi 0, %s22
      %s26 = sphi 0, %s25
      %s42 = sphi 0, %s26
      %s46 = sphi 0, %s46
      %s48 = sphi 0, %s46
      %s49 = sphi 0, %s48
      %s63 = sphi 0, %s49
      %s67 = sphi 0, %s67
      %s69 = sphi 0, %s67
      %s70 = sphi 0, %s69
      %s84 = sphi 0, %s70
      %s90 = sphi 0, %s92
      %s93 = sphi 0, %s90
      %s94 = sphi 0, %s93
      %s110 = sphi 0, %s94
    $region4: #{tpu_custom_call.1} parent=1 // loop_header_branch
      %15 = sbr.rel (%p13) target = $region8
    $region5: #{tpu_custom_call.1} parent=1 // loop_body
      %s17 = ssub.s32 %s12, 1
      %s18 = ssub.s32 %s12, 2
      %s19 = sadd.s32 %s12, 1
      %s20 = ssub.s32 %s12, %s19
      %p21 = scmp.eq.s32.totalorder %s20, 0
      %s23 = sadd.s32 %s22, 1
      %s24 = scalar_select %p21, %s22, %s23
      %p27 = pneg %p21
      %p28 = scmp.eq.s32.totalorder %s12, 3
      %p29 = por %p27, %p28
      %p30 = scmp.ne.s32.totalorder %s22, %s25
      %p31 = scmp.eq.s32.totalorder %s12, 0
      %p32 = por %p30, %p31
      %p33 = scmp.ne.s32.totalorder %s22, %s25
      %p34 = scmp.eq.s32.totalorder %s17, 3
      %p35 = por %p33, %p34
      %p36 = scmp.ne.s32.totalorder %s25, %s26
      %p37 = scmp.eq.s32.totalorder %s17, 0
      %p38 = por %p36, %p37
      %p39 = scmp.ne.s32.totalorder %s25, %s26
      %p40 = scmp.eq.s32.totalorder %s18, 3
      %p41 = por %p39, %p40
      %p43 = scmp.ne.s32.totalorder %s26, %s42
      %p44 = scmp.eq.s32.totalorder %s18, 0
      %p45 = por %p43, %p44
      %s47 = sadd.s32 %s46, 1
      %p50 = scmp.eq.s32.totalorder %s12, 3
      %p51 = scmp.ne.s32.totalorder %s46, %s48
      %p52 = scmp.eq.s32.totalorder %s12, 0
      %p53 = por %p51, %p52
      %p54 = scmp.ne.s32.totalorder %s46, %s48
      %p55 = scmp.eq.s32.totalorder %s17, 3
      %p56 = por %p54, %p55
      %p57 = scmp.ne.s32.totalorder %s48, %s49
      %p58 = scmp.eq.s32.totalorder %s17, 0
      %p59 = por %p57, %p58
      %p60 = scmp.ne.s32.totalorder %s48, %s49
      %p61 = scmp.eq.s32.totalorder %s18, 3
      %p62 = por %p60, %p61
      %p64 = scmp.ne.s32.totalorder %s49, %s63
      %p65 = scmp.eq.s32.totalorder %s18, 0
      %p66 = por %p64, %p65
      %s68 = sadd.s32 %s67, 1
      %p71 = scmp.eq.s32.totalorder %s12, 3
      %p72 = scmp.ne.s32.totalorder %s67, %s69
      %p73 = scmp.eq.s32.totalorder %s12, 0
      %p74 = por %p72, %p73
      %p75 = scmp.ne.s32.totalorder %s67, %s69
      %p76 = scmp.eq.s32.totalorder %s17, 3
      %p77 = por %p75, %p76
      %p78 = scmp.ne.s32.totalorder %s69, %s70
      %p79 = scmp.eq.s32.totalorder %s17, 0
      %p80 = por %p78, %p79
      %p81 = scmp.ne.s32.totalorder %s69, %s70
      %p82 = scmp.eq.s32.totalorder %s18, 3
      %p83 = por %p81, %p82
      %p85 = scmp.ne.s32.totalorder %s70, %s84
      %p86 = scmp.eq.s32.totalorder %s18, 0
      %p87 = por %p85, %p86
      %s88 = ssub.s32 %s12, %s19
      %p89 = scmp.eq.s32.totalorder %s88, 0
      %s91 = sadd.s32 %s90, 1
      %s92 = scalar_select %p89, %s90, %s91
      %p95 = pneg %p89
      %p96 = scmp.eq.s32.totalorder %s12, 3
      %p97 = por %p95, %p96
      %p98 = scmp.ne.s32.totalorder %s90, %s93
      %p99 = scmp.eq.s32.totalorder %s12, 0
      %p100 = por %p98, %p99
      %p101 = scmp.ne.s32.totalorder %s90, %s93
      %p102 = scmp.eq.s32.totalorder %s17, 3
      %p103 = por %p101, %p102
      %p104 = scmp.ne.s32.totalorder %s93, %s94
      %p105 = scmp.eq.s32.totalorder %s17, 0
      %p106 = por %p104, %p105
      %p107 = scmp.ne.s32.totalorder %s93, %s94
      %p108 = scmp.eq.s32.totalorder %s18, 3
      %p109 = por %p107, %p108
      %p111 = scmp.ne.s32.totalorder %s94, %s110
      %p112 = scmp.eq.s32.totalorder %s18, 0
      %p113 = por %p111, %p112
      %p114 = scmp.le.s32.totalorder 1, %s12
      %p115 = scmp.lt.s32.totalorder %s12, 5
      %p116 = pnand %p114, %p115
      %p117 = pneg %p116
      // Predicated region
      $region9: #{tpu_custom_call.1} parent=5 // pred_check
        _
      $region10: #{tpu_custom_call.1} parent=5 // pred_check_branch
        %119 = sbr.rel (%p116) target = $region12
      $region11: #{tpu_custom_call.1} parent=5 // pred_region
        %s120 = ssub.s32 %s12, 1
        // Predicated region
        $region13: #{tpu_custom_call.1} parent=11 // pred_check
          %p121 = pneg %p59
        $region14: #{tpu_custom_call.1} parent=11 // pred_check_branch
          %123 = sbr.rel (%p121) target = $region16
        $region15: #{tpu_custom_call.1} parent=11 // pred_region
          _
        $region16: #{tpu_custom_call.1} parent=11 // pred_fallthru
          _
        // Predicated region
        $region17: #{tpu_custom_call.1} parent=11 // pred_check
          %p124 = pneg %p80
        $region18: #{tpu_custom_call.1} parent=11 // pred_check_branch
          %126 = sbr.rel (%p124) target = $region20
        $region19: #{tpu_custom_call.1} parent=11 // pred_region
          _
        $region20: #{tpu_custom_call.1} parent=11 // pred_fallthru
          _
      $region12: #{tpu_custom_call.1} parent=5 // pred_fallthru
        _
      %p127 = scmp.lt.s32.totalorder %s12, 4
      // Predicated region
      $region21: #{tpu_custom_call.1} parent=5 // pred_check
        %p128 = pneg %p127
      $region22: #{tpu_custom_call.1} parent=5 // pred_check_branch
        %130 = sbr.rel (%p128) target = $region24
      $region23: #{tpu_custom_call.1} parent=5 // pred_region
        // Predicated region
        $region25: #{tpu_custom_call.1} parent=23 // pred_check
          %p131 = pneg %p32
        $region26: #{tpu_custom_call.1} parent=23 // pred_check_branch
          %133 = sbr.rel (%p131) target = $region28
        $region27: #{tpu_custom_call.1} parent=23 // pred_region
          %p134 = scmp.lt.s32.totalorder %s12, 3
          %s135 = scalar_select %p134, %s12, 3
          %s136 = smul.addr %s135, 54
          %s137 = smul.addr %s136, 8
          %s138 = scalar_lea.vmem %s0, %s137
        $region28: #{tpu_custom_call.1} parent=23 // pred_fallthru
          _
      $region24: #{tpu_custom_call.1} parent=5 // pred_fallthru
        _
      %p139 = scmp.le.s32.totalorder 1, %s12
      %p140 = scmp.lt.s32.totalorder %s12, 5
      %p141 = pnand %p139, %p140
      %p142 = pneg %p141
      // Predicated region
      $region29: #{tpu_custom_call.1} parent=5 // pred_check
        _
      $region30: #{tpu_custom_call.1} parent=5 // pred_check_branch
        %144 = sbr.rel (%p141) target = $region32
      $region31: #{tpu_custom_call.1} parent=5 // pred_region
        %s145 = ssub.s32 %s12, 1
        %p146 = scmp.lt.s32.totalorder %s17, 3
        %s147 = scalar_select %p146, %s17, 3
        %s148 = smul.addr %s147, 54
        %s149 = smul.addr %s148, 8
        %s150 = scalar_lea.vmem %s0, %s149
        %p151 = pneg %p38
        %p152 = pneg %p35
        %p153 = pneg %p59
        %p154 = pneg %p56
        %p155 = pneg %p80
        %p156 = pneg %p77
        %p157 = pneg %p106
        %p158 = pneg %p103
        %s159 = sand.u32 %s93, 1
        %s160 = scalar_lea.sflag [#allocation3], %s159
        %s161 = sand.u32 %s93, 1
        %s162 = smul.addr %s161, 256
        %s163 = scalar_lea.vmem [#allocation2], %s162
        %p164 = scmp.lt.s32.totalorder %s17, 3
        %s165 = scalar_select %p164, %s17, 3
        %s166 = smul.addr %s165, 54
        %s167 = smul.addr %s166, 8
        %s168 = scalar_lea.vmem %s0, %s167
        %v169 = vld [vmem:[%s168] sm:$0xff]
        %v170 = vld [vmem:[%s168 + $0x8] sm:$0xff]
        %v171 = vld [vmem:[%s168 + $0x10] sm:$0x3]
        %v172 = vld [vmem:[%s168 + $0x18] sm:$0xff]
        %v173 = vld [vmem:[%s168 + $0x20] sm:$0xff]
        %v174 = vld [vmem:[%s168 + $0x28] sm:$0x3]
        %v175 = vld [vmem:[%s168 + $0x30] sm:$0xff]
        %v176 = vld [vmem:[%s168 + $0x38] sm:$0xff]
        %v177 = vld [vmem:[%s168 + $0x40] sm:$0x3]
        %v178 = vld [vmem:[%s168 + $0x48] sm:$0xff]
        %v179 = vld [vmem:[%s168 + $0x50] sm:$0xff]
        %v180 = vld [vmem:[%s168 + $0x58] sm:$0x3]
        %v181 = vld [vmem:[%s168 + $0x60] sm:$0xff]
        %v182 = vld [vmem:[%s168 + $0x68] sm:$0xff]
        %v183 = vld [vmem:[%s168 + $0x70] sm:$0x3]
        %v184 = vld [vmem:[%s168 + $0x78] sm:$0xff]
        %v185 = vld [vmem:[%s168 + $0x80] sm:$0xff]
        %v186 = vld [vmem:[%s168 + $0x88] sm:$0x3]
        %v187 = vld [vmem:[%s168 + $0x90] sm:$0xff]
        %v188 = vld [vmem:[%s168 + $0x98] sm:$0xff]
        %v189 = vld [vmem:[%s168 + $0xa0] sm:$0x3]
        %v190 = vld [vmem:[%s168 + $0xa8] sm:$0xff]
        %v191 = vld [vmem:[%s168 + $0xb0] sm:$0xff]
        %v192 = vld [vmem:[%s168 + $0xb8] sm:$0x3]
        %v193 = vld [vmem:[%s168 + $0xc0] sm:$0xff]
        %v194 = vld [vmem:[%s168 + $0xc8] sm:$0xff]
        %v195 = vld [vmem:[%s168 + $0xd0] sm:$0x3]
        %v196 = vld [vmem:[%s168 + $0xd8] sm:$0xff]
        %v197 = vld [vmem:[%s168 + $0xe0] sm:$0xff]
        %v198 = vld [vmem:[%s168 + $0xe8] sm:$0x3]
        %v199 = vld [vmem:[%s168 + $0xf0] sm:$0xff]
        %v200 = vld [vmem:[%s168 + $0xf8] sm:$0xff]
        %v201 = vld [vmem:[%s168 + $0x100] sm:$0x3]
        %v202 = vld [vmem:[%s168 + $0x108] sm:$0xff]
        %v203 = vld [vmem:[%s168 + $0x110] sm:$0xff]
        %v204 = vld [vmem:[%s168 + $0x118] sm:$0x3]
        %v205 = vld [vmem:[%s168 + $0x120] sm:$0xff]
        %v206 = vld [vmem:[%s168 + $0x128] sm:$0xff]
        %v207 = vld [vmem:[%s168 + $0x130] sm:$0x3]
        %v208 = vld [vmem:[%s168 + $0x138] sm:$0xff]
        %v209 = vld [vmem:[%s168 + $0x140] sm:$0xff]
        %v210 = vld [vmem:[%s168 + $0x148] sm:$0x3]
        %v211 = vld [vmem:[%s168 + $0x150] sm:$0xff]
        %v212 = vld [vmem:[%s168 + $0x158] sm:$0xff]
        %v213 = vld [vmem:[%s168 + $0x160] sm:$0x3]
        %v214 = vld [vmem:[%s168 + $0x168] sm:$0xff]
        %v215 = vld [vmem:[%s168 + $0x170] sm:$0xff]
        %v216 = vld [vmem:[%s168 + $0x178] sm:$0x3]
        %v217 = vld [vmem:[%s168 + $0x180] sm:$0xff]
        %v218 = vld [vmem:[%s168 + $0x188] sm:$0xff]
        %v219 = vld [vmem:[%s168 + $0x190] sm:$0x3]
        %v220 = vld [vmem:[%s168 + $0x198] sm:$0xff]
        %v221 = vld [vmem:[%s168 + $0x1a0] sm:$0xff]
        %v222 = vld [vmem:[%s168 + $0x1a8] sm:$0x3]
        %v223 = vld [vmem:[%s1] sm:$0xff]
        %v224 = vld [vmem:[%s1 + $0x8] sm:$0x1]
        %v225 = vlaneseq
        %v226 = vshrl.u32 %v225, 7
        %v227 = vsub.s32 0, %v226
        %v228 = vrot.slane %v223, %v227
        %v229 = vmul.f32 %v169, %v228
        %v230 = vmul.f32 %v170, %v228
        %v231 = vmul.f32 %v172, %v228
        %v232 = vmul.f32 %v173, %v228
        %v233 = vmul.f32 %v175, %v228
        %v234 = vmul.f32 %v176, %v228
        %v235 = vmul.f32 %v178, %v228
        %v236 = vmul.f32 %v179, %v228
        %v237 = vmul.f32 %v181, %v228
        %v238 = vmul.f32 %v182, %v228
        %v239 = vmul.f32 %v184, %v228
        %v240 = vmul.f32 %v185, %v228
        %v241 = vmul.f32 %v187, %v228
        %v242 = vmul.f32 %v188, %v228
        %v243 = vmul.f32 %v190, %v228
        %v244 = vmul.f32 %v191, %v228
        %v245 = vmul.f32 %v193, %v228
        %v246 = vmul.f32 %v194, %v228
        %v247 = vmul.f32 %v196, %v228
        %v248 = vmul.f32 %v197, %v228
        %v249 = vmul.f32 %v199, %v228
        %v250 = vmul.f32 %v200, %v228
        %v251 = vmul.f32 %v202, %v228
        %v252 = vmul.f32 %v203, %v228
        %v253 = vmul.f32 %v205, %v228
        %v254 = vmul.f32 %v206, %v228
        %v255 = vmul.f32 %v208, %v228
        %v256 = vmul.f32 %v209, %v228
        %v257 = vmul.f32 %v211, %v228
        %v258 = vmul.f32 %v212, %v228
        %v259 = vmul.f32 %v214, %v228
        %v260 = vmul.f32 %v215, %v228
        %v261 = vadd.f32 %v229, 0.0
        %v262 = vadd.f32 %v230, 0.0
        %v263 = vadd.f32 %v231, 0.0
        %v264 = vadd.f32 %v232, 0.0
        %v265 = vadd.f32 %v233, 0.0
        %v266 = vadd.f32 %v234, 0.0
        %v267 = vadd.f32 %v235, 0.0
        %v268 = vadd.f32 %v236, 0.0
        %v269 = vadd.f32 %v237, 0.0
        %v270 = vadd.f32 %v238, 0.0
        %v271 = vadd.f32 %v239, 0.0
        %v272 = vadd.f32 %v240, 0.0
        %v273 = vadd.f32 %v241, 0.0
        %v274 = vadd.f32 %v242, 0.0
        %v275 = vadd.f32 %v243, 0.0
        %v276 = vadd.f32 %v244, 0.0
        %v277 = vadd.f32 %v245, 0.0
        %v278 = vadd.f32 %v246, 0.0
        %v279 = vadd.f32 %v247, 0.0
        %v280 = vadd.f32 %v248, 0.0
        %v281 = vadd.f32 %v249, 0.0
        %v282 = vadd.f32 %v250, 0.0
        %v283 = vadd.f32 %v251, 0.0
        %v284 = vadd.f32 %v252, 0.0
        %v285 = vadd.f32 %v253, 0.0
        %v286 = vadd.f32 %v254, 0.0
        %v287 = vadd.f32 %v255, 0.0
        %v288 = vadd.f32 %v256, 0.0
        %v289 = vadd.f32 %v257, 0.0
        %v290 = vadd.f32 %v258, 0.0
        %v291 = vadd.f32 %v259, 0.0
        %v292 = vadd.f32 %v260, 0.0
        %v293 = vlaneseq
        %v294 = vshrl.u32 %v293, 7
        %v295 = vsub.s32 1, %v294
        %v296 = vrot.slane %v223, %v295
        %v297 = vmul.f32 %v169, %v296
        %v298 = vmul.f32 %v170, %v296
        %v299 = vmul.f32 %v171, %v296
        %v300 = vmul.f32 %v172, %v296
        %v301 = vmul.f32 %v173, %v296
        %v302 = vmul.f32 %v174, %v296
        %v303 = vmul.f32 %v175, %v296
        %v304 = vmul.f32 %v176, %v296
        %v305 = vmul.f32 %v177, %v296
        %v306 = vmul.f32 %v178, %v296
        %v307 = vmul.f32 %v179, %v296
        %v308 = vmul.f32 %v180, %v296
        %v309 = vmul.f32 %v181, %v296
        %v310 = vmul.f32 %v182, %v296
        %v311 = vmul.f32 %v183, %v296
        %v312 = vmul.f32 %v184, %v296
        %v313 = vmul.f32 %v185, %v296
        %v314 = vmul.f32 %v186, %v296
        %v315 = vmul.f32 %v187, %v296
        %v316 = vmul.f32 %v188, %v296
        %v317 = vmul.f32 %v189, %v296
        %v318 = vmul.f32 %v190, %v296
        %v319 = vmul.f32 %v191, %v296
        %v320 = vmul.f32 %v192, %v296
        %v321 = vmul.f32 %v193, %v296
        %v322 = vmul.f32 %v194, %v296
        %v323 = vmul.f32 %v195, %v296
        %v324 = vmul.f32 %v196, %v296
        %v325 = vmul.f32 %v197, %v296
        %v326 = vmul.f32 %v198, %v296
        %v327 = vmul.f32 %v199, %v296
        %v328 = vmul.f32 %v200, %v296
        %v329 = vmul.f32 %v201, %v296
        %v330 = vmul.f32 %v202, %v296
        %v331 = vmul.f32 %v203, %v296
        %v332 = vmul.f32 %v204, %v296
        %v333 = vmul.f32 %v205, %v296
        %v334 = vmul.f32 %v206, %v296
        %v335 = vmul.f32 %v207, %v296
        %v336 = vmul.f32 %v208, %v296
        %v337 = vmul.f32 %v209, %v296
        %v338 = vmul.f32 %v210, %v296
        %v339 = vmul.f32 %v211, %v296
        %v340 = vmul.f32 %v212, %v296
        %v341 = vmul.f32 %v213, %v296
        %v342 = vmul.f32 %v214, %v296
        %v343 = vmul.f32 %v215, %v296
        %v344 = vmul.f32 %v216, %v296
        %vm393 = vcmask 1046528
        %v394 = vrot.slane %v297, 1
        %v395 = vrot.slane %v298, 1
        %v396 = vsel %vm393, %v394, %v395
        %v397 = vrot.slane %v299, 1
        %v398 = vsel %vm393, %v395, %v397
        %v399 = vrot.slane %v300, 1
        %v400 = vrot.slane %v301, 1
        %v401 = vsel %vm393, %v399, %v400
        %v402 = vrot.slane %v302, 1
        %v403 = vsel %vm393, %v400, %v402
        %v404 = vrot.slane %v303, 1
        %v405 = vrot.slane %v304, 1
        %v406 = vsel %vm393, %v404, %v405
        %v407 = vrot.slane %v305, 1
        %v408 = vsel %vm393, %v405, %v407
        %v409 = vrot.slane %v306, 1
        %v410 = vrot.slane %v307, 1
        %v411 = vsel %vm393, %v409, %v410
        %v412 = vrot.slane %v308, 1
        %v413 = vsel %vm393, %v410, %v412
        %v414 = vrot.slane %v309, 1
        %v415 = vrot.slane %v310, 1
        %v416 = vsel %vm393, %v414, %v415
        %v417 = vrot.slane %v311, 1
        %v418 = vsel %vm393, %v415, %v417
        %v419 = vrot.slane %v312, 1
        %v420 = vrot.slane %v313, 1
        %v421 = vsel %vm393, %v419, %v420
        %v422 = vrot.slane %v314, 1
        %v423 = vsel %vm393, %v420, %v422
        %v424 = vrot.slane %v315, 1
        %v425 = vrot.slane %v316, 1
        %v426 = vsel %vm393, %v424, %v425
        %v427 = vrot.slane %v317, 1
        %v428 = vsel %vm393, %v425, %v427
        %v429 = vrot.slane %v318, 1
        %v430 = vrot.slane %v319, 1
        %v431 = vsel %vm393, %v429, %v430
        %v432 = vrot.slane %v320, 1
        %v433 = vsel %vm393, %v430, %v432
        %v434 = vrot.slane %v321, 1
        %v435 = vrot.slane %v322, 1
        %v436 = vsel %vm393, %v434, %v435
        %v437 = vrot.slane %v323, 1
        %v438 = vsel %vm393, %v435, %v437
        %v439 = vrot.slane %v324, 1
        %v440 = vrot.slane %v325, 1
        %v441 = vsel %vm393, %v439, %v440
        %v442 = vrot.slane %v326, 1
        %v443 = vsel %vm393, %v440, %v442
        %v444 = vrot.slane %v327, 1
        %v445 = vrot.slane %v328, 1
        %v446 = vsel %vm393, %v444, %v445
        %v447 = vrot.slane %v329, 1
        %v448 = vsel %vm393, %v445, %v447
        %v449 = vrot.slane %v330, 1
        %v450 = vrot.slane %v331, 1
        %v451 = vsel %vm393, %v449, %v450
        %v452 = vrot.slane %v332, 1
        %v453 = vsel %vm393, %v450, %v452
        %v454 = vrot.slane %v333, 1
        %v455 = vrot.slane %v334, 1
        %v456 = vsel %vm393, %v454, %v455
        %v457 = vrot.slane %v335, 1
        %v458 = vsel %vm393, %v455, %v457
        %v459 = vrot.slane %v336, 1
        %v460 = vrot.slane %v337, 1
        %v461 = vsel %vm393, %v459, %v460
        %v462 = vrot.slane %v338, 1
        %v463 = vsel %vm393, %v460, %v462
        %v464 = vrot.slane %v339, 1
        %v465 = vrot.slane %v340, 1
        %v466 = vsel %vm393, %v464, %v465
        %v467 = vrot.slane %v341, 1
        %v468 = vsel %vm393, %v465, %v467
        %v469 = vrot.slane %v342, 1
        %v470 = vrot.slane %v343, 1
        %v471 = vsel %vm393, %v469, %v470
        %v472 = vrot.slane %v344, 1
        %v473 = vsel %vm393, %v470, %v472
        %v506 = vadd.f32 %v261, %v396
        %v507 = vadd.f32 %v262, %v398
        %v508 = vadd.f32 %v263, %v401
        %v509 = vadd.f32 %v264, %v403
        %v510 = vadd.f32 %v265, %v406
        %v511 = vadd.f32 %v266, %v408
        %v512 = vadd.f32 %v267, %v411
        %v513 = vadd.f32 %v268, %v413
        %v514 = vadd.f32 %v269, %v416
        %v515 = vadd.f32 %v270, %v418
        %v516 = vadd.f32 %v271, %v421
        %v517 = vadd.f32 %v272, %v423
        %v518 = vadd.f32 %v273, %v426
        %v519 = vadd.f32 %v274, %v428
        %v520 = vadd.f32 %v275, %v431
        %v521 = vadd.f32 %v276, %v433
        %v522 = vadd.f32 %v277, %v436
        %v523 = vadd.f32 %v278, %v438
        %v524 = vadd.f32 %v279, %v441
        %v525 = vadd.f32 %v280, %v443
        %v526 = vadd.f32 %v281, %v446
        %v527 = vadd.f32 %v282, %v448
        %v528 = vadd.f32 %v283, %v451
        %v529 = vadd.f32 %v284, %v453
        %v530 = vadd.f32 %v285, %v456
        %v531 = vadd.f32 %v286, %v458
        %v532 = vadd.f32 %v287, %v461
        %v533 = vadd.f32 %v288, %v463
        %v534 = vadd.f32 %v289, %v466
        %v535 = vadd.f32 %v290, %v468
        %v536 = vadd.f32 %v291, %v471
        %v537 = vadd.f32 %v292, %v473
        %v538 = vlaneseq
        %v539 = vshrl.u32 %v538, 7
        %v540 = vsub.s32 2, %v539
        %v541 = vrot.slane %v223, %v540
        %v542 = vmul.f32 %v169, %v541
        %v543 = vmul.f32 %v170, %v541
        %v544 = vmul.f32 %v171, %v541
        %v545 = vmul.f32 %v172, %v541
        %v546 = vmul.f32 %v173, %v541
        %v547 = vmul.f32 %v174, %v541
        %v548 = vmul.f32 %v175, %v541
        %v549 = vmul.f32 %v176, %v541
        %v550 = vmul.f32 %v177, %v541
        %v551 = vmul.f32 %v178, %v541
        %v552 = vmul.f32 %v179, %v541
        %v553 = vmul.f32 %v180, %v541
        %v554 = vmul.f32 %v181, %v541
        %v555 = vmul.f32 %v182, %v541
        %v556 = vmul.f32 %v183, %v541
        %v557 = vmul.f32 %v184, %v541
        %v558 = vmul.f32 %v185, %v541
        %v559 = vmul.f32 %v186, %v541
        %v560 = vmul.f32 %v187, %v541
        %v561 = vmul.f32 %v188, %v541
        %v562 = vmul.f32 %v189, %v541
        %v563 = vmul.f32 %v190, %v541
        %v564 = vmul.f32 %v191, %v541
        %v565 = vmul.f32 %v192, %v541
        %v566 = vmul.f32 %v193, %v541
        %v567 = vmul.f32 %v194, %v541
        %v568 = vmul.f32 %v195, %v541
        %v569 = vmul.f32 %v196, %v541
        %v570 = vmul.f32 %v197, %v541
        %v571 = vmul.f32 %v198, %v541
        %v572 = vmul.f32 %v199, %v541
        %v573 = vmul.f32 %v200, %v541
        %v574 = vmul.f32 %v201, %v541
        %v575 = vmul.f32 %v202, %v541
        %v576 = vmul.f32 %v203, %v541
        %v577 = vmul.f32 %v204, %v541
        %v578 = vmul.f32 %v205, %v541
        %v579 = vmul.f32 %v206, %v541
        %v580 = vmul.f32 %v207, %v541
        %v581 = vmul.f32 %v208, %v541
        %v582 = vmul.f32 %v209, %v541
        %v583 = vmul.f32 %v210, %v541
        %v584 = vmul.f32 %v211, %v541
        %v585 = vmul.f32 %v212, %v541
        %v586 = vmul.f32 %v213, %v541
        %v587 = vmul.f32 %v214, %v541
        %v588 = vmul.f32 %v215, %v541
        %v589 = vmul.f32 %v216, %v541
        %vm638 = vcmask 1045504
        %v639 = vrot.slane %v542, 2
        %v640 = vrot.slane %v543, 2
        %v641 = vsel %vm638, %v639, %v640
        %v642 = vrot.slane %v544, 2
        %v643 = vsel %vm638, %v640, %v642
        %v644 = vrot.slane %v545, 2
        %v645 = vrot.slane %v546, 2
        %v646 = vsel %vm638, %v644, %v645
        %v647 = vrot.slane %v547, 2
        %v648 = vsel %vm638, %v645, %v647
        %v649 = vrot.slane %v548, 2
        %v650 = vrot.slane %v549, 2
        %v651 = vsel %vm638, %v649, %v650
        %v652 = vrot.slane %v550, 2
        %v653 = vsel %vm638, %v650, %v652
        %v654 = vrot.slane %v551, 2
        %v655 = vrot.slane %v552, 2
        %v656 = vsel %vm638, %v654, %v655
        %v657 = vrot.slane %v553, 2
        %v658 = vsel %vm638, %v655, %v657
        %v659 = vrot.slane %v554, 2
        %v660 = vrot.slane %v555, 2
        %v661 = vsel %vm638, %v659, %v660
        %v662 = vrot.slane %v556, 2
        %v663 = vsel %vm638, %v660, %v662
        %v664 = vrot.slane %v557, 2
        %v665 = vrot.slane %v558, 2
        %v666 = vsel %vm638, %v664, %v665
        %v667 = vrot.slane %v559, 2
        %v668 = vsel %vm638, %v665, %v667
        %v669 = vrot.slane %v560, 2
        %v670 = vrot.slane %v561, 2
        %v671 = vsel %vm638, %v669, %v670
        %v672 = vrot.slane %v562, 2
        %v673 = vsel %vm638, %v670, %v672
        %v674 = vrot.slane %v563, 2
        %v675 = vrot.slane %v564, 2
        %v676 = vsel %vm638, %v674, %v675
        %v677 = vrot.slane %v565, 2
        %v678 = vsel %vm638, %v675, %v677
        %v679 = vrot.slane %v566, 2
        %v680 = vrot.slane %v567, 2
        %v681 = vsel %vm638, %v679, %v680
        %v682 = vrot.slane %v568, 2
        %v683 = vsel %vm638, %v680, %v682
        %v684 = vrot.slane %v569, 2
        %v685 = vrot.slane %v570, 2
        %v686 = vsel %vm638, %v684, %v685
        %v687 = vrot.slane %v571, 2
        %v688 = vsel %vm638, %v685, %v687
        %v689 = vrot.slane %v572, 2
        %v690 = vrot.slane %v573, 2
        %v691 = vsel %vm638, %v689, %v690
        %v692 = vrot.slane %v574, 2
        %v693 = vsel %vm638, %v690, %v692
        %v694 = vrot.slane %v575, 2
        %v695 = vrot.slane %v576, 2
        %v696 = vsel %vm638, %v694, %v695
        %v697 = vrot.slane %v577, 2
        %v698 = vsel %vm638, %v695, %v697
        %v699 = vrot.slane %v578, 2
        %v700 = vrot.slane %v579, 2
        %v701 = vsel %vm638, %v699, %v700
        %v702 = vrot.slane %v580, 2
        %v703 = vsel %vm638, %v700, %v702
        %v704 = vrot.slane %v581, 2
        %v705 = vrot.slane %v582, 2
        %v706 = vsel %vm638, %v704, %v705
        %v707 = vrot.slane %v583, 2
        %v708 = vsel %vm638, %v705, %v707
        %v709 = vrot.slane %v584, 2
        %v710 = vrot.slane %v585, 2
        %v711 = vsel %vm638, %v709, %v710
        %v712 = vrot.slane %v586, 2
        %v713 = vsel %vm638, %v710, %v712
        %v714 = vrot.slane %v587, 2
        %v715 = vrot.slane %v588, 2
        %v716 = vsel %vm638, %v714, %v715
        %v717 = vrot.slane %v589, 2
        %v718 = vsel %vm638, %v715, %v717
        %v751 = vadd.f32 %v506, %v641
        %v752 = vadd.f32 %v507, %v643
        %v753 = vadd.f32 %v508, %v646
        %v754 = vadd.f32 %v509, %v648
        %v755 = vadd.f32 %v510, %v651
        %v756 = vadd.f32 %v511, %v653
        %v757 = vadd.f32 %v512, %v656
        %v758 = vadd.f32 %v513, %v658
        %v759 = vadd.f32 %v514, %v661
        %v760 = vadd.f32 %v515, %v663
        %v761 = vadd.f32 %v516, %v666
        %v762 = vadd.f32 %v517, %v668
        %v763 = vadd.f32 %v518, %v671
        %v764 = vadd.f32 %v519, %v673
        %v765 = vadd.f32 %v520, %v676
        %v766 = vadd.f32 %v521, %v678
        %v767 = vadd.f32 %v522, %v681
        %v768 = vadd.f32 %v523, %v683
        %v769 = vadd.f32 %v524, %v686
        %v770 = vadd.f32 %v525, %v688
        %v771 = vadd.f32 %v526, %v691
        %v772 = vadd.f32 %v527, %v693
        %v773 = vadd.f32 %v528, %v696
        %v774 = vadd.f32 %v529, %v698
        %v775 = vadd.f32 %v530, %v701
        %v776 = vadd.f32 %v531, %v703
        %v777 = vadd.f32 %v532, %v706
        %v778 = vadd.f32 %v533, %v708
        %v779 = vadd.f32 %v534, %v711
        %v780 = vadd.f32 %v535, %v713
        %v781 = vadd.f32 %v536, %v716
        %v782 = vadd.f32 %v537, %v718
        %v783 = vlaneseq
        %v784 = vshrl.u32 %v783, 7
        %v785 = vsub.s32 3, %v784
        %v786 = vrot.slane %v223, %v785
        %v787 = vmul.f32 %v172, %v786
        %v788 = vmul.f32 %v173, %v786
        %v789 = vmul.f32 %v175, %v786
        %v790 = vmul.f32 %v176, %v786
        %v791 = vmul.f32 %v178, %v786
        %v792 = vmul.f32 %v179, %v786
        %v793 = vmul.f32 %v181, %v786
        %v794 = vmul.f32 %v182, %v786
        %v795 = vmul.f32 %v184, %v786
        %v796 = vmul.f32 %v185, %v786
        %v797 = vmul.f32 %v187, %v786
        %v798 = vmul.f32 %v188, %v786
        %v799 = vmul.f32 %v190, %v786
        %v800 = vmul.f32 %v191, %v786
        %v801 = vmul.f32 %v193, %v786
        %v802 = vmul.f32 %v194, %v786
        %v803 = vmul.f32 %v196, %v786
        %v804 = vmul.f32 %v197, %v786
        %v805 = vmul.f32 %v199, %v786
        %v806 = vmul.f32 %v200, %v786
        %v807 = vmul.f32 %v202, %v786
        %v808 = vmul.f32 %v203, %v786
        %v809 = vmul.f32 %v205, %v786
        %v810 = vmul.f32 %v206, %v786
        %v811 = vmul.f32 %v208, %v786
        %v812 = vmul.f32 %v209, %v786
        %v813 = vmul.f32 %v211, %v786
        %v814 = vmul.f32 %v212, %v786
        %v815 = vmul.f32 %v214, %v786
        %v816 = vmul.f32 %v215, %v786
        %v817 = vmul.f32 %v217, %v786
        %v818 = vmul.f32 %v218, %v786
        %v819 = vadd.f32 %v751, %v787
        %v820 = vadd.f32 %v752, %v788
        %v821 = vadd.f32 %v753, %v789
        %v822 = vadd.f32 %v754, %v790
        %v823 = vadd.f32 %v755, %v791
        %v824 = vadd.f32 %v756, %v792
        %v825 = vadd.f32 %v757, %v793
        %v826 = vadd.f32 %v758, %v794
        %v827 = vadd.f32 %v759, %v795
        %v828 = vadd.f32 %v760, %v796
        %v829 = vadd.f32 %v761, %v797
        %v830 = vadd.f32 %v762, %v798
        %v831 = vadd.f32 %v763, %v799
        %v832 = vadd.f32 %v764, %v800
        %v833 = vadd.f32 %v765, %v801
        %v834 = vadd.f32 %v766, %v802
        %v835 = vadd.f32 %v767, %v803
        %v836 = vadd.f32 %v768, %v804
        %v837 = vadd.f32 %v769, %v805
        %v838 = vadd.f32 %v770, %v806
        %v839 = vadd.f32 %v771, %v807
        %v840 = vadd.f32 %v772, %v808
        %v841 = vadd.f32 %v773, %v809
        %v842 = vadd.f32 %v774, %v810
        %v843 = vadd.f32 %v775, %v811
        %v844 = vadd.f32 %v776, %v812
        %v845 = vadd.f32 %v777, %v813
        %v846 = vadd.f32 %v778, %v814
        %v847 = vadd.f32 %v779, %v815
        %v848 = vadd.f32 %v780, %v816
        %v849 = vadd.f32 %v781, %v817
        %v850 = vadd.f32 %v782, %v818
        %v851 = vlaneseq
        %v852 = vshrl.u32 %v851, 7
        %v853 = vsub.s32 4, %v852
        %v854 = vrot.slane %v223, %v853
        %v855 = vmul.f32 %v172, %v854
        %v856 = vmul.f32 %v173, %v854
        %v857 = vmul.f32 %v174, %v854
        %v858 = vmul.f32 %v175, %v854
        %v859 = vmul.f32 %v176, %v854
        %v860 = vmul.f32 %v177, %v854
        %v861 = vmul.f32 %v178, %v854
        %v862 = vmul.f32 %v179, %v854
        %v863 = vmul.f32 %v180, %v854
        %v864 = vmul.f32 %v181, %v854
        %v865 = vmul.f32 %v182, %v854
        %v866 = vmul.f32 %v183, %v854
        %v867 = vmul.f32 %v184, %v854
        %v868 = vmul.f32 %v185, %v854
        %v869 = vmul.f32 %v186, %v854
        %v870 = vmul.f32 %v187, %v854
        %v871 = vmul.f32 %v188, %v854
        %v872 = vmul.f32 %v189, %v854
        %v873 = vmul.f32 %v190, %v854
        %v874 = vmul.f32 %v191, %v854
        %v875 = vmul.f32 %v192, %v854
        %v876 = vmul.f32 %v193, %v854
        %v877 = vmul.f32 %v194, %v854
        %v878 = vmul.f32 %v195, %v854
        %v879 = vmul.f32 %v196, %v854
        %v880 = vmul.f32 %v197, %v854
        %v881 = vmul.f32 %v198, %v854
        %v882 = vmul.f32 %v199, %v854
        %v883 = vmul.f32 %v200, %v854
        %v884 = vmul.f32 %v201, %v854
        %v885 = vmul.f32 %v202, %v854
        %v886 = vmul.f32 %v203, %v854
        %v887 = vmul.f32 %v204, %v854
        %v888 = vmul.f32 %v205, %v854
        %v889 = vmul.f32 %v206, %v854
        %v890 = vmul.f32 %v207, %v854
        %v891 = vmul.f32 %v208, %v854
        %v892 = vmul.f32 %v209, %v854
        %v893 = vmul.f32 %v210, %v854
        %v894 = vmul.f32 %v211, %v854
        %v895 = vmul.f32 %v212, %v854
        %v896 = vmul.f32 %v213, %v854
        %v897 = vmul.f32 %v214, %v854
        %v898 = vmul.f32 %v215, %v854
        %v899 = vmul.f32 %v216, %v854
        %v900 = vmul.f32 %v217, %v854
        %v901 = vmul.f32 %v218, %v854
        %v902 = vmul.f32 %v219, %v854
        %v951 = vrot.slane %v855, 1
        %v952 = vrot.slane %v856, 1
        %v953 = vsel %vm393, %v951, %v952
        %v954 = vrot.slane %v857, 1
        %v955 = vsel %vm393, %v952, %v954
        %v956 = vrot.slane %v858, 1
        %v957 = vrot.slane %v859, 1
        %v958 = vsel %vm393, %v956, %v957
        %v959 = vrot.slane %v860, 1
        %v960 = vsel %vm393, %v957, %v959
        %v961 = vrot.slane %v861, 1
        %v962 = vrot.slane %v862, 1
        %v963 = vsel %vm393, %v961, %v962
        %v964 = vrot.slane %v863, 1
        %v965 = vsel %vm393, %v962, %v964
        %v966 = vrot.slane %v864, 1
        %v967 = vrot.slane %v865, 1
        %v968 = vsel %vm393, %v966, %v967
        %v969 = vrot.slane %v866, 1
        %v970 = vsel %vm393, %v967, %v969
        %v971 = vrot.slane %v867, 1
        %v972 = vrot.slane %v868, 1
        %v973 = vsel %vm393, %v971, %v972
        %v974 = vrot.slane %v869, 1
        %v975 = vsel %vm393, %v972, %v974
        %v976 = vrot.slane %v870, 1
        %v977 = vrot.slane %v871, 1
        %v978 = vsel %vm393, %v976, %v977
        %v979 = vrot.slane %v872, 1
        %v980 = vsel %vm393, %v977, %v979
        %v981 = vrot.slane %v873, 1
        %v982 = vrot.slane %v874, 1
        %v983 = vsel %vm393, %v981, %v982
        %v984 = vrot.slane %v875, 1
        %v985 = vsel %vm393, %v982, %v984
        %v986 = vrot.slane %v876, 1
        %v987 = vrot.slane %v877, 1
        %v988 = vsel %vm393, %v986, %v987
        %v989 = vrot.slane %v878, 1
        %v990 = vsel %vm393, %v987, %v989
        %v991 = vrot.slane %v879, 1
        %v992 = vrot.slane %v880, 1
        %v993 = vsel %vm393, %v991, %v992
        %v994 = vrot.slane %v881, 1
        %v995 = vsel %vm393, %v992, %v994
        %v996 = vrot.slane %v882, 1
        %v997 = vrot.slane %v883, 1
        %v998 = vsel %vm393, %v996, %v997
        %v999 = vrot.slane %v884, 1
        %v1000 = vsel %vm393, %v997, %v999
        %v1001 = vrot.slane %v885, 1
        %v1002 = vrot.slane %v886, 1
        %v1003 = vsel %vm393, %v1001, %v1002
        %v1004 = vrot.slane %v887, 1
        %v1005 = vsel %vm393, %v1002, %v1004
        %v1006 = vrot.slane %v888, 1
        %v1007 = vrot.slane %v889, 1
        %v1008 = vsel %vm393, %v1006, %v1007
        %v1009 = vrot.slane %v890, 1
        %v1010 = vsel %vm393, %v1007, %v1009
        %v1011 = vrot.slane %v891, 1
        %v1012 = vrot.slane %v892, 1
        %v1013 = vsel %vm393, %v1011, %v1012
        %v1014 = vrot.slane %v893, 1
        %v1015 = vsel %vm393, %v1012, %v1014
        %v1016 = vrot.slane %v894, 1
        %v1017 = vrot.slane %v895, 1
        %v1018 = vsel %vm393, %v1016, %v1017
        %v1019 = vrot.slane %v896, 1
        %v1020 = vsel %vm393, %v1017, %v1019
        %v1021 = vrot.slane %v897, 1
        %v1022 = vrot.slane %v898, 1
        %v1023 = vsel %vm393, %v1021, %v1022
        %v1024 = vrot.slane %v899, 1
        %v1025 = vsel %vm393, %v1022, %v1024
        %v1026 = vrot.slane %v900, 1
        %v1027 = vrot.slane %v901, 1
        %v1028 = vsel %vm393, %v1026, %v1027
        %v1029 = vrot.slane %v902, 1
        %v1030 = vsel %vm393, %v1027, %v1029
        %v1063 = vadd.f32 %v819, %v953
        %v1064 = vadd.f32 %v820, %v955
        %v1065 = vadd.f32 %v821, %v958
        %v1066 = vadd.f32 %v822, %v960
        %v1067 = vadd.f32 %v823, %v963
        %v1068 = vadd.f32 %v824, %v965
        %v1069 = vadd.f32 %v825, %v968
        %v1070 = vadd.f32 %v826, %v970
        %v1071 = vadd.f32 %v827, %v973
        %v1072 = vadd.f32 %v828, %v975
        %v1073 = vadd.f32 %v829, %v978
        %v1074 = vadd.f32 %v830, %v980
        %v1075 = vadd.f32 %v831, %v983
        %v1076 = vadd.f32 %v832, %v985
        %v1077 = vadd.f32 %v833, %v988
        %v1078 = vadd.f32 %v834, %v990
        %v1079 = vadd.f32 %v835, %v993
        %v1080 = vadd.f32 %v836, %v995
        %v1081 = vadd.f32 %v837, %v998
        %v1082 = vadd.f32 %v838, %v1000
        %v1083 = vadd.f32 %v839, %v1003
        %v1084 = vadd.f32 %v840, %v1005
        %v1085 = vadd.f32 %v841, %v1008
        %v1086 = vadd.f32 %v842, %v1010
        %v1087 = vadd.f32 %v843, %v1013
        %v1088 = vadd.f32 %v844, %v1015
        %v1089 = vadd.f32 %v845, %v1018
        %v1090 = vadd.f32 %v846, %v1020
        %v1091 = vadd.f32 %v847, %v1023
        %v1092 = vadd.f32 %v848, %v1025
        %v1093 = vadd.f32 %v849, %v1028
        %v1094 = vadd.f32 %v850, %v1030
        %v1095 = vlaneseq
        %v1096 = vshrl.u32 %v1095, 7
        %v1097 = vsub.s32 5, %v1096
        %v1098 = vrot.slane %v223, %v1097
        %v1099 = vmul.f32 %v172, %v1098
        %v1100 = vmul.f32 %v173, %v1098
        %v1101 = vmul.f32 %v174, %v1098
        %v1102 = vmul.f32 %v175, %v1098
        %v1103 = vmul.f32 %v176, %v1098
        %v1104 = vmul.f32 %v177, %v1098
        %v1105 = vmul.f32 %v178, %v1098
        %v1106 = vmul.f32 %v179, %v1098
        %v1107 = vmul.f32 %v180, %v1098
        %v1108 = vmul.f32 %v181, %v1098
        %v1109 = vmul.f32 %v182, %v1098
        %v1110 = vmul.f32 %v183, %v1098
        %v1111 = vmul.f32 %v184, %v1098
        %v1112 = vmul.f32 %v185, %v1098
        %v1113 = vmul.f32 %v186, %v1098
        %v1114 = vmul.f32 %v187, %v1098
        %v1115 = vmul.f32 %v188, %v1098
        %v1116 = vmul.f32 %v189, %v1098
        %v1117 = vmul.f32 %v190, %v1098
        %v1118 = vmul.f32 %v191, %v1098
        %v1119 = vmul.f32 %v192, %v1098
        %v1120 = vmul.f32 %v193, %v1098
        %v1121 = vmul.f32 %v194, %v1098
        %v1122 = vmul.f32 %v195, %v1098
        %v1123 = vmul.f32 %v196, %v1098
        %v1124 = vmul.f32 %v197, %v1098
        %v1125 = vmul.f32 %v198, %v1098
        %v1126 = vmul.f32 %v199, %v1098
        %v1127 = vmul.f32 %v200, %v1098
        %v1128 = vmul.f32 %v201, %v1098
        %v1129 = vmul.f32 %v202, %v1098
        %v1130 = vmul.f32 %v203, %v1098
        %v1131 = vmul.f32 %v204, %v1098
        %v1132 = vmul.f32 %v205, %v1098
        %v1133 = vmul.f32 %v206, %v1098
        %v1134 = vmul.f32 %v207, %v1098
        %v1135 = vmul.f32 %v208, %v1098
        %v1136 = vmul.f32 %v209, %v1098
        %v1137 = vmul.f32 %v210, %v1098
        %v1138 = vmul.f32 %v211, %v1098
        %v1139 = vmul.f32 %v212, %v1098
        %v1140 = vmul.f32 %v213, %v1098
        %v1141 = vmul.f32 %v214, %v1098
        %v1142 = vmul.f32 %v215, %v1098
        %v1143 = vmul.f32 %v216, %v1098
        %v1144 = vmul.f32 %v217, %v1098
        %v1145 = vmul.f32 %v218, %v1098
        %v1146 = vmul.f32 %v219, %v1098
        %v1195 = vrot.slane %v1099, 2
        %v1196 = vrot.slane %v1100, 2
        %v1197 = vsel %vm638, %v1195, %v1196
        %v1198 = vrot.slane %v1101, 2
        %v1199 = vsel %vm638, %v1196, %v1198
        %v1200 = vrot.slane %v1102, 2
        %v1201 = vrot.slane %v1103, 2
        %v1202 = vsel %vm638, %v1200, %v1201
        %v1203 = vrot.slane %v1104, 2
        %v1204 = vsel %vm638, %v1201, %v1203
        %v1205 = vrot.slane %v1105, 2
        %v1206 = vrot.slane %v1106, 2
        %v1207 = vsel %vm638, %v1205, %v1206
        %v1208 = vrot.slane %v1107, 2
        %v1209 = vsel %vm638, %v1206, %v1208
        %v1210 = vrot.slane %v1108, 2
        %v1211 = vrot.slane %v1109, 2
        %v1212 = vsel %vm638, %v1210, %v1211
        %v1213 = vrot.slane %v1110, 2
        %v1214 = vsel %vm638, %v1211, %v1213
        %v1215 = vrot.slane %v1111, 2
        %v1216 = vrot.slane %v1112, 2
        %v1217 = vsel %vm638, %v1215, %v1216
        %v1218 = vrot.slane %v1113, 2
        %v1219 = vsel %vm638, %v1216, %v1218
        %v1220 = vrot.slane %v1114, 2
        %v1221 = vrot.slane %v1115, 2
        %v1222 = vsel %vm638, %v1220, %v1221
        %v1223 = vrot.slane %v1116, 2
        %v1224 = vsel %vm638, %v1221, %v1223
        %v1225 = vrot.slane %v1117, 2
        %v1226 = vrot.slane %v1118, 2
        %v1227 = vsel %vm638, %v1225, %v1226
        %v1228 = vrot.slane %v1119, 2
        %v1229 = vsel %vm638, %v1226, %v1228
        %v1230 = vrot.slane %v1120, 2
        %v1231 = vrot.slane %v1121, 2
        %v1232 = vsel %vm638, %v1230, %v1231
        %v1233 = vrot.slane %v1122, 2
        %v1234 = vsel %vm638, %v1231, %v1233
        %v1235 = vrot.slane %v1123, 2
        %v1236 = vrot.slane %v1124, 2
        %v1237 = vsel %vm638, %v1235, %v1236
        %v1238 = vrot.slane %v1125, 2
        %v1239 = vsel %vm638, %v1236, %v1238
        %v1240 = vrot.slane %v1126, 2
        %v1241 = vrot.slane %v1127, 2
        %v1242 = vsel %vm638, %v1240, %v1241
        %v1243 = vrot.slane %v1128, 2
        %v1244 = vsel %vm638, %v1241, %v1243
        %v1245 = vrot.slane %v1129, 2
        %v1246 = vrot.slane %v1130, 2
        %v1247 = vsel %vm638, %v1245, %v1246
        %v1248 = vrot.slane %v1131, 2
        %v1249 = vsel %vm638, %v1246, %v1248
        %v1250 = vrot.slane %v1132, 2
        %v1251 = vrot.slane %v1133, 2
        %v1252 = vsel %vm638, %v1250, %v1251
        %v1253 = vrot.slane %v1134, 2
        %v1254 = vsel %vm638, %v1251, %v1253
        %v1255 = vrot.slane %v1135, 2
        %v1256 = vrot.slane %v1136, 2
        %v1257 = vsel %vm638, %v1255, %v1256
        %v1258 = vrot.slane %v1137, 2
        %v1259 = vsel %vm638, %v1256, %v1258
        %v1260 = vrot.slane %v1138, 2
        %v1261 = vrot.slane %v1139, 2
        %v1262 = vsel %vm638, %v1260, %v1261
        %v1263 = vrot.slane %v1140, 2
        %v1264 = vsel %vm638, %v1261, %v1263
        %v1265 = vrot.slane %v1141, 2
        %v1266 = vrot.slane %v1142, 2
        %v1267 = vsel %vm638, %v1265, %v1266
        %v1268 = vrot.slane %v1143, 2
        %v1269 = vsel %vm638, %v1266, %v1268
        %v1270 = vrot.slane %v1144, 2
        %v1271 = vrot.slane %v1145, 2
        %v1272 = vsel %vm638, %v1270, %v1271
        %v1273 = vrot.slane %v1146, 2
        %v1274 = vsel %vm638, %v1271, %v1273
        %v1307 = vadd.f32 %v1063, %v1197
        %v1308 = vadd.f32 %v1064, %v1199
        %v1309 = vadd.f32 %v1065, %v1202
        %v1310 = vadd.f32 %v1066, %v1204
        %v1311 = vadd.f32 %v1067, %v1207
        %v1312 = vadd.f32 %v1068, %v1209
        %v1313 = vadd.f32 %v1069, %v1212
        %v1314 = vadd.f32 %v1070, %v1214
        %v1315 = vadd.f32 %v1071, %v1217
        %v1316 = vadd.f32 %v1072, %v1219
        %v1317 = vadd.f32 %v1073, %v1222
        %v1318 = vadd.f32 %v1074, %v1224
        %v1319 = vadd.f32 %v1075, %v1227
        %v1320 = vadd.f32 %v1076, %v1229
        %v1321 = vadd.f32 %v1077, %v1232
        %v1322 = vadd.f32 %v1078, %v1234
        %v1323 = vadd.f32 %v1079, %v1237
        %v1324 = vadd.f32 %v1080, %v1239
        %v1325 = vadd.f32 %v1081, %v1242
        %v1326 = vadd.f32 %v1082, %v1244
        %v1327 = vadd.f32 %v1083, %v1247
        %v1328 = vadd.f32 %v1084, %v1249
        %v1329 = vadd.f32 %v1085, %v1252
        %v1330 = vadd.f32 %v1086, %v1254
        %v1331 = vadd.f32 %v1087, %v1257
        %v1332 = vadd.f32 %v1088, %v1259
        %v1333 = vadd.f32 %v1089, %v1262
        %v1334 = vadd.f32 %v1090, %v1264
        %v1335 = vadd.f32 %v1091, %v1267
        %v1336 = vadd.f32 %v1092, %v1269
        %v1337 = vadd.f32 %v1093, %v1272
        %v1338 = vadd.f32 %v1094, %v1274
        %v1339 = vlaneseq
        %v1340 = vshrl.u32 %v1339, 7
        %v1341 = vsub.s32 6, %v1340
        %v1342 = vrot.slane %v223, %v1341
        %v1343 = vmul.f32 %v175, %v1342
        %v1344 = vmul.f32 %v176, %v1342
        %v1345 = vmul.f32 %v178, %v1342
        %v1346 = vmul.f32 %v179, %v1342
        %v1347 = vmul.f32 %v181, %v1342
        %v1348 = vmul.f32 %v182, %v1342
        %v1349 = vmul.f32 %v184, %v1342
        %v1350 = vmul.f32 %v185, %v1342
        %v1351 = vmul.f32 %v187, %v1342
        %v1352 = vmul.f32 %v188, %v1342
        %v1353 = vmul.f32 %v190, %v1342
        %v1354 = vmul.f32 %v191, %v1342
        %v1355 = vmul.f32 %v193, %v1342
        %v1356 = vmul.f32 %v194, %v1342
        %v1357 = vmul.f32 %v196, %v1342
        %v1358 = vmul.f32 %v197, %v1342
        %v1359 = vmul.f32 %v199, %v1342
        %v1360 = vmul.f32 %v200, %v1342
        %v1361 = vmul.f32 %v202, %v1342
        %v1362 = vmul.f32 %v203, %v1342
        %v1363 = vmul.f32 %v205, %v1342
        %v1364 = vmul.f32 %v206, %v1342
        %v1365 = vmul.f32 %v208, %v1342
        %v1366 = vmul.f32 %v209, %v1342
        %v1367 = vmul.f32 %v211, %v1342
        %v1368 = vmul.f32 %v212, %v1342
        %v1369 = vmul.f32 %v214, %v1342
        %v1370 = vmul.f32 %v215, %v1342
        %v1371 = vmul.f32 %v217, %v1342
        %v1372 = vmul.f32 %v218, %v1342
        %v1373 = vmul.f32 %v220, %v1342
        %v1374 = vmul.f32 %v221, %v1342
        %v1375 = vadd.f32 %v1307, %v1343
        %v1376 = vadd.f32 %v1308, %v1344
        %v1377 = vadd.f32 %v1309, %v1345
        %v1378 = vadd.f32 %v1310, %v1346
        %v1379 = vadd.f32 %v1311, %v1347
        %v1380 = vadd.f32 %v1312, %v1348
        %v1381 = vadd.f32 %v1313, %v1349
        %v1382 = vadd.f32 %v1314, %v1350
        %v1383 = vadd.f32 %v1315, %v1351
        %v1384 = vadd.f32 %v1316, %v1352
        %v1385 = vadd.f32 %v1317, %v1353
        %v1386 = vadd.f32 %v1318, %v1354
        %v1387 = vadd.f32 %v1319, %v1355
        %v1388 = vadd.f32 %v1320, %v1356
        %v1389 = vadd.f32 %v1321, %v1357
        %v1390 = vadd.f32 %v1322, %v1358
        %v1391 = vadd.f32 %v1323, %v1359
        %v1392 = vadd.f32 %v1324, %v1360
        %v1393 = vadd.f32 %v1325, %v1361
        %v1394 = vadd.f32 %v1326, %v1362
        %v1395 = vadd.f32 %v1327, %v1363
        %v1396 = vadd.f32 %v1328, %v1364
        %v1397 = vadd.f32 %v1329, %v1365
        %v1398 = vadd.f32 %v1330, %v1366
        %v1399 = vadd.f32 %v1331, %v1367
        %v1400 = vadd.f32 %v1332, %v1368
        %v1401 = vadd.f32 %v1333, %v1369
        %v1402 = vadd.f32 %v1334, %v1370
        %v1403 = vadd.f32 %v1335, %v1371
        %v1404 = vadd.f32 %v1336, %v1372
        %v1405 = vadd.f32 %v1337, %v1373
        %v1406 = vadd.f32 %v1338, %v1374
        %v1407 = vlaneseq
        %v1408 = vshrl.u32 %v1407, 7
        %v1409 = vsub.s32 7, %v1408
        %v1410 = vrot.slane %v223, %v1409
        %v1411 = vmul.f32 %v175, %v1410
        %v1412 = vmul.f32 %v176, %v1410
        %v1413 = vmul.f32 %v177, %v1410
        %v1414 = vmul.f32 %v178, %v1410
        %v1415 = vmul.f32 %v179, %v1410
        %v1416 = vmul.f32 %v180, %v1410
        %v1417 = vmul.f32 %v181, %v1410
        %v1418 = vmul.f32 %v182, %v1410
        %v1419 = vmul.f32 %v183, %v1410
        %v1420 = vmul.f32 %v184, %v1410
        %v1421 = vmul.f32 %v185, %v1410
        %v1422 = vmul.f32 %v186, %v1410
        %v1423 = vmul.f32 %v187, %v1410
        %v1424 = vmul.f32 %v188, %v1410
        %v1425 = vmul.f32 %v189, %v1410
        %v1426 = vmul.f32 %v190, %v1410
        %v1427 = vmul.f32 %v191, %v1410
        %v1428 = vmul.f32 %v192, %v1410
        %v1429 = vmul.f32 %v193, %v1410
        %v1430 = vmul.f32 %v194, %v1410
        %v1431 = vmul.f32 %v195, %v1410
        %v1432 = vmul.f32 %v196, %v1410
        %v1433 = vmul.f32 %v197, %v1410
        %v1434 = vmul.f32 %v198, %v1410
        %v1435 = vmul.f32 %v199, %v1410
        %v1436 = vmul.f32 %v200, %v1410
        %v1437 = vmul.f32 %v201, %v1410
        %v1438 = vmul.f32 %v202, %v1410
        %v1439 = vmul.f32 %v203, %v1410
        %v1440 = vmul.f32 %v204, %v1410
        %v1441 = vmul.f32 %v205, %v1410
        %v1442 = vmul.f32 %v206, %v1410
        %v1443 = vmul.f32 %v207, %v1410
        %v1444 = vmul.f32 %v208, %v1410
        %v1445 = vmul.f32 %v209, %v1410
        %v1446 = vmul.f32 %v210, %v1410
        %v1447 = vmul.f32 %v211, %v1410
        %v1448 = vmul.f32 %v212, %v1410
        %v1449 = vmul.f32 %v213, %v1410
        %v1450 = vmul.f32 %v214, %v1410
        %v1451 = vmul.f32 %v215, %v1410
        %v1452 = vmul.f32 %v216, %v1410
        %v1453 = vmul.f32 %v217, %v1410
        %v1454 = vmul.f32 %v218, %v1410
        %v1455 = vmul.f32 %v219, %v1410
        %v1456 = vmul.f32 %v220, %v1410
        %v1457 = vmul.f32 %v221, %v1410
        %v1458 = vmul.f32 %v222, %v1410
        %v1507 = vrot.slane %v1411, 1
        %v1508 = vrot.slane %v1412, 1
        %v1509 = vsel %vm393, %v1507, %v1508
        %v1510 = vrot.slane %v1413, 1
        %v1511 = vsel %vm393, %v1508, %v1510
        %v1512 = vrot.slane %v1414, 1
        %v1513 = vrot.slane %v1415, 1
        %v1514 = vsel %vm393, %v1512, %v1513
        %v1515 = vrot.slane %v1416, 1
        %v1516 = vsel %vm393, %v1513, %v1515
        %v1517 = vrot.slane %v1417, 1
        %v1518 = vrot.slane %v1418, 1
        %v1519 = vsel %vm393, %v1517, %v1518
        %v1520 = vrot.slane %v1419, 1
        %v1521 = vsel %vm393, %v1518, %v1520
        %v1522 = vrot.slane %v1420, 1
        %v1523 = vrot.slane %v1421, 1
        %v1524 = vsel %vm393, %v1522, %v1523
        %v1525 = vrot.slane %v1422, 1
        %v1526 = vsel %vm393, %v1523, %v1525
        %v1527 = vrot.slane %v1423, 1
        %v1528 = vrot.slane %v1424, 1
        %v1529 = vsel %vm393, %v1527, %v1528
        %v1530 = vrot.slane %v1425, 1
        %v1531 = vsel %vm393, %v1528, %v1530
        %v1532 = vrot.slane %v1426, 1
        %v1533 = vrot.slane %v1427, 1
        %v1534 = vsel %vm393, %v1532, %v1533
        %v1535 = vrot.slane %v1428, 1
        %v1536 = vsel %vm393, %v1533, %v1535
        %v1537 = vrot.slane %v1429, 1
        %v1538 = vrot.slane %v1430, 1
        %v1539 = vsel %vm393, %v1537, %v1538
        %v1540 = vrot.slane %v1431, 1
        %v1541 = vsel %vm393, %v1538, %v1540
        %v1542 = vrot.slane %v1432, 1
        %v1543 = vrot.slane %v1433, 1
        %v1544 = vsel %vm393, %v1542, %v1543
        %v1545 = vrot.slane %v1434, 1
        %v1546 = vsel %vm393, %v1543, %v1545
        %v1547 = vrot.slane %v1435, 1
        %v1548 = vrot.slane %v1436, 1
        %v1549 = vsel %vm393, %v1547, %v1548
        %v1550 = vrot.slane %v1437, 1
        %v1551 = vsel %vm393, %v1548, %v1550
        %v1552 = vrot.slane %v1438, 1
        %v1553 = vrot.slane %v1439, 1
        %v1554 = vsel %vm393, %v1552, %v1553
        %v1555 = vrot.slane %v1440, 1
        %v1556 = vsel %vm393, %v1553, %v1555
        %v1557 = vrot.slane %v1441, 1
        %v1558 = vrot.slane %v1442, 1
        %v1559 = vsel %vm393, %v1557, %v1558
        %v1560 = vrot.slane %v1443, 1
        %v1561 = vsel %vm393, %v1558, %v1560
        %v1562 = vrot.slane %v1444, 1
        %v1563 = vrot.slane %v1445, 1
        %v1564 = vsel %vm393, %v1562, %v1563
        %v1565 = vrot.slane %v1446, 1
        %v1566 = vsel %vm393, %v1563, %v1565
        %v1567 = vrot.slane %v1447, 1
        %v1568 = vrot.slane %v1448, 1
        %v1569 = vsel %vm393, %v1567, %v1568
        %v1570 = vrot.slane %v1449, 1
        %v1571 = vsel %vm393, %v1568, %v1570
        %v1572 = vrot.slane %v1450, 1
        %v1573 = vrot.slane %v1451, 1
        %v1574 = vsel %vm393, %v1572, %v1573
        %v1575 = vrot.slane %v1452, 1
        %v1576 = vsel %vm393, %v1573, %v1575
        %v1577 = vrot.slane %v1453, 1
        %v1578 = vrot.slane %v1454, 1
        %v1579 = vsel %vm393, %v1577, %v1578
        %v1580 = vrot.slane %v1455, 1
        %v1581 = vsel %vm393, %v1578, %v1580
        %v1582 = vrot.slane %v1456, 1
        %v1583 = vrot.slane %v1457, 1
        %v1584 = vsel %vm393, %v1582, %v1583
        %v1585 = vrot.slane %v1458, 1
        %v1586 = vsel %vm393, %v1583, %v1585
        %v1619 = vadd.f32 %v1375, %v1509
        %v1620 = vadd.f32 %v1376, %v1511
        %v1621 = vadd.f32 %v1377, %v1514
        %v1622 = vadd.f32 %v1378, %v1516
        %v1623 = vadd.f32 %v1379, %v1519
        %v1624 = vadd.f32 %v1380, %v1521
        %v1625 = vadd.f32 %v1381, %v1524
        %v1626 = vadd.f32 %v1382, %v1526
        %v1627 = vadd.f32 %v1383, %v1529
        %v1628 = vadd.f32 %v1384, %v1531
        %v1629 = vadd.f32 %v1385, %v1534
        %v1630 = vadd.f32 %v1386, %v1536
        %v1631 = vadd.f32 %v1387, %v1539
        %v1632 = vadd.f32 %v1388, %v1541
        %v1633 = vadd.f32 %v1389, %v1544
        %v1634 = vadd.f32 %v1390, %v1546
        %v1635 = vadd.f32 %v1391, %v1549
        %v1636 = vadd.f32 %v1392, %v1551
        %v1637 = vadd.f32 %v1393, %v1554
        %v1638 = vadd.f32 %v1394, %v1556
        %v1639 = vadd.f32 %v1395, %v1559
        %v1640 = vadd.f32 %v1396, %v1561
        %v1641 = vadd.f32 %v1397, %v1564
        %v1642 = vadd.f32 %v1398, %v1566
        %v1643 = vadd.f32 %v1399, %v1569
        %v1644 = vadd.f32 %v1400, %v1571
        %v1645 = vadd.f32 %v1401, %v1574
        %v1646 = vadd.f32 %v1402, %v1576
        %v1647 = vadd.f32 %v1403, %v1579
        %v1648 = vadd.f32 %v1404, %v1581
        %v1649 = vadd.f32 %v1405, %v1584
        %v1650 = vadd.f32 %v1406, %v1586
        %v1651 = vlaneseq
        %v1652 = vshrl.u32 %v1651, 7
        %v1653 = vsub.s32 0, %v1652
        %v1654 = vrot.slane %v224, %v1653
        %v1655 = vmul.f32 %v175, %v1654
        %v1656 = vmul.f32 %v176, %v1654
        %v1657 = vmul.f32 %v177, %v1654
        %v1658 = vmul.f32 %v178, %v1654
        %v1659 = vmul.f32 %v179, %v1654
        %v1660 = vmul.f32 %v180, %v1654
        %v1661 = vmul.f32 %v181, %v1654
        %v1662 = vmul.f32 %v182, %v1654
        %v1663 = vmul.f32 %v183, %v1654
        %v1664 = vmul.f32 %v184, %v1654
        %v1665 = vmul.f32 %v185, %v1654
        %v1666 = vmul.f32 %v186, %v1654
        %v1667 = vmul.f32 %v187, %v1654
        %v1668 = vmul.f32 %v188, %v1654
        %v1669 = vmul.f32 %v189, %v1654
        %v1670 = vmul.f32 %v190, %v1654
        %v1671 = vmul.f32 %v191, %v1654
        %v1672 = vmul.f32 %v192, %v1654
        %v1673 = vmul.f32 %v193, %v1654
        %v1674 = vmul.f32 %v194, %v1654
        %v1675 = vmul.f32 %v195, %v1654
        %v1676 = vmul.f32 %v196, %v1654
        %v1677 = vmul.f32 %v197, %v1654
        %v1678 = vmul.f32 %v198, %v1654
        %v1679 = vmul.f32 %v199, %v1654
        %v1680 = vmul.f32 %v200, %v1654
        %v1681 = vmul.f32 %v201, %v1654
        %v1682 = vmul.f32 %v202, %v1654
        %v1683 = vmul.f32 %v203, %v1654
        %v1684 = vmul.f32 %v204, %v1654
        %v1685 = vmul.f32 %v205, %v1654
        %v1686 = vmul.f32 %v206, %v1654
        %v1687 = vmul.f32 %v207, %v1654
        %v1688 = vmul.f32 %v208, %v1654
        %v1689 = vmul.f32 %v209, %v1654
        %v1690 = vmul.f32 %v210, %v1654
        %v1691 = vmul.f32 %v211, %v1654
        %v1692 = vmul.f32 %v212, %v1654
        %v1693 = vmul.f32 %v213, %v1654
        %v1694 = vmul.f32 %v214, %v1654
        %v1695 = vmul.f32 %v215, %v1654
        %v1696 = vmul.f32 %v216, %v1654
        %v1697 = vmul.f32 %v217, %v1654
        %v1698 = vmul.f32 %v218, %v1654
        %v1699 = vmul.f32 %v219, %v1654
        %v1700 = vmul.f32 %v220, %v1654
        %v1701 = vmul.f32 %v221, %v1654
        %v1702 = vmul.f32 %v222, %v1654
        %v1751 = vrot.slane %v1655, 2
        %v1752 = vrot.slane %v1656, 2
        %v1753 = vsel %vm638, %v1751, %v1752
        %v1754 = vrot.slane %v1657, 2
        %v1755 = vsel %vm638, %v1752, %v1754
        %v1756 = vrot.slane %v1658, 2
        %v1757 = vrot.slane %v1659, 2
        %v1758 = vsel %vm638, %v1756, %v1757
        %v1759 = vrot.slane %v1660, 2
        %v1760 = vsel %vm638, %v1757, %v1759
        %v1761 = vrot.slane %v1661, 2
        %v1762 = vrot.slane %v1662, 2
        %v1763 = vsel %vm638, %v1761, %v1762
        %v1764 = vrot.slane %v1663, 2
        %v1765 = vsel %vm638, %v1762, %v1764
        %v1766 = vrot.slane %v1664, 2
        %v1767 = vrot.slane %v1665, 2
        %v1768 = vsel %vm638, %v1766, %v1767
        %v1769 = vrot.slane %v1666, 2
        %v1770 = vsel %vm638, %v1767, %v1769
        %v1771 = vrot.slane %v1667, 2
        %v1772 = vrot.slane %v1668, 2
        %v1773 = vsel %vm638, %v1771, %v1772
        %v1774 = vrot.slane %v1669, 2
        %v1775 = vsel %vm638, %v1772, %v1774
        %v1776 = vrot.slane %v1670, 2
        %v1777 = vrot.slane %v1671, 2
        %v1778 = vsel %vm638, %v1776, %v1777
        %v1779 = vrot.slane %v1672, 2
        %v1780 = vsel %vm638, %v1777, %v1779
        %v1781 = vrot.slane %v1673, 2
        %v1782 = vrot.slane %v1674, 2
        %v1783 = vsel %vm638, %v1781, %v1782
        %v1784 = vrot.slane %v1675, 2
        %v1785 = vsel %vm638, %v1782, %v1784
        %v1786 = vrot.slane %v1676, 2
        %v1787 = vrot.slane %v1677, 2
        %v1788 = vsel %vm638, %v1786, %v1787
        %v1789 = vrot.slane %v1678, 2
        %v1790 = vsel %vm638, %v1787, %v1789
        %v1791 = vrot.slane %v1679, 2
        %v1792 = vrot.slane %v1680, 2
        %v1793 = vsel %vm638, %v1791, %v1792
        %v1794 = vrot.slane %v1681, 2
        %v1795 = vsel %vm638, %v1792, %v1794
        %v1796 = vrot.slane %v1682, 2
        %v1797 = vrot.slane %v1683, 2
        %v1798 = vsel %vm638, %v1796, %v1797
        %v1799 = vrot.slane %v1684, 2
        %v1800 = vsel %vm638, %v1797, %v1799
        %v1801 = vrot.slane %v1685, 2
        %v1802 = vrot.slane %v1686, 2
        %v1803 = vsel %vm638, %v1801, %v1802
        %v1804 = vrot.slane %v1687, 2
        %v1805 = vsel %vm638, %v1802, %v1804
        %v1806 = vrot.slane %v1688, 2
        %v1807 = vrot.slane %v1689, 2
        %v1808 = vsel %vm638, %v1806, %v1807
        %v1809 = vrot.slane %v1690, 2
        %v1810 = vsel %vm638, %v1807, %v1809
        %v1811 = vrot.slane %v1691, 2
        %v1812 = vrot.slane %v1692, 2
        %v1813 = vsel %vm638, %v1811, %v1812
        %v1814 = vrot.slane %v1693, 2
        %v1815 = vsel %vm638, %v1812, %v1814
        %v1816 = vrot.slane %v1694, 2
        %v1817 = vrot.slane %v1695, 2
        %v1818 = vsel %vm638, %v1816, %v1817
        %v1819 = vrot.slane %v1696, 2
        %v1820 = vsel %vm638, %v1817, %v1819
        %v1821 = vrot.slane %v1697, 2
        %v1822 = vrot.slane %v1698, 2
        %v1823 = vsel %vm638, %v1821, %v1822
        %v1824 = vrot.slane %v1699, 2
        %v1825 = vsel %vm638, %v1822, %v1824
        %v1826 = vrot.slane %v1700, 2
        %v1827 = vrot.slane %v1701, 2
        %v1828 = vsel %vm638, %v1826, %v1827
        %v1829 = vrot.slane %v1702, 2
        %v1830 = vsel %vm638, %v1827, %v1829
        %v1863 = vadd.f32 %v1619, %v1753
        %v1864 = vadd.f32 %v1620, %v1755
        %v1865 = vadd.f32 %v1621, %v1758
        %v1866 = vadd.f32 %v1622, %v1760
        %v1867 = vadd.f32 %v1623, %v1763
        %v1868 = vadd.f32 %v1624, %v1765
        %v1869 = vadd.f32 %v1625, %v1768
        %v1870 = vadd.f32 %v1626, %v1770
        %v1871 = vadd.f32 %v1627, %v1773
        %v1872 = vadd.f32 %v1628, %v1775
        %v1873 = vadd.f32 %v1629, %v1778
        %v1874 = vadd.f32 %v1630, %v1780
        %v1875 = vadd.f32 %v1631, %v1783
        %v1876 = vadd.f32 %v1632, %v1785
        %v1877 = vadd.f32 %v1633, %v1788
        %v1878 = vadd.f32 %v1634, %v1790
        %v1879 = vadd.f32 %v1635, %v1793
        %v1880 = vadd.f32 %v1636, %v1795
        %v1881 = vadd.f32 %v1637, %v1798
        %v1882 = vadd.f32 %v1638, %v1800
        %v1883 = vadd.f32 %v1639, %v1803
        %v1884 = vadd.f32 %v1640, %v1805
        %v1885 = vadd.f32 %v1641, %v1808
        %v1886 = vadd.f32 %v1642, %v1810
        %v1887 = vadd.f32 %v1643, %v1813
        %v1888 = vadd.f32 %v1644, %v1815
        %v1889 = vadd.f32 %v1645, %v1818
        %v1890 = vadd.f32 %v1646, %v1820
        %v1891 = vadd.f32 %v1647, %v1823
        %v1892 = vadd.f32 %v1648, %v1825
        %v1893 = vadd.f32 %v1649, %v1828
        %v1894 = vadd.f32 %v1650, %v1830
        %v1895 = vld [vmem:[%s2] sm:$0xff]
        %vm1896 = vcmask 64512
        %v1898 = vsel %vm1896, %v1863, 0
        %v1901 = vsel %vm1896, %v1864, 0
        %v1904 = vsel %vm1896, %v1865, 0
        %v1907 = vsel %vm1896, %v1866, 0
        %v1910 = vsel %vm1896, %v1867, 0
        %v1913 = vsel %vm1896, %v1868, 0
        %v1916 = vsel %vm1896, %v1869, 0
        %v1919 = vsel %vm1896, %v1870, 0
        %v1922 = vsel %vm1896, %v1871, 0
        %v1925 = vsel %vm1896, %v1872, 0
        %v1928 = vsel %vm1896, %v1873, 0
        %v1931 = vsel %vm1896, %v1874, 0
        %v1934 = vsel %vm1896, %v1875, 0
        %v1937 = vsel %vm1896, %v1876, 0
        %v1940 = vsel %vm1896, %v1877, 0
        %v1943 = vsel %vm1896, %v1878, 0
        %v1946 = vsel %vm1896, %v1879, 0
        %v1949 = vsel %vm1896, %v1880, 0
        %v1952 = vsel %vm1896, %v1881, 0
        %v1955 = vsel %vm1896, %v1882, 0
        %v1958 = vsel %vm1896, %v1883, 0
        %v1961 = vsel %vm1896, %v1884, 0
        %v1964 = vsel %vm1896, %v1885, 0
        %v1967 = vsel %vm1896, %v1886, 0
        %v1970 = vsel %vm1896, %v1887, 0
        %v1973 = vsel %vm1896, %v1888, 0
        %v1976 = vsel %vm1896, %v1889, 0
        %v1979 = vsel %vm1896, %v1890, 0
        %v1982 = vsel %vm1896, %v1891, 0
        %v1985 = vsel %vm1896, %v1892, 0
        %v1988 = vsel %vm1896, %v1893, 0
        %v1991 = vsel %vm1896, %v1894, 0
        %1993 = vmatprep.subr.mxu0 0.0
        %v1994 = vand.u32 %v1895, 4294901760
        %1995 = vmatpush1.msra.mxu0 %v1994
        %1996 = vmatprep.subr.mxu0 0.0
        %1997 = vmatpush1.msra.mxu0 0.0
        %1998 = vmatprep.subr.mxu0 0.0
        %1999 = vmatpush1.msra.mxu0 0.0
        %2000 = vmatprep.subr.mxu0 0.0
        %2001 = vmatpush1.msra.mxu0 0.0
        %2002 = vmatprep.subr.mxu0 0.0
        %2003 = vmatpush1.msra.mxu0 0.0
        %2004 = vmatprep.subr.mxu0 0.0
        %2005 = vmatpush1.msra.mxu0 0.0
        %2006 = vmatprep.subr.mxu0 0.0
        %2007 = vmatpush1.msra.mxu0 0.0
        %2008 = vmatprep.subr.mxu0 0.0
        %2009 = vmatpush1.msra.mxu0 0.0
        %2010 = vmatprep.subr.mxu0 0.0
        %2011 = vmatpush1.msra.mxu0 0.0
        %2012 = vmatprep.subr.mxu0 0.0
        %2013 = vmatpush1.msra.mxu0 0.0
        %2014 = vmatprep.subr.mxu0 0.0
        %2015 = vmatpush1.msra.mxu0 0.0
        %2016 = vmatprep.subr.mxu0 0.0
        %2017 = vmatpush1.msra.mxu0 0.0
        %2018 = vmatprep.subr.mxu0 0.0
        %2019 = vmatpush1.msra.mxu0 0.0
        %2020 = vmatprep.subr.mxu0 0.0
        %2021 = vmatpush1.msra.mxu0 0.0
        %2022 = vmatprep.subr.mxu0 0.0
        %2023 = vmatpush1.msra.mxu0 0.0
        %2024 = vmatprep.subr.mxu0 0.0
        %2025 = vmatpush1.msra.mxu0 0.0
        %2026 = vmatprep.subr.mxu0 0.0
        %2027 = vmatpush1.msra.mxu0 0.0
        %2028 = vmatprep.subr.mxu0 0.0
        %2029 = vmatpush1.msra.mxu0 0.0
        %2030 = vmatprep.subr.mxu0 0.0
        %2031 = vmatpush1.msra.mxu0 0.0
        %2032 = vmatprep.subr.mxu0 0.0
        %2033 = vmatpush1.msra.mxu0 0.0
        %2034 = vmatprep.subr.mxu0 0.0
        %2035 = vmatpush1.msra.mxu0 0.0
        %2036 = vmatprep.subr.mxu0 0.0
        %2037 = vmatpush1.msra.mxu0 0.0
        %2038 = vmatprep.subr.mxu0 0.0
        %2039 = vmatpush1.msra.mxu0 0.0
        %2040 = vmatprep.subr.mxu0 0.0
        %2041 = vmatpush1.msra.mxu0 0.0
        %2042 = vmatprep.subr.mxu0 0.0
        %2043 = vmatpush1.msra.mxu0 0.0
        %2044 = vmatprep.subr.mxu0 0.0
        %2045 = vmatpush1.msra.mxu0 0.0
        %2046 = vmatprep.subr.mxu0 0.0
        %2047 = vmatpush1.msra.mxu0 0.0
        %2048 = vmatprep.subr.mxu0 0.0
        %2049 = vmatpush1.msra.mxu0 0.0
        %2050 = vmatprep.subr.mxu0 0.0
        %2051 = vmatpush1.msra.mxu0 0.0
        %2052 = vmatprep.subr.mxu0 0.0
        %2053 = vmatpush1.msra.mxu0 0.0
        %2054 = vmatprep.subr.mxu0 0.0
        %2055 = vmatpush1.msra.mxu0 0.0
        %2056 = vmatprep.subr.mxu0 0.0
        %2057 = vmatpush1.msra.mxu0 0.0
        %2058 = vmatprep.mubr.f32.mxu0 0.0
        %v2059 = vand.u32 %v1898, 4294901760
        %v2060 = vsub.f32 %v1898, %v2059
        %v2061 = vand.u32 %v2060, 4294901760
        %v2062 = vsub.f32 %v2060, %v2061
        %v2063 = vand.u32 %v2062, 4294901760
        %2064 = vmatmul.mubr.f32.gmra.mrb[0].mxu0 %v2063
        %v2065 = vpop.f32.mrb[0].mxu0
        %v2066 = vadd.f32 0.0, %v2065
        %v2067 = vpop.f32.mrb[0].mxu0
        %2068 = vmatprep.mubr.f32.mxu0 0.0
        %v2069 = vand.u32 %v1901, 4294901760
        %v2070 = vsub.f32 %v1901, %v2069
        %v2071 = vand.u32 %v2070, 4294901760
        %v2072 = vsub.f32 %v2070, %v2071
        %v2073 = vand.u32 %v2072, 4294901760
        %2074 = vmatmul.mubr.f32.gmra.mrb[0].mxu0 %v2073
        %v2075 = vpop.f32.mrb[0].mxu0
        %v2076 = vadd.f32 0.0, %v2075
        %v2077 = vpop.f32.mrb[0].mxu0
        %2078 = vmatprep.mubr.f32.mxu0 0.0
        %v2079 = vand.u32 %v1904, 4294901760
        %v2080 = vsub.f32 %v1904, %v2079
        %v2081 = vand.u32 %v2080, 4294901760
        %v2082 = vsub.f32 %v2080, %v2081
        %v2083 = vand.u32 %v2082, 4294901760
        %2084 = vmatmul.mubr.f32.gmra.mrb[0].mxu0 %v2083
        %v2085 = vpop.f32.mrb[0].mxu0
        %v2086 = vadd.f32 0.0, %v2085
        %v2087 = vpop.f32.mrb[0].mxu0
        %2088 = vmatprep.mubr.f32.mxu0 0.0
        %v2089 = vand.u32 %v1907, 4294901760
        %v2090 = vsub.f32 %v1907, %v2089
        %v2091 = vand.u32 %v2090, 4294901760
        %v2092 = vsub.f32 %v2090, %v2091
        %v2093 = vand.u32 %v2092, 4294901760
        %2094 = vmatmul.mubr.f32.gmra.mrb[0].mxu0 %v2093
        %v2095 = vpop.f32.mrb[0].mxu0
        %v2096 = vadd.f32 0.0, %v2095
        %v2097 = vpop.f32.mrb[0].mxu0
        %2098 = vmatprep.mubr.f32.mxu0 0.0
        %v2099 = vand.u32 %v1910, 4294901760
        %v2100 = vsub.f32 %v1910, %v2099
        %v2101 = vand.u32 %v2100, 4294901760
        %v2102 = vsub.f32 %v2100, %v2101
        %v2103 = vand.u32 %v2102, 4294901760
        %2104 = vmatmul.mubr.f32.gmra.mrb[0].mxu0 %v2103
        %v2105 = vpop.f32.mrb[0].mxu0
        %v2106 = vadd.f32 0.0, %v2105
        %v2107 = vpop.f32.mrb[0].mxu0
        %2108 = vmatprep.mubr.f32.mxu0 0.0
        %v2109 = vand.u32 %v1913, 4294901760
        %v2110 = vsub.f32 %v1913, %v2109
        %v2111 = vand.u32 %v2110, 4294901760
        %v2112 = vsub.f32 %v2110, %v2111
        %v2113 = vand.u32 %v2112, 4294901760
        %2114 = vmatmul.mubr.f32.gmra.mrb[0].mxu0 %v2113
        %v2115 = vpop.f32.mrb[0].mxu0
        %v2116 = vadd.f32 0.0, %v2115
        %v2117 = vpop.f32.mrb[0].mxu0
        %2118 = vmatprep.mubr.f32.mxu0 0.0
        %v2119 = vand.u32 %v1916, 4294901760
        %v2120 = vsub.f32 %v1916, %v2119
        %v2121 = vand.u32 %v2120, 4294901760
        %v2122 = vsub.f32 %v2120, %v2121
        %v2123 = vand.u32 %v2122, 4294901760
        %2124 = vmatmul.mubr.f32.gmra.mrb[0].mxu0 %v2123
        %v2125 = vpop.f32.mrb[0].mxu0
        %v2126 = vadd.f32 0.0, %v2125
        %v2127 = vpop.f32.mrb[0].mxu0
        %2128 = vmatprep.mubr.f32.mxu0 0.0
        %v2129 = vand.u32 %v1919, 4294901760
        %v2130 = vsub.f32 %v1919, %v2129
        %v2131 = vand.u32 %v2130, 4294901760
        %v2132 = vsub.f32 %v2130, %v2131
        %v2133 = vand.u32 %v2132, 4294901760
        %2134 = vmatmul.mubr.f32.gmra.mrb[0].mxu0 %v2133
        %v2135 = vpop.f32.mrb[0].mxu0
        %v2136 = vadd.f32 0.0, %v2135
        %v2137 = vpop.f32.mrb[0].mxu0
        %2138 = vmatprep.mubr.f32.mxu0 0.0
        %v2139 = vand.u32 %v1922, 4294901760
        %v2140 = vsub.f32 %v1922, %v2139
        %v2141 = vand.u32 %v2140, 4294901760
        %v2142 = vsub.f32 %v2140, %v2141
        %v2143 = vand.u32 %v2142, 4294901760
        %2144 = vmatmul.mubr.f32.gmra.mrb[0].mxu0 %v2143
        %v2145 = vpop.f32.mrb[0].mxu0
        %v2146 = vadd.f32 0.0, %v2145
        %v2147 = vpop.f32.mrb[0].mxu0
        %2148 = vmatprep.mubr.f32.mxu0 0.0
        %v2149 = vand.u32 %v1925, 4294901760
        %v2150 = vsub.f32 %v1925, %v2149
        %v2151 = vand.u32 %v2150, 4294901760
        %v2152 = vsub.f32 %v2150, %v2151
        %v2153 = vand.u32 %v2152, 4294901760
        %2154 = vmatmul.mubr.f32.gmra.mrb[0].mxu0 %v2153
        %v2155 = vpop.f32.mrb[0].mxu0
        %v2156 = vadd.f32 0.0, %v2155
        %v2157 = vpop.f32.mrb[0].mxu0
        %2158 = vmatprep.mubr.f32.mxu0 0.0
        %v2159 = vand.u32 %v1928, 4294901760
        %v2160 = vsub.f32 %v1928, %v2159
        %v2161 = vand.u32 %v2160, 4294901760
        %v2162 = vsub.f32 %v2160, %v2161
        %v2163 = vand.u32 %v2162, 4294901760
        %2164 = vmatmul.mubr.f32.gmra.mrb[0].mxu0 %v2163
        %v2165 = vpop.f32.mrb[0].mxu0
        %v2166 = vadd.f32 0.0, %v2165
        %v2167 = vpop.f32.mrb[0].mxu0
        %2168 = vmatprep.mubr.f32.mxu0 0.0
        %v2169 = vand.u32 %v1931, 4294901760
        %v2170 = vsub.f32 %v1931, %v2169
        %v2171 = vand.u32 %v2170, 4294901760
        %v2172 = vsub.f32 %v2170, %v2171
        %v2173 = vand.u32 %v2172, 4294901760
        %2174 = vmatmul.mubr.f32.gmra.mrb[0].mxu0 %v2173
        %v2175 = vpop.f32.mrb[0].mxu0
        %v2176 = vadd.f32 0.0, %v2175
        %v2177 = vpop.f32.mrb[0].mxu0
        %2178 = vmatprep.mubr.f32.mxu0 0.0
        %v2179 = vand.u32 %v1934, 4294901760
        %v2180 = vsub.f32 %v1934, %v2179
        %v2181 = vand.u32 %v2180, 4294901760
        %v2182 = vsub.f32 %v2180, %v2181
        %v2183 = vand.u32 %v2182, 4294901760
        %2184 = vmatmul.mubr.f32.gmra.mrb[0].mxu0 %v2183
        %v2185 = vpop.f32.mrb[0].mxu0
        %v2186 = vadd.f32 0.0, %v2185
        %v2187 = vpop.f32.mrb[0].mxu0
        %2188 = vmatprep.mubr.f32.mxu0 0.0
        %v2189 = vand.u32 %v1937, 4294901760
        %v2190 = vsub.f32 %v1937, %v2189
        %v2191 = vand.u32 %v2190, 4294901760
        %v2192 = vsub.f32 %v2190, %v2191
        %v2193 = vand.u32 %v2192, 4294901760
        %2194 = vmatmul.mubr.f32.gmra.mrb[0].mxu0 %v2193
        %v2195 = vpop.f32.mrb[0].mxu0
        %v2196 = vadd.f32 0.0, %v2195
        %v2197 = vpop.f32.mrb[0].mxu0
        %2198 = vmatprep.mubr.f32.mxu0 0.0
        %v2199 = vand.u32 %v1940, 4294901760
        %v2200 = vsub.f32 %v1940, %v2199
        %v2201 = vand.u32 %v2200, 4294901760
        %v2202 = vsub.f32 %v2200, %v2201
        %v2203 = vand.u32 %v2202, 4294901760
        %2204 = vmatmul.mubr.f32.gmra.mrb[0].mxu0 %v2203
        %v2205 = vpop.f32.mrb[0].mxu0
        %v2206 = vadd.f32 0.0, %v2205
        %v2207 = vpop.f32.mrb[0].mxu0
        %2208 = vmatprep.mubr.f32.mxu0 0.0
        %v2209 = vand.u32 %v1943, 4294901760
        %v2210 = vsub.f32 %v1943, %v2209
        %v2211 = vand.u32 %v2210, 4294901760
        %v2212 = vsub.f32 %v2210, %v2211
        %v2213 = vand.u32 %v2212, 4294901760
        %2214 = vmatmul.mubr.f32.gmra.mrb[0].mxu0 %v2213
        %v2215 = vpop.f32.mrb[0].mxu0
        %v2216 = vadd.f32 0.0, %v2215
        %v2217 = vpop.f32.mrb[0].mxu0
        %2218 = vmatprep.mubr.f32.mxu0 0.0
        %v2219 = vand.u32 %v1946, 4294901760
        %v2220 = vsub.f32 %v1946, %v2219
        %v2221 = vand.u32 %v2220, 4294901760
        %v2222 = vsub.f32 %v2220, %v2221
        %v2223 = vand.u32 %v2222, 4294901760
        %2224 = vmatmul.mubr.f32.gmra.mrb[0].mxu0 %v2223
        %v2225 = vpop.f32.mrb[0].mxu0
        %v2226 = vadd.f32 0.0, %v2225
        %v2227 = vpop.f32.mrb[0].mxu0
        %2228 = vmatprep.mubr.f32.mxu0 0.0
        %v2229 = vand.u32 %v1949, 4294901760
        %v2230 = vsub.f32 %v1949, %v2229
        %v2231 = vand.u32 %v2230, 4294901760
        %v2232 = vsub.f32 %v2230, %v2231
        %v2233 = vand.u32 %v2232, 4294901760
        %2234 = vmatmul.mubr.f32.gmra.mrb[0].mxu0 %v2233
        %v2235 = vpop.f32.mrb[0].mxu0
        %v2236 = vadd.f32 0.0, %v2235
        %v2237 = vpop.f32.mrb[0].mxu0
        %2238 = vmatprep.mubr.f32.mxu0 0.0
        %v2239 = vand.u32 %v1952, 4294901760
        %v2240 = vsub.f32 %v1952, %v2239
        %v2241 = vand.u32 %v2240, 4294901760
        %v2242 = vsub.f32 %v2240, %v2241
        %v2243 = vand.u32 %v2242, 4294901760
        %2244 = vmatmul.mubr.f32.gmra.mrb[0].mxu0 %v2243
        %v2245 = vpop.f32.mrb[0].mxu0
        %v2246 = vadd.f32 0.0, %v2245
        %v2247 = vpop.f32.mrb[0].mxu0
        %2248 = vmatprep.mubr.f32.mxu0 0.0
        %v2249 = vand.u32 %v1955, 4294901760
        %v2250 = vsub.f32 %v1955, %v2249
        %v2251 = vand.u32 %v2250, 4294901760
        %v2252 = vsub.f32 %v2250, %v2251
        %v2253 = vand.u32 %v2252, 4294901760
        %2254 = vmatmul.mubr.f32.gmra.mrb[0].mxu0 %v2253
        %v2255 = vpop.f32.mrb[0].mxu0
        %v2256 = vadd.f32 0.0, %v2255
        %v2257 = vpop.f32.mrb[0].mxu0
        %2258 = vmatprep.mubr.f32.mxu0 0.0
        %v2259 = vand.u32 %v1958, 4294901760
        %v2260 = vsub.f32 %v1958, %v2259
        %v2261 = vand.u32 %v2260, 4294901760
        %v2262 = vsub.f32 %v2260, %v2261
        %v2263 = vand.u32 %v2262, 4294901760
        %2264 = vmatmul.mubr.f32.gmra.mrb[0].mxu0 %v2263
        %v2265 = vpop.f32.mrb[0].mxu0
        %v2266 = vadd.f32 0.0, %v2265
        %v2267 = vpop.f32.mrb[0].mxu0
        %2268 = vmatprep.mubr.f32.mxu0 0.0
        %v2269 = vand.u32 %v1961, 4294901760
        %v2270 = vsub.f32 %v1961, %v2269
        %v2271 = vand.u32 %v2270, 4294901760
        %v2272 = vsub.f32 %v2270, %v2271
        %v2273 = vand.u32 %v2272, 4294901760
        %2274 = vmatmul.mubr.f32.gmra.mrb[0].mxu0 %v2273
        %v2275 = vpop.f32.mrb[0].mxu0
        %v2276 = vadd.f32 0.0, %v2275
        %v2277 = vpop.f32.mrb[0].mxu0
        %2278 = vmatprep.mubr.f32.mxu0 0.0
        %v2279 = vand.u32 %v1964, 4294901760
        %v2280 = vsub.f32 %v1964, %v2279
        %v2281 = vand.u32 %v2280, 4294901760
        %v2282 = vsub.f32 %v2280, %v2281
        %v2283 = vand.u32 %v2282, 4294901760
        %2284 = vmatmul.mubr.f32.gmra.mrb[0].mxu0 %v2283
        %v2285 = vpop.f32.mrb[0].mxu0
        %v2286 = vadd.f32 0.0, %v2285
        %v2287 = vpop.f32.mrb[0].mxu0
        %2288 = vmatprep.mubr.f32.mxu0 0.0
        %v2289 = vand.u32 %v1967, 4294901760
        %v2290 = vsub.f32 %v1967, %v2289
        %v2291 = vand.u32 %v2290, 4294901760
        %v2292 = vsub.f32 %v2290, %v2291
        %v2293 = vand.u32 %v2292, 4294901760
        %2294 = vmatmul.mubr.f32.gmra.mrb[0].mxu0 %v2293
        %v2295 = vpop.f32.mrb[0].mxu0
        %v2296 = vadd.f32 0.0, %v2295
        %v2297 = vpop.f32.mrb[0].mxu0
        %2298 = vmatprep.mubr.f32.mxu0 0.0
        %v2299 = vand.u32 %v1970, 4294901760
        %v2300 = vsub.f32 %v1970, %v2299
        %v2301 = vand.u32 %v2300, 4294901760
        %v2302 = vsub.f32 %v2300, %v2301
        %v2303 = vand.u32 %v2302, 4294901760
        %2304 = vmatmul.mubr.f32.gmra.mrb[0].mxu0 %v2303
        %v2305 = vpop.f32.mrb[0].mxu0
        %v2306 = vadd.f32 0.0, %v2305
        %v2307 = vpop.f32.mrb[0].mxu0
        %2308 = vmatprep.mubr.f32.mxu0 0.0
        %v2309 = vand.u32 %v1973, 4294901760
        %v2310 = vsub.f32 %v1973, %v2309
        %v2311 = vand.u32 %v2310, 4294901760
        %v2312 = vsub.f32 %v2310, %v2311
        %v2313 = vand.u32 %v2312, 4294901760
        %2314 = vmatmul.mubr.f32.gmra.mrb[0].mxu0 %v2313
        %v2315 = vpop.f32.mrb[0].mxu0
        %v2316 = vadd.f32 0.0, %v2315
        %v2317 = vpop.f32.mrb[0].mxu0
        %2318 = vmatprep.mubr.f32.mxu0 0.0
        %v2319 = vand.u32 %v1976, 4294901760
        %v2320 = vsub.f32 %v1976, %v2319
        %v2321 = vand.u32 %v2320, 4294901760
        %v2322 = vsub.f32 %v2320, %v2321
        %v2323 = vand.u32 %v2322, 4294901760
        %2324 = vmatmul.mubr.f32.gmra.mrb[0].mxu0 %v2323
        %v2325 = vpop.f32.mrb[0].mxu0
        %v2326 = vadd.f32 0.0, %v2325
        %v2327 = vpop.f32.mrb[0].mxu0
        %2328 = vmatprep.mubr.f32.mxu0 0.0
        %v2329 = vand.u32 %v1979, 4294901760
        %v2330 = vsub.f32 %v1979, %v2329
        %v2331 = vand.u32 %v2330, 4294901760
        %v2332 = vsub.f32 %v2330, %v2331
        %v2333 = vand.u32 %v2332, 4294901760
        %2334 = vmatmul.mubr.f32.gmra.mrb[0].mxu0 %v2333
        %v2335 = vpop.f32.mrb[0].mxu0
        %v2336 = vadd.f32 0.0, %v2335
        %v2337 = vpop.f32.mrb[0].mxu0
        %2338 = vmatprep.mubr.f32.mxu0 0.0
        %v2339 = vand.u32 %v1982, 4294901760
        %v2340 = vsub.f32 %v1982, %v2339
        %v2341 = vand.u32 %v2340, 4294901760
        %v2342 = vsub.f32 %v2340, %v2341
        %v2343 = vand.u32 %v2342, 4294901760
        %2344 = vmatmul.mubr.f32.gmra.mrb[0].mxu0 %v2343
        %v2345 = vpop.f32.mrb[0].mxu0
        %v2346 = vadd.f32 0.0, %v2345
        %v2347 = vpop.f32.mrb[0].mxu0
        %2348 = vmatprep.mubr.f32.mxu0 0.0
        %v2349 = vand.u32 %v1985, 4294901760
        %v2350 = vsub.f32 %v1985, %v2349
        %v2351 = vand.u32 %v2350, 4294901760
        %v2352 = vsub.f32 %v2350, %v2351
        %v2353 = vand.u32 %v2352, 4294901760
        %2354 = vmatmul.mubr.f32.gmra.mrb[0].mxu0 %v2353
        %v2355 = vpop.f32.mrb[0].mxu0
        %v2356 = vadd.f32 0.0, %v2355
        %v2357 = vpop.f32.mrb[0].mxu0
        %2358 = vmatprep.mubr.f32.mxu0 0.0
        %v2359 = vand.u32 %v1988, 4294901760
        %v2360 = vsub.f32 %v1988, %v2359
        %v2361 = vand.u32 %v2360, 4294901760
        %v2362 = vsub.f32 %v2360, %v2361
        %v2363 = vand.u32 %v2362, 4294901760
        %2364 = vmatmul.mubr.f32.gmra.mrb[0].mxu0 %v2363
        %v2365 = vpop.f32.mrb[0].mxu0
        %v2366 = vadd.f32 0.0, %v2365
        %v2367 = vpop.f32.mrb[0].mxu0
        %2368 = vmatprep.mubr.f32.mxu0 0.0
        %v2369 = vand.u32 %v1991, 4294901760
        %v2370 = vsub.f32 %v1991, %v2369
        %v2371 = vand.u32 %v2370, 4294901760
        %v2372 = vsub.f32 %v2370, %v2371
        %v2373 = vand.u32 %v2372, 4294901760
        %2374 = vmatmul.mubr.f32.gmra.mrb[0].mxu0 %v2373
        %v2375 = vpop.f32.mrb[0].mxu0
        %v2376 = vadd.f32 0.0, %v2375
        %v2377 = vpop.f32.mrb[0].mxu0
        %2378 = vdwg.mxu0
        %2379 = vmatprep.subr.mxu0 0.0
        %v2380 = vand.u32 %v1895, 4294901760
        %v2381 = vsub.f32 %v1895, %v2380
        %v2382 = vand.u32 %v2381, 4294901760
        %v2383 = vsub.f32 %v2381, %v2382
        %v2384 = vand.u32 %v2383, 4294901760
        %2385 = vmatpush1.msra.mxu0 %v2384
        %2386 = vmatprep.subr.mxu0 0.0
        %2387 = vmatpush1.msra.mxu0 0.0
        %2388 = vmatprep.subr.mxu0 0.0
        %2389 = vmatpush1.msra.mxu0 0.0
        %2390 = vmatprep.subr.mxu0 0.0
        %2391 = vmatpush1.msra.mxu0 0.0
        %2392 = vmatprep.subr.mxu0 0.0
        %2393 = vmatpush1.msra.mxu0 0.0
        %2394 = vmatprep.subr.mxu0 0.0
        %2395 = vmatpush1.msra.mxu0 0.0
        %2396 = vmatprep.subr.mxu0 0.0
        %2397 = vmatpush1.msra.mxu0 0.0
        %2398 = vmatprep.subr.mxu0 0.0
        %2399 = vmatpush1.msra.mxu0 0.0
        %2400 = vmatprep.subr.mxu0 0.0
        %2401 = vmatpush1.msra.mxu0 0.0
        %2402 = vmatprep.subr.mxu0 0.0
        %2403 = vmatpush1.msra.mxu0 0.0
        %2404 = vmatprep.subr.mxu0 0.0
        %2405 = vmatpush1.msra.mxu0 0.0
        %2406 = vmatprep.subr.mxu0 0.0
        %2407 = vmatpush1.msra.mxu0 0.0
        %2408 = vmatprep.subr.mxu0 0.0
        %2409 = vmatpush1.msra.mxu0 0.0
        %2410 = vmatprep.subr.mxu0 0.0
        %2411 = vmatpush1.msra.mxu0 0.0
        %2412 = vmatprep.subr.mxu0 0.0
        %2413 = vmatpush1.msra.mxu0 0.0
        %2414 = vmatprep.subr.mxu0 0.0
        %2415 = vmatpush1.msra.mxu0 0.0
        %2416 = vmatprep.subr.mxu0 0.0
        %2417 = vmatpush1.msra.mxu0 0.0
        %2418 = vmatprep.subr.mxu0 0.0
        %2419 = vmatpush1.msra.mxu0 0.0
        %2420 = vmatprep.subr.mxu0 0.0
        %2421 = vmatpush1.msra.mxu0 0.0
        %2422 = vmatprep.subr.mxu0 0.0
        %2423 = vmatpush1.msra.mxu0 0.0
        %2424 = vmatprep.subr.mxu0 0.0
        %2425 = vmatpush1.msra.mxu0 0.0
        %2426 = vmatprep.subr.mxu0 0.0
        %2427 = vmatpush1.msra.mxu0 0.0
        %2428 = vmatprep.subr.mxu0 0.0
        %2429 = vmatpush1.msra.mxu0 0.0
        %2430 = vmatprep.subr.mxu0 0.0
        %2431 = vmatpush1.msra.mxu0 0.0
        %2432 = vmatprep.subr.mxu0 0.0
        %2433 = vmatpush1.msra.mxu0 0.0
        %2434 = vmatprep.subr.mxu0 0.0
        %2435 = vmatpush1.msra.mxu0 0.0
        %2436 = vmatprep.subr.mxu0 0.0
        %2437 = vmatpush1.msra.mxu0 0.0
        %2438 = vmatprep.subr.mxu0 0.0
        %2439 = vmatpush1.msra.mxu0 0.0
        %2440 = vmatprep.subr.mxu0 0.0
        %2441 = vmatpush1.msra.mxu0 0.0
        %2442 = vmatprep.subr.mxu0 0.0
        %2443 = vmatpush1.msra.mxu0 0.0
        %2444 = vmatprep.subr.mxu0 0.0
        %2445 = vmatpush1.msra.mxu0 0.0
        %2446 = vmatprep.subr.mxu0 0.0
        %2447 = vmatpush1.msra.mxu0 0.0
        %2448 = vmatprep.mubr.f32.mxu0 0.0
        %v2449 = vand.u32 %v1898, 4294901760
        %2450 = vmatmul.mubr.f32.gmra.mrb[0].mxu0 %v2449
        %v2451 = vpop.f32.mrb[0].mxu0
        %v2452 = vadd.f32 %v2066, %v2451
        %v2453 = vpop.f32.mrb[0].mxu0
        %2454 = vmatprep.mubr.f32.mxu0 0.0
        %v2455 = vand.u32 %v1901, 4294901760
        %2456 = vmatmul.mubr.f32.gmra.mrb[0].mxu0 %v2455
        %v2457 = vpop.f32.mrb[0].mxu0
        %v2458 = vadd.f32 %v2076, %v2457
        %v2459 = vpop.f32.mrb[0].mxu0
        %2460 = vmatprep.mubr.f32.mxu0 0.0
        %v2461 = vand.u32 %v1904, 4294901760
        %2462 = vmatmul.mubr.f32.gmra.mrb[0].mxu0 %v2461
        %v2463 = vpop.f32.mrb[0].mxu0
        %v2464 = vadd.f32 %v2086, %v2463
        %v2465 = vpop.f32.mrb[0].mxu0
        %2466 = vmatprep.mubr.f32.mxu0 0.0
        %v2467 = vand.u32 %v1907, 4294901760
        %2468 = vmatmul.mubr.f32.gmra.mrb[0].mxu0 %v2467
        %v2469 = vpop.f32.mrb[0].mxu0
        %v2470 = vadd.f32 %v2096, %v2469
        %v2471 = vpop.f32.mrb[0].mxu0
        %2472 = vmatprep.mubr.f32.mxu0 0.0
        %v2473 = vand.u32 %v1910, 4294901760
        %2474 = vmatmul.mubr.f32.gmra.mrb[0].mxu0 %v2473
        %v2475 = vpop.f32.mrb[0].mxu0
        %v2476 = vadd.f32 %v2106, %v2475
        %v2477 = vpop.f32.mrb[0].mxu0
        %2478 = vmatprep.mubr.f32.mxu0 0.0
        %v2479 = vand.u32 %v1913, 4294901760
        %2480 = vmatmul.mubr.f32.gmra.mrb[0].mxu0 %v2479
        %v2481 = vpop.f32.mrb[0].mxu0
        %v2482 = vadd.f32 %v2116, %v2481
        %v2483 = vpop.f32.mrb[0].mxu0
        %2484 = vmatprep.mubr.f32.mxu0 0.0
        %v2485 = vand.u32 %v1916, 4294901760
        %2486 = vmatmul.mubr.f32.gmra.mrb[0].mxu0 %v2485
        %v2487 = vpop.f32.mrb[0].mxu0
        %v2488 = vadd.f32 %v2126, %v2487
        %v2489 = vpop.f32.mrb[0].mxu0
        %2490 = vmatprep.mubr.f32.mxu0 0.0
        %v2491 = vand.u32 %v1919, 4294901760
        %2492 = vmatmul.mubr.f32.gmra.mrb[0].mxu0 %v2491
        %v2493 = vpop.f32.mrb[0].mxu0
        %v2494 = vadd.f32 %v2136, %v2493
        %v2495 = vpop.f32.mrb[0].mxu0
        %2496 = vmatprep.mubr.f32.mxu0 0.0
        %v2497 = vand.u32 %v1922, 4294901760
        %2498 = vmatmul.mubr.f32.gmra.mrb[0].mxu0 %v2497
        %v2499 = vpop.f32.mrb[0].mxu0
        %v2500 = vadd.f32 %v2146, %v2499
        %v2501 = vpop.f32.mrb[0].mxu0
        %2502 = vmatprep.mubr.f32.mxu0 0.0
        %v2503 = vand.u32 %v1925, 4294901760
        %2504 = vmatmul.mubr.f32.gmra.mrb[0].mxu0 %v2503
        %v2505 = vpop.f32.mrb[0].mxu0
        %v2506 = vadd.f32 %v2156, %v2505
        %v2507 = vpop.f32.mrb[0].mxu0
        %2508 = vmatprep.mubr.f32.mxu0 0.0
        %v2509 = vand.u32 %v1928, 4294901760
        %2510 = vmatmul.mubr.f32.gmra.mrb[0].mxu0 %v2509
        %v2511 = vpop.f32.mrb[0].mxu0
        %v2512 = vadd.f32 %v2166, %v2511
        %v2513 = vpop.f32.mrb[0].mxu0
        %2514 = vmatprep.mubr.f32.mxu0 0.0
        %v2515 = vand.u32 %v1931, 4294901760
        %2516 = vmatmul.mubr.f32.gmra.mrb[0].mxu0 %v2515
        %v2517 = vpop.f32.mrb[0].mxu0
        %v2518 = vadd.f32 %v2176, %v2517
        %v2519 = vpop.f32.mrb[0].mxu0
        %2520 = vmatprep.mubr.f32.mxu0 0.0
        %v2521 = vand.u32 %v1934, 4294901760
        %2522 = vmatmul.mubr.f32.gmra.mrb[0].mxu0 %v2521
        %v2523 = vpop.f32.mrb[0].mxu0
        %v2524 = vadd.f32 %v2186, %v2523
        %v2525 = vpop.f32.mrb[0].mxu0
        %2526 = vmatprep.mubr.f32.mxu0 0.0
        %v2527 = vand.u32 %v1937, 4294901760
        %2528 = vmatmul.mubr.f32.gmra.mrb[0].mxu0 %v2527
        %v2529 = vpop.f32.mrb[0].mxu0
        %v2530 = vadd.f32 %v2196, %v2529
        %v2531 = vpop.f32.mrb[0].mxu0
        %2532 = vmatprep.mubr.f32.mxu0 0.0
        %v2533 = vand.u32 %v1940, 4294901760
        %2534 = vmatmul.mubr.f32.gmra.mrb[0].mxu0 %v2533
        %v2535 = vpop.f32.mrb[0].mxu0
        %v2536 = vadd.f32 %v2206, %v2535
        %v2537 = vpop.f32.mrb[0].mxu0
        %2538 = vmatprep.mubr.f32.mxu0 0.0
        %v2539 = vand.u32 %v1943, 4294901760
        %2540 = vmatmul.mubr.f32.gmra.mrb[0].mxu0 %v2539
        %v2541 = vpop.f32.mrb[0].mxu0
        %v2542 = vadd.f32 %v2216, %v2541
        %v2543 = vpop.f32.mrb[0].mxu0
        %2544 = vmatprep.mubr.f32.mxu0 0.0
        %v2545 = vand.u32 %v1946, 4294901760
        %2546 = vmatmul.mubr.f32.gmra.mrb[0].mxu0 %v2545
        %v2547 = vpop.f32.mrb[0].mxu0
        %v2548 = vadd.f32 %v2226, %v2547
        %v2549 = vpop.f32.mrb[0].mxu0
        %2550 = vmatprep.mubr.f32.mxu0 0.0
        %v2551 = vand.u32 %v1949, 4294901760
        %2552 = vmatmul.mubr.f32.gmra.mrb[0].mxu0 %v2551
        %v2553 = vpop.f32.mrb[0].mxu0
        %v2554 = vadd.f32 %v2236, %v2553
        %v2555 = vpop.f32.mrb[0].mxu0
        %2556 = vmatprep.mubr.f32.mxu0 0.0
        %v2557 = vand.u32 %v1952, 4294901760
        %2558 = vmatmul.mubr.f32.gmra.mrb[0].mxu0 %v2557
        %v2559 = vpop.f32.mrb[0].mxu0
        %v2560 = vadd.f32 %v2246, %v2559
        %v2561 = vpop.f32.mrb[0].mxu0
        %2562 = vmatprep.mubr.f32.mxu0 0.0
        %v2563 = vand.u32 %v1955, 4294901760
        %2564 = vmatmul.mubr.f32.gmra.mrb[0].mxu0 %v2563
        %v2565 = vpop.f32.mrb[0].mxu0
        %v2566 = vadd.f32 %v2256, %v2565
        %v2567 = vpop.f32.mrb[0].mxu0
        %2568 = vmatprep.mubr.f32.mxu0 0.0
        %v2569 = vand.u32 %v1958, 4294901760
        %2570 = vmatmul.mubr.f32.gmra.mrb[0].mxu0 %v2569
        %v2571 = vpop.f32.mrb[0].mxu0
        %v2572 = vadd.f32 %v2266, %v2571
        %v2573 = vpop.f32.mrb[0].mxu0
        %2574 = vmatprep.mubr.f32.mxu0 0.0
        %v2575 = vand.u32 %v1961, 4294901760
        %2576 = vmatmul.mubr.f32.gmra.mrb[0].mxu0 %v2575
        %v2577 = vpop.f32.mrb[0].mxu0
        %v2578 = vadd.f32 %v2276, %v2577
        %v2579 = vpop.f32.mrb[0].mxu0
        %2580 = vmatprep.mubr.f32.mxu0 0.0
        %v2581 = vand.u32 %v1964, 4294901760
        %2582 = vmatmul.mubr.f32.gmra.mrb[0].mxu0 %v2581
        %v2583 = vpop.f32.mrb[0].mxu0
        %v2584 = vadd.f32 %v2286, %v2583
        %v2585 = vpop.f32.mrb[0].mxu0
        %2586 = vmatprep.mubr.f32.mxu0 0.0
        %v2587 = vand.u32 %v1967, 4294901760
        %2588 = vmatmul.mubr.f32.gmra.mrb[0].mxu0 %v2587
        %v2589 = vpop.f32.mrb[0].mxu0
        %v2590 = vadd.f32 %v2296, %v2589
        %v2591 = vpop.f32.mrb[0].mxu0
        %2592 = vmatprep.mubr.f32.mxu0 0.0
        %v2593 = vand.u32 %v1970, 4294901760
        %2594 = vmatmul.mubr.f32.gmra.mrb[0].mxu0 %v2593
        %v2595 = vpop.f32.mrb[0].mxu0
        %v2596 = vadd.f32 %v2306, %v2595
        %v2597 = vpop.f32.mrb[0].mxu0
        %2598 = vmatprep.mubr.f32.mxu0 0.0
        %v2599 = vand.u32 %v1973, 4294901760
        %2600 = vmatmul.mubr.f32.gmra.mrb[0].mxu0 %v2599
        %v2601 = vpop.f32.mrb[0].mxu0
        %v2602 = vadd.f32 %v2316, %v2601
        %v2603 = vpop.f32.mrb[0].mxu0
        %2604 = vmatprep.mubr.f32.mxu0 0.0
        %v2605 = vand.u32 %v1976, 4294901760
        %2606 = vmatmul.mubr.f32.gmra.mrb[0].mxu0 %v2605
        %v2607 = vpop.f32.mrb[0].mxu0
        %v2608 = vadd.f32 %v2326, %v2607
        %v2609 = vpop.f32.mrb[0].mxu0
        %2610 = vmatprep.mubr.f32.mxu0 0.0
        %v2611 = vand.u32 %v1979, 4294901760
        %2612 = vmatmul.mubr.f32.gmra.mrb[0].mxu0 %v2611
        %v2613 = vpop.f32.mrb[0].mxu0
        %v2614 = vadd.f32 %v2336, %v2613
        %v2615 = vpop.f32.mrb[0].mxu0
        %2616 = vmatprep.mubr.f32.mxu0 0.0
        %v2617 = vand.u32 %v1982, 4294901760
        %2618 = vmatmul.mubr.f32.gmra.mrb[0].mxu0 %v2617
        %v2619 = vpop.f32.mrb[0].mxu0
        %v2620 = vadd.f32 %v2346, %v2619
        %v2621 = vpop.f32.mrb[0].mxu0
        %2622 = vmatprep.mubr.f32.mxu0 0.0
        %v2623 = vand.u32 %v1985, 4294901760
        %2624 = vmatmul.mubr.f32.gmra.mrb[0].mxu0 %v2623
        %v2625 = vpop.f32.mrb[0].mxu0
        %v2626 = vadd.f32 %v2356, %v2625
        %v2627 = vpop.f32.mrb[0].mxu0
        %2628 = vmatprep.mubr.f32.mxu0 0.0
        %v2629 = vand.u32 %v1988, 4294901760
        %2630 = vmatmul.mubr.f32.gmra.mrb[0].mxu0 %v2629
        %v2631 = vpop.f32.mrb[0].mxu0
        %v2632 = vadd.f32 %v2366, %v2631
        %v2633 = vpop.f32.mrb[0].mxu0
        %2634 = vmatprep.mubr.f32.mxu0 0.0
        %v2635 = vand.u32 %v1991, 4294901760
        %2636 = vmatmul.mubr.f32.gmra.mrb[0].mxu0 %v2635
        %v2637 = vpop.f32.mrb[0].mxu0
        %v2638 = vadd.f32 %v2376, %v2637
        %v2639 = vpop.f32.mrb[0].mxu0
        %2640 = vdwg.mxu0
        %2641 = vmatprep.subr.mxu0 0.0
        %v2642 = vand.u32 %v1895, 4294901760
        %v2643 = vsub.f32 %v1895, %v2642
        %2644 = vmatpush1.msra.mxu0 %v2643
        %2645 = vmatprep.subr.mxu0 0.0
        %2646 = vmatpush1.msra.mxu0 0.0
        %2647 = vmatprep.subr.mxu0 0.0
        %2648 = vmatpush1.msra.mxu0 0.0
        %2649 = vmatprep.subr.mxu0 0.0
        %2650 = vmatpush1.msra.mxu0 0.0
        %2651 = vmatprep.subr.mxu0 0.0
        %2652 = vmatpush1.msra.mxu0 0.0
        %2653 = vmatprep.subr.mxu0 0.0
        %2654 = vmatpush1.msra.mxu0 0.0
        %2655 = vmatprep.subr.mxu0 0.0
        %2656 = vmatpush1.msra.mxu0 0.0
        %2657 = vmatprep.subr.mxu0 0.0
        %2658 = vmatpush1.msra.mxu0 0.0
        %2659 = vmatprep.subr.mxu0 0.0
        %2660 = vmatpush1.msra.mxu0 0.0
        %2661 = vmatprep.subr.mxu0 0.0
        %2662 = vmatpush1.msra.mxu0 0.0
        %2663 = vmatprep.subr.mxu0 0.0
        %2664 = vmatpush1.msra.mxu0 0.0
        %2665 = vmatprep.subr.mxu0 0.0
        %2666 = vmatpush1.msra.mxu0 0.0
        %2667 = vmatprep.subr.mxu0 0.0
        %2668 = vmatpush1.msra.mxu0 0.0
        %2669 = vmatprep.subr.mxu0 0.0
        %2670 = vmatpush1.msra.mxu0 0.0
        %2671 = vmatprep.subr.mxu0 0.0
        %2672 = vmatpush1.msra.mxu0 0.0
        %2673 = vmatprep.subr.mxu0 0.0
        %2674 = vmatpush1.msra.mxu0 0.0
        %2675 = vmatprep.subr.mxu0 0.0
        %2676 = vmatpush1.msra.mxu0 0.0
        %2677 = vmatprep.subr.mxu0 0.0
        %2678 = vmatpush1.msra.mxu0 0.0
        %2679 = vmatprep.subr.mxu0 0.0
        %2680 = vmatpush1.msra.mxu0 0.0
        %2681 = vmatprep.subr.mxu0 0.0
        %2682 = vmatpush1.msra.mxu0 0.0
        %2683 = vmatprep.subr.mxu0 0.0
        %2684 = vmatpush1.msra.mxu0 0.0
        %2685 = vmatprep.subr.mxu0 0.0
        %2686 = vmatpush1.msra.mxu0 0.0
        %2687 = vmatprep.subr.mxu0 0.0
        %2688 = vmatpush1.msra.mxu0 0.0
        %2689 = vmatprep.subr.mxu0 0.0
        %2690 = vmatpush1.msra.mxu0 0.0
        %2691 = vmatprep.subr.mxu0 0.0
        %2692 = vmatpush1.msra.mxu0 0.0
        %2693 = vmatprep.subr.mxu0 0.0
        %2694 = vmatpush1.msra.mxu0 0.0
        %2695 = vmatprep.subr.mxu0 0.0
        %2696 = vmatpush1.msra.mxu0 0.0
        %2697 = vmatprep.subr.mxu0 0.0
        %2698 = vmatpush1.msra.mxu0 0.0
        %2699 = vmatprep.subr.mxu0 0.0
        %2700 = vmatpush1.msra.mxu0 0.0
        %2701 = vmatprep.subr.mxu0 0.0
        %2702 = vmatpush1.msra.mxu0 0.0
        %2703 = vmatprep.subr.mxu0 0.0
        %2704 = vmatpush1.msra.mxu0 0.0
        %2705 = vmatprep.subr.mxu0 0.0
        %2706 = vmatpush1.msra.mxu0 0.0
        %2707 = vmatprep.mubr.f32.mxu0 0.0
        %v2708 = vand.u32 %v1898, 4294901760
        %v2709 = vsub.f32 %v1898, %v2708
        %2710 = vmatmul.mubr.f32.gmra.mrb[0].mxu0 %v2709
        %v2711 = vpop.f32.mrb[0].mxu0
        %v2712 = vadd.f32 %v2452, %v2711
        %v2713 = vpop.f32.mrb[0].mxu0
        %2714 = vmatprep.mubr.f32.mxu0 0.0
        %v2715 = vand.u32 %v1901, 4294901760
        %v2716 = vsub.f32 %v1901, %v2715
        %2717 = vmatmul.mubr.f32.gmra.mrb[0].mxu0 %v2716
        %v2718 = vpop.f32.mrb[0].mxu0
        %v2719 = vadd.f32 %v2458, %v2718
        %v2720 = vpop.f32.mrb[0].mxu0
        %2721 = vmatprep.mubr.f32.mxu0 0.0
        %v2722 = vand.u32 %v1904, 4294901760
        %v2723 = vsub.f32 %v1904, %v2722
        %2724 = vmatmul.mubr.f32.gmra.mrb[0].mxu0 %v2723
        %v2725 = vpop.f32.mrb[0].mxu0
        %v2726 = vadd.f32 %v2464, %v2725
        %v2727 = vpop.f32.mrb[0].mxu0
        %2728 = vmatprep.mubr.f32.mxu0 0.0
        %v2729 = vand.u32 %v1907, 4294901760
        %v2730 = vsub.f32 %v1907, %v2729
        %2731 = vmatmul.mubr.f32.gmra.mrb[0].mxu0 %v2730
        %v2732 = vpop.f32.mrb[0].mxu0
        %v2733 = vadd.f32 %v2470, %v2732
        %v2734 = vpop.f32.mrb[0].mxu0
        %2735 = vmatprep.mubr.f32.mxu0 0.0
        %v2736 = vand.u32 %v1910, 4294901760
        %v2737 = vsub.f32 %v1910, %v2736
        %2738 = vmatmul.mubr.f32.gmra.mrb[0].mxu0 %v2737
        %v2739 = vpop.f32.mrb[0].mxu0
        %v2740 = vadd.f32 %v2476, %v2739
        %v2741 = vpop.f32.mrb[0].mxu0
        %2742 = vmatprep.mubr.f32.mxu0 0.0
        %v2743 = vand.u32 %v1913, 4294901760
        %v2744 = vsub.f32 %v1913, %v2743
        %2745 = vmatmul.mubr.f32.gmra.mrb[0].mxu0 %v2744
        %v2746 = vpop.f32.mrb[0].mxu0
        %v2747 = vadd.f32 %v2482, %v2746
        %v2748 = vpop.f32.mrb[0].mxu0
        %2749 = vmatprep.mubr.f32.mxu0 0.0
        %v2750 = vand.u32 %v1916, 4294901760
        %v2751 = vsub.f32 %v1916, %v2750
        %2752 = vmatmul.mubr.f32.gmra.mrb[0].mxu0 %v2751
        %v2753 = vpop.f32.mrb[0].mxu0
        %v2754 = vadd.f32 %v2488, %v2753
        %v2755 = vpop.f32.mrb[0].mxu0
        %2756 = vmatprep.mubr.f32.mxu0 0.0
        %v2757 = vand.u32 %v1919, 4294901760
        %v2758 = vsub.f32 %v1919, %v2757
        %2759 = vmatmul.mubr.f32.gmra.mrb[0].mxu0 %v2758
        %v2760 = vpop.f32.mrb[0].mxu0
        %v2761 = vadd.f32 %v2494, %v2760
        %v2762 = vpop.f32.mrb[0].mxu0
        %2763 = vmatprep.mubr.f32.mxu0 0.0
        %v2764 = vand.u32 %v1922, 4294901760
        %v2765 = vsub.f32 %v1922, %v2764
        %2766 = vmatmul.mubr.f32.gmra.mrb[0].mxu0 %v2765
        %v2767 = vpop.f32.mrb[0].mxu0
        %v2768 = vadd.f32 %v2500, %v2767
        %v2769 = vpop.f32.mrb[0].mxu0
        %2770 = vmatprep.mubr.f32.mxu0 0.0
        %v2771 = vand.u32 %v1925, 4294901760
        %v2772 = vsub.f32 %v1925, %v2771
        %2773 = vmatmul.mubr.f32.gmra.mrb[0].mxu0 %v2772
        %v2774 = vpop.f32.mrb[0].mxu0
        %v2775 = vadd.f32 %v2506, %v2774
        %v2776 = vpop.f32.mrb[0].mxu0
        %2777 = vmatprep.mubr.f32.mxu0 0.0
        %v2778 = vand.u32 %v1928, 4294901760
        %v2779 = vsub.f32 %v1928, %v2778
        %2780 = vmatmul.mubr.f32.gmra.mrb[0].mxu0 %v2779
        %v2781 = vpop.f32.mrb[0].mxu0
        %v2782 = vadd.f32 %v2512, %v2781
        %v2783 = vpop.f32.mrb[0].mxu0
        %2784 = vmatprep.mubr.f32.mxu0 0.0
        %v2785 = vand.u32 %v1931, 4294901760
        %v2786 = vsub.f32 %v1931, %v2785
        %2787 = vmatmul.mubr.f32.gmra.mrb[0].mxu0 %v2786
        %v2788 = vpop.f32.mrb[0].mxu0
        %v2789 = vadd.f32 %v2518, %v2788
        %v2790 = vpop.f32.mrb[0].mxu0
        %2791 = vmatprep.mubr.f32.mxu0 0.0
        %v2792 = vand.u32 %v1934, 4294901760
        %v2793 = vsub.f32 %v1934, %v2792
        %2794 = vmatmul.mubr.f32.gmra.mrb[0].mxu0 %v2793
        %v2795 = vpop.f32.mrb[0].mxu0
        %v2796 = vadd.f32 %v2524, %v2795
        %v2797 = vpop.f32.mrb[0].mxu0
        %2798 = vmatprep.mubr.f32.mxu0 0.0
        %v2799 = vand.u32 %v1937, 4294901760
        %v2800 = vsub.f32 %v1937, %v2799
        %2801 = vmatmul.mubr.f32.gmra.mrb[0].mxu0 %v2800
        %v2802 = vpop.f32.mrb[0].mxu0
        %v2803 = vadd.f32 %v2530, %v2802
        %v2804 = vpop.f32.mrb[0].mxu0
        %2805 = vmatprep.mubr.f32.mxu0 0.0
        %v2806 = vand.u32 %v1940, 4294901760
        %v2807 = vsub.f32 %v1940, %v2806
        %2808 = vmatmul.mubr.f32.gmra.mrb[0].mxu0 %v2807
        %v2809 = vpop.f32.mrb[0].mxu0
        %v2810 = vadd.f32 %v2536, %v2809
        %v2811 = vpop.f32.mrb[0].mxu0
        %2812 = vmatprep.mubr.f32.mxu0 0.0
        %v2813 = vand.u32 %v1943, 4294901760
        %v2814 = vsub.f32 %v1943, %v2813
        %2815 = vmatmul.mubr.f32.gmra.mrb[0].mxu0 %v2814
        %v2816 = vpop.f32.mrb[0].mxu0
        %v2817 = vadd.f32 %v2542, %v2816
        %v2818 = vpop.f32.mrb[0].mxu0
        %2819 = vmatprep.mubr.f32.mxu0 0.0
        %v2820 = vand.u32 %v1946, 4294901760
        %v2821 = vsub.f32 %v1946, %v2820
        %2822 = vmatmul.mubr.f32.gmra.mrb[0].mxu0 %v2821
        %v2823 = vpop.f32.mrb[0].mxu0
        %v2824 = vadd.f32 %v2548, %v2823
        %v2825 = vpop.f32.mrb[0].mxu0
        %2826 = vmatprep.mubr.f32.mxu0 0.0
        %v2827 = vand.u32 %v1949, 4294901760
        %v2828 = vsub.f32 %v1949, %v2827
        %2829 = vmatmul.mubr.f32.gmra.mrb[0].mxu0 %v2828
        %v2830 = vpop.f32.mrb[0].mxu0
        %v2831 = vadd.f32 %v2554, %v2830
        %v2832 = vpop.f32.mrb[0].mxu0
        %2833 = vmatprep.mubr.f32.mxu0 0.0
        %v2834 = vand.u32 %v1952, 4294901760
        %v2835 = vsub.f32 %v1952, %v2834
        %2836 = vmatmul.mubr.f32.gmra.mrb[0].mxu0 %v2835
        %v2837 = vpop.f32.mrb[0].mxu0
        %v2838 = vadd.f32 %v2560, %v2837
        %v2839 = vpop.f32.mrb[0].mxu0
        %2840 = vmatprep.mubr.f32.mxu0 0.0
        %v2841 = vand.u32 %v1955, 4294901760
        %v2842 = vsub.f32 %v1955, %v2841
        %2843 = vmatmul.mubr.f32.gmra.mrb[0].mxu0 %v2842
        %v2844 = vpop.f32.mrb[0].mxu0
        %v2845 = vadd.f32 %v2566, %v2844
        %v2846 = vpop.f32.mrb[0].mxu0
        %2847 = vmatprep.mubr.f32.mxu0 0.0
        %v2848 = vand.u32 %v1958, 4294901760
        %v2849 = vsub.f32 %v1958, %v2848
        %2850 = vmatmul.mubr.f32.gmra.mrb[0].mxu0 %v2849
        %v2851 = vpop.f32.mrb[0].mxu0
        %v2852 = vadd.f32 %v2572, %v2851
        %v2853 = vpop.f32.mrb[0].mxu0
        %2854 = vmatprep.mubr.f32.mxu0 0.0
        %v2855 = vand.u32 %v1961, 4294901760
        %v2856 = vsub.f32 %v1961, %v2855
        %2857 = vmatmul.mubr.f32.gmra.mrb[0].mxu0 %v2856
        %v2858 = vpop.f32.mrb[0].mxu0
        %v2859 = vadd.f32 %v2578, %v2858
        %v2860 = vpop.f32.mrb[0].mxu0
        %2861 = vmatprep.mubr.f32.mxu0 0.0
        %v2862 = vand.u32 %v1964, 4294901760
        %v2863 = vsub.f32 %v1964, %v2862
        %2864 = vmatmul.mubr.f32.gmra.mrb[0].mxu0 %v2863
        %v2865 = vpop.f32.mrb[0].mxu0
        %v2866 = vadd.f32 %v2584, %v2865
        %v2867 = vpop.f32.mrb[0].mxu0
        %2868 = vmatprep.mubr.f32.mxu0 0.0
        %v2869 = vand.u32 %v1967, 4294901760
        %v2870 = vsub.f32 %v1967, %v2869
        %2871 = vmatmul.mubr.f32.gmra.mrb[0].mxu0 %v2870
        %v2872 = vpop.f32.mrb[0].mxu0
        %v2873 = vadd.f32 %v2590, %v2872
        %v2874 = vpop.f32.mrb[0].mxu0
        %2875 = vmatprep.mubr.f32.mxu0 0.0
        %v2876 = vand.u32 %v1970, 4294901760
        %v2877 = vsub.f32 %v1970, %v2876
        %2878 = vmatmul.mubr.f32.gmra.mrb[0].mxu0 %v2877
        %v2879 = vpop.f32.mrb[0].mxu0
        %v2880 = vadd.f32 %v2596, %v2879
        %v2881 = vpop.f32.mrb[0].mxu0
        %2882 = vmatprep.mubr.f32.mxu0 0.0
        %v2883 = vand.u32 %v1973, 4294901760
        %v2884 = vsub.f32 %v1973, %v2883
        %2885 = vmatmul.mubr.f32.gmra.mrb[0].mxu0 %v2884
        %v2886 = vpop.f32.mrb[0].mxu0
        %v2887 = vadd.f32 %v2602, %v2886
        %v2888 = vpop.f32.mrb[0].mxu0
        %2889 = vmatprep.mubr.f32.mxu0 0.0
        %v2890 = vand.u32 %v1976, 4294901760
        %v2891 = vsub.f32 %v1976, %v2890
        %2892 = vmatmul.mubr.f32.gmra.mrb[0].mxu0 %v2891
        %v2893 = vpop.f32.mrb[0].mxu0
        %v2894 = vadd.f32 %v2608, %v2893
        %v2895 = vpop.f32.mrb[0].mxu0
        %2896 = vmatprep.mubr.f32.mxu0 0.0
        %v2897 = vand.u32 %v1979, 4294901760
        %v2898 = vsub.f32 %v1979, %v2897
        %2899 = vmatmul.mubr.f32.gmra.mrb[0].mxu0 %v2898
        %v2900 = vpop.f32.mrb[0].mxu0
        %v2901 = vadd.f32 %v2614, %v2900
        %v2902 = vpop.f32.mrb[0].mxu0
        %2903 = vmatprep.mubr.f32.mxu0 0.0
        %v2904 = vand.u32 %v1982, 4294901760
        %v2905 = vsub.f32 %v1982, %v2904
        %2906 = vmatmul.mubr.f32.gmra.mrb[0].mxu0 %v2905
        %v2907 = vpop.f32.mrb[0].mxu0
        %v2908 = vadd.f32 %v2620, %v2907
        %v2909 = vpop.f32.mrb[0].mxu0
        %2910 = vmatprep.mubr.f32.mxu0 0.0
        %v2911 = vand.u32 %v1985, 4294901760
        %v2912 = vsub.f32 %v1985, %v2911
        %2913 = vmatmul.mubr.f32.gmra.mrb[0].mxu0 %v2912
        %v2914 = vpop.f32.mrb[0].mxu0
        %v2915 = vadd.f32 %v2626, %v2914
        %v2916 = vpop.f32.mrb[0].mxu0
        %2917 = vmatprep.mubr.f32.mxu0 0.0
        %v2918 = vand.u32 %v1988, 4294901760
        %v2919 = vsub.f32 %v1988, %v2918
        %2920 = vmatmul.mubr.f32.gmra.mrb[0].mxu0 %v2919
        %v2921 = vpop.f32.mrb[0].mxu0
        %v2922 = vadd.f32 %v2632, %v2921
        %v2923 = vpop.f32.mrb[0].mxu0
        %2924 = vmatprep.mubr.f32.mxu0 0.0
        %v2925 = vand.u32 %v1991, 4294901760
        %v2926 = vsub.f32 %v1991, %v2925
        %2927 = vmatmul.mubr.f32.gmra.mrb[0].mxu0 %v2926
        %v2928 = vpop.f32.mrb[0].mxu0
        %v2929 = vadd.f32 %v2638, %v2928
        %v2930 = vpop.f32.mrb[0].mxu0
        %2931 = vdwg.mxu0
        %2932 = vmatprep.subr.mxu0 0.0
        %v2933 = vand.u32 %v1895, 4294901760
        %2934 = vmatpush1.msra.mxu0 %v2933
        %2935 = vmatprep.subr.mxu0 0.0
        %2936 = vmatpush1.msra.mxu0 0.0
        %2937 = vmatprep.subr.mxu0 0.0
        %2938 = vmatpush1.msra.mxu0 0.0
        %2939 = vmatprep.subr.mxu0 0.0
        %2940 = vmatpush1.msra.mxu0 0.0
        %2941 = vmatprep.subr.mxu0 0.0
        %2942 = vmatpush1.msra.mxu0 0.0
        %2943 = vmatprep.subr.mxu0 0.0
        %2944 = vmatpush1.msra.mxu0 0.0
        %2945 = vmatprep.subr.mxu0 0.0
        %2946 = vmatpush1.msra.mxu0 0.0
        %2947 = vmatprep.subr.mxu0 0.0
        %2948 = vmatpush1.msra.mxu0 0.0
        %2949 = vmatprep.subr.mxu0 0.0
        %2950 = vmatpush1.msra.mxu0 0.0
        %2951 = vmatprep.subr.mxu0 0.0
        %2952 = vmatpush1.msra.mxu0 0.0
        %2953 = vmatprep.subr.mxu0 0.0
        %2954 = vmatpush1.msra.mxu0 0.0
        %2955 = vmatprep.subr.mxu0 0.0
        %2956 = vmatpush1.msra.mxu0 0.0
        %2957 = vmatprep.subr.mxu0 0.0
        %2958 = vmatpush1.msra.mxu0 0.0
        %2959 = vmatprep.subr.mxu0 0.0
        %2960 = vmatpush1.msra.mxu0 0.0
        %2961 = vmatprep.subr.mxu0 0.0
        %2962 = vmatpush1.msra.mxu0 0.0
        %2963 = vmatprep.subr.mxu0 0.0
        %2964 = vmatpush1.msra.mxu0 0.0
        %2965 = vmatprep.subr.mxu0 0.0
        %2966 = vmatpush1.msra.mxu0 0.0
        %2967 = vmatprep.subr.mxu0 0.0
        %2968 = vmatpush1.msra.mxu0 0.0
        %2969 = vmatprep.subr.mxu0 0.0
        %2970 = vmatpush1.msra.mxu0 0.0
        %2971 = vmatprep.subr.mxu0 0.0
        %2972 = vmatpush1.msra.mxu0 0.0
        %2973 = vmatprep.subr.mxu0 0.0
        %2974 = vmatpush1.msra.mxu0 0.0
        %2975 = vmatprep.subr.mxu0 0.0
        %2976 = vmatpush1.msra.mxu0 0.0
        %2977 = vmatprep.subr.mxu0 0.0
        %2978 = vmatpush1.msra.mxu0 0.0
        %2979 = vmatprep.subr.mxu0 0.0
        %2980 = vmatpush1.msra.mxu0 0.0
        %2981 = vmatprep.subr.mxu0 0.0
        %2982 = vmatpush1.msra.mxu0 0.0
        %2983 = vmatprep.subr.mxu0 0.0
        %2984 = vmatpush1.msra.mxu0 0.0
        %2985 = vmatprep.subr.mxu0 0.0
        %2986 = vmatpush1.msra.mxu0 0.0
        %2987 = vmatprep.subr.mxu0 0.0
        %2988 = vmatpush1.msra.mxu0 0.0
        %2989 = vmatprep.subr.mxu0 0.0
        %2990 = vmatpush1.msra.mxu0 0.0
        %2991 = vmatprep.subr.mxu0 0.0
        %2992 = vmatpush1.msra.mxu0 0.0
        %2993 = vmatprep.subr.mxu0 0.0
        %2994 = vmatpush1.msra.mxu0 0.0
        %2995 = vmatprep.subr.mxu0 0.0
        %2996 = vmatpush1.msra.mxu0 0.0
        %2997 = vmatprep.mubr.f32.mxu0 0.0
        %v2998 = vand.u32 %v1898, 4294901760
        %v2999 = vsub.f32 %v1898, %v2998
        %v3000 = vand.u32 %v2999, 4294901760
        %3001 = vmatmul.mubr.f32.gmra.mrb[0].mxu0 %v3000
        %v3002 = vpop.f32.mrb[0].mxu0
        %v3003 = vadd.f32 %v2712, %v3002
        %v3004 = vpop.f32.mrb[0].mxu0
        %3005 = vmatprep.mubr.f32.mxu0 0.0
        %v3006 = vand.u32 %v1901, 4294901760
        %v3007 = vsub.f32 %v1901, %v3006
        %v3008 = vand.u32 %v3007, 4294901760
        %3009 = vmatmul.mubr.f32.gmra.mrb[0].mxu0 %v3008
        %v3010 = vpop.f32.mrb[0].mxu0
        %v3011 = vadd.f32 %v2719, %v3010
        %v3012 = vpop.f32.mrb[0].mxu0
        %3013 = vmatprep.mubr.f32.mxu0 0.0
        %v3014 = vand.u32 %v1904, 4294901760
        %v3015 = vsub.f32 %v1904, %v3014
        %v3016 = vand.u32 %v3015, 4294901760
        %3017 = vmatmul.mubr.f32.gmra.mrb[0].mxu0 %v3016
        %v3018 = vpop.f32.mrb[0].mxu0
        %v3019 = vadd.f32 %v2726, %v3018
        %v3020 = vpop.f32.mrb[0].mxu0
        %3021 = vmatprep.mubr.f32.mxu0 0.0
        %v3022 = vand.u32 %v1907, 4294901760
        %v3023 = vsub.f32 %v1907, %v3022
        %v3024 = vand.u32 %v3023, 4294901760
        %3025 = vmatmul.mubr.f32.gmra.mrb[0].mxu0 %v3024
        %v3026 = vpop.f32.mrb[0].mxu0
        %v3027 = vadd.f32 %v2733, %v3026
        %v3028 = vpop.f32.mrb[0].mxu0
        %3029 = vmatprep.mubr.f32.mxu0 0.0
        %v3030 = vand.u32 %v1910, 4294901760
        %v3031 = vsub.f32 %v1910, %v3030
        %v3032 = vand.u32 %v3031, 4294901760
        %3033 = vmatmul.mubr.f32.gmra.mrb[0].mxu0 %v3032
        %v3034 = vpop.f32.mrb[0].mxu0
        %v3035 = vadd.f32 %v2740, %v3034
        %v3036 = vpop.f32.mrb[0].mxu0
        %3037 = vmatprep.mubr.f32.mxu0 0.0
        %v3038 = vand.u32 %v1913, 4294901760
        %v3039 = vsub.f32 %v1913, %v3038
        %v3040 = vand.u32 %v3039, 4294901760
        %3041 = vmatmul.mubr.f32.gmra.mrb[0].mxu0 %v3040
        %v3042 = vpop.f32.mrb[0].mxu0
        %v3043 = vadd.f32 %v2747, %v3042
        %v3044 = vpop.f32.mrb[0].mxu0
        %3045 = vmatprep.mubr.f32.mxu0 0.0
        %v3046 = vand.u32 %v1916, 4294901760
        %v3047 = vsub.f32 %v1916, %v3046
        %v3048 = vand.u32 %v3047, 4294901760
        %3049 = vmatmul.mubr.f32.gmra.mrb[0].mxu0 %v3048
        %v3050 = vpop.f32.mrb[0].mxu0
        %v3051 = vadd.f32 %v2754, %v3050
        %v3052 = vpop.f32.mrb[0].mxu0
        %3053 = vmatprep.mubr.f32.mxu0 0.0
        %v3054 = vand.u32 %v1919, 4294901760
        %v3055 = vsub.f32 %v1919, %v3054
        %v3056 = vand.u32 %v3055, 4294901760
        %3057 = vmatmul.mubr.f32.gmra.mrb[0].mxu0 %v3056
        %v3058 = vpop.f32.mrb[0].mxu0
        %v3059 = vadd.f32 %v2761, %v3058
        %v3060 = vpop.f32.mrb[0].mxu0
        %3061 = vmatprep.mubr.f32.mxu0 0.0
        %v3062 = vand.u32 %v1922, 4294901760
        %v3063 = vsub.f32 %v1922, %v3062
        %v3064 = vand.u32 %v3063, 4294901760
        %3065 = vmatmul.mubr.f32.gmra.mrb[0].mxu0 %v3064
        %v3066 = vpop.f32.mrb[0].mxu0
        %v3067 = vadd.f32 %v2768, %v3066
        %v3068 = vpop.f32.mrb[0].mxu0
        %3069 = vmatprep.mubr.f32.mxu0 0.0
        %v3070 = vand.u32 %v1925, 4294901760
        %v3071 = vsub.f32 %v1925, %v3070
        %v3072 = vand.u32 %v3071, 4294901760
        %3073 = vmatmul.mubr.f32.gmra.mrb[0].mxu0 %v3072
        %v3074 = vpop.f32.mrb[0].mxu0
        %v3075 = vadd.f32 %v2775, %v3074
        %v3076 = vpop.f32.mrb[0].mxu0
        %3077 = vmatprep.mubr.f32.mxu0 0.0
        %v3078 = vand.u32 %v1928, 4294901760
        %v3079 = vsub.f32 %v1928, %v3078
        %v3080 = vand.u32 %v3079, 4294901760
        %3081 = vmatmul.mubr.f32.gmra.mrb[0].mxu0 %v3080
        %v3082 = vpop.f32.mrb[0].mxu0
        %v3083 = vadd.f32 %v2782, %v3082
        %v3084 = vpop.f32.mrb[0].mxu0
        %3085 = vmatprep.mubr.f32.mxu0 0.0
        %v3086 = vand.u32 %v1931, 4294901760
        %v3087 = vsub.f32 %v1931, %v3086
        %v3088 = vand.u32 %v3087, 4294901760
        %3089 = vmatmul.mubr.f32.gmra.mrb[0].mxu0 %v3088
        %v3090 = vpop.f32.mrb[0].mxu0
        %v3091 = vadd.f32 %v2789, %v3090
        %v3092 = vpop.f32.mrb[0].mxu0
        %3093 = vmatprep.mubr.f32.mxu0 0.0
        %v3094 = vand.u32 %v1934, 4294901760
        %v3095 = vsub.f32 %v1934, %v3094
        %v3096 = vand.u32 %v3095, 4294901760
        %3097 = vmatmul.mubr.f32.gmra.mrb[0].mxu0 %v3096
        %v3098 = vpop.f32.mrb[0].mxu0
        %v3099 = vadd.f32 %v2796, %v3098
        %v3100 = vpop.f32.mrb[0].mxu0
        %3101 = vmatprep.mubr.f32.mxu0 0.0
        %v3102 = vand.u32 %v1937, 4294901760
        %v3103 = vsub.f32 %v1937, %v3102
        %v3104 = vand.u32 %v3103, 4294901760
        %3105 = vmatmul.mubr.f32.gmra.mrb[0].mxu0 %v3104
        %v3106 = vpop.f32.mrb[0].mxu0
        %v3107 = vadd.f32 %v2803, %v3106
        %v3108 = vpop.f32.mrb[0].mxu0
        %3109 = vmatprep.mubr.f32.mxu0 0.0
        %v3110 = vand.u32 %v1940, 4294901760
        %v3111 = vsub.f32 %v1940, %v3110
        %v3112 = vand.u32 %v3111, 4294901760
        %3113 = vmatmul.mubr.f32.gmra.mrb[0].mxu0 %v3112
        %v3114 = vpop.f32.mrb[0].mxu0
        %v3115 = vadd.f32 %v2810, %v3114
        %v3116 = vpop.f32.mrb[0].mxu0
        %3117 = vmatprep.mubr.f32.mxu0 0.0
        %v3118 = vand.u32 %v1943, 4294901760
        %v3119 = vsub.f32 %v1943, %v3118
        %v3120 = vand.u32 %v3119, 4294901760
        %3121 = vmatmul.mubr.f32.gmra.mrb[0].mxu0 %v3120
        %v3122 = vpop.f32.mrb[0].mxu0
        %v3123 = vadd.f32 %v2817, %v3122
        %v3124 = vpop.f32.mrb[0].mxu0
        %3125 = vmatprep.mubr.f32.mxu0 0.0
        %v3126 = vand.u32 %v1946, 4294901760
        %v3127 = vsub.f32 %v1946, %v3126
        %v3128 = vand.u32 %v3127, 4294901760
        %3129 = vmatmul.mubr.f32.gmra.mrb[0].mxu0 %v3128
        %v3130 = vpop.f32.mrb[0].mxu0
        %v3131 = vadd.f32 %v2824, %v3130
        %v3132 = vpop.f32.mrb[0].mxu0
        %3133 = vmatprep.mubr.f32.mxu0 0.0
        %v3134 = vand.u32 %v1949, 4294901760
        %v3135 = vsub.f32 %v1949, %v3134
        %v3136 = vand.u32 %v3135, 4294901760
        %3137 = vmatmul.mubr.f32.gmra.mrb[0].mxu0 %v3136
        %v3138 = vpop.f32.mrb[0].mxu0
        %v3139 = vadd.f32 %v2831, %v3138
        %v3140 = vpop.f32.mrb[0].mxu0
        %3141 = vmatprep.mubr.f32.mxu0 0.0
        %v3142 = vand.u32 %v1952, 4294901760
        %v3143 = vsub.f32 %v1952, %v3142
        %v3144 = vand.u32 %v3143, 4294901760
        %3145 = vmatmul.mubr.f32.gmra.mrb[0].mxu0 %v3144
        %v3146 = vpop.f32.mrb[0].mxu0
        %v3147 = vadd.f32 %v2838, %v3146
        %v3148 = vpop.f32.mrb[0].mxu0
        %3149 = vmatprep.mubr.f32.mxu0 0.0
        %v3150 = vand.u32 %v1955, 4294901760
        %v3151 = vsub.f32 %v1955, %v3150
        %v3152 = vand.u32 %v3151, 4294901760
        %3153 = vmatmul.mubr.f32.gmra.mrb[0].mxu0 %v3152
        %v3154 = vpop.f32.mrb[0].mxu0
        %v3155 = vadd.f32 %v2845, %v3154
        %v3156 = vpop.f32.mrb[0].mxu0
        %3157 = vmatprep.mubr.f32.mxu0 0.0
        %v3158 = vand.u32 %v1958, 4294901760
        %v3159 = vsub.f32 %v1958, %v3158
        %v3160 = vand.u32 %v3159, 4294901760
        %3161 = vmatmul.mubr.f32.gmra.mrb[0].mxu0 %v3160
        %v3162 = vpop.f32.mrb[0].mxu0
        %v3163 = vadd.f32 %v2852, %v3162
        %v3164 = vpop.f32.mrb[0].mxu0
        %3165 = vmatprep.mubr.f32.mxu0 0.0
        %v3166 = vand.u32 %v1961, 4294901760
        %v3167 = vsub.f32 %v1961, %v3166
        %v3168 = vand.u32 %v3167, 4294901760
        %3169 = vmatmul.mubr.f32.gmra.mrb[0].mxu0 %v3168
        %v3170 = vpop.f32.mrb[0].mxu0
        %v3171 = vadd.f32 %v2859, %v3170
        %v3172 = vpop.f32.mrb[0].mxu0
        %3173 = vmatprep.mubr.f32.mxu0 0.0
        %v3174 = vand.u32 %v1964, 4294901760
        %v3175 = vsub.f32 %v1964, %v3174
        %v3176 = vand.u32 %v3175, 4294901760
        %3177 = vmatmul.mubr.f32.gmra.mrb[0].mxu0 %v3176
        %v3178 = vpop.f32.mrb[0].mxu0
        %v3179 = vadd.f32 %v2866, %v3178
        %v3180 = vpop.f32.mrb[0].mxu0
        %3181 = vmatprep.mubr.f32.mxu0 0.0
        %v3182 = vand.u32 %v1967, 4294901760
        %v3183 = vsub.f32 %v1967, %v3182
        %v3184 = vand.u32 %v3183, 4294901760
        %3185 = vmatmul.mubr.f32.gmra.mrb[0].mxu0 %v3184
        %v3186 = vpop.f32.mrb[0].mxu0
        %v3187 = vadd.f32 %v2873, %v3186
        %v3188 = vpop.f32.mrb[0].mxu0
        %3189 = vmatprep.mubr.f32.mxu0 0.0
        %v3190 = vand.u32 %v1970, 4294901760
        %v3191 = vsub.f32 %v1970, %v3190
        %v3192 = vand.u32 %v3191, 4294901760
        %3193 = vmatmul.mubr.f32.gmra.mrb[0].mxu0 %v3192
        %v3194 = vpop.f32.mrb[0].mxu0
        %v3195 = vadd.f32 %v2880, %v3194
        %v3196 = vpop.f32.mrb[0].mxu0
        %3197 = vmatprep.mubr.f32.mxu0 0.0
        %v3198 = vand.u32 %v1973, 4294901760
        %v3199 = vsub.f32 %v1973, %v3198
        %v3200 = vand.u32 %v3199, 4294901760
        %3201 = vmatmul.mubr.f32.gmra.mrb[0].mxu0 %v3200
        %v3202 = vpop.f32.mrb[0].mxu0
        %v3203 = vadd.f32 %v2887, %v3202
        %v3204 = vpop.f32.mrb[0].mxu0
        %3205 = vmatprep.mubr.f32.mxu0 0.0
        %v3206 = vand.u32 %v1976, 4294901760
        %v3207 = vsub.f32 %v1976, %v3206
        %v3208 = vand.u32 %v3207, 4294901760
        %3209 = vmatmul.mubr.f32.gmra.mrb[0].mxu0 %v3208
        %v3210 = vpop.f32.mrb[0].mxu0
        %v3211 = vadd.f32 %v2894, %v3210
        %v3212 = vpop.f32.mrb[0].mxu0
        %3213 = vmatprep.mubr.f32.mxu0 0.0
        %v3214 = vand.u32 %v1979, 4294901760
        %v3215 = vsub.f32 %v1979, %v3214
        %v3216 = vand.u32 %v3215, 4294901760
        %3217 = vmatmul.mubr.f32.gmra.mrb[0].mxu0 %v3216
        %v3218 = vpop.f32.mrb[0].mxu0
        %v3219 = vadd.f32 %v2901, %v3218
        %v3220 = vpop.f32.mrb[0].mxu0
        %3221 = vmatprep.mubr.f32.mxu0 0.0
        %v3222 = vand.u32 %v1982, 4294901760
        %v3223 = vsub.f32 %v1982, %v3222
        %v3224 = vand.u32 %v3223, 4294901760
        %3225 = vmatmul.mubr.f32.gmra.mrb[0].mxu0 %v3224
        %v3226 = vpop.f32.mrb[0].mxu0
        %v3227 = vadd.f32 %v2908, %v3226
        %v3228 = vpop.f32.mrb[0].mxu0
        %3229 = vmatprep.mubr.f32.mxu0 0.0
        %v3230 = vand.u32 %v1985, 4294901760
        %v3231 = vsub.f32 %v1985, %v3230
        %v3232 = vand.u32 %v3231, 4294901760
        %3233 = vmatmul.mubr.f32.gmra.mrb[0].mxu0 %v3232
        %v3234 = vpop.f32.mrb[0].mxu0
        %v3235 = vadd.f32 %v2915, %v3234
        %v3236 = vpop.f32.mrb[0].mxu0
        %3237 = vmatprep.mubr.f32.mxu0 0.0
        %v3238 = vand.u32 %v1988, 4294901760
        %v3239 = vsub.f32 %v1988, %v3238
        %v3240 = vand.u32 %v3239, 4294901760
        %3241 = vmatmul.mubr.f32.gmra.mrb[0].mxu0 %v3240
        %v3242 = vpop.f32.mrb[0].mxu0
        %v3243 = vadd.f32 %v2922, %v3242
        %v3244 = vpop.f32.mrb[0].mxu0
        %3245 = vmatprep.mubr.f32.mxu0 0.0
        %v3246 = vand.u32 %v1991, 4294901760
        %v3247 = vsub.f32 %v1991, %v3246
        %v3248 = vand.u32 %v3247, 4294901760
        %3249 = vmatmul.mubr.f32.gmra.mrb[0].mxu0 %v3248
        %v3250 = vpop.f32.mrb[0].mxu0
        %v3251 = vadd.f32 %v2929, %v3250
        %v3252 = vpop.f32.mrb[0].mxu0
        %3253 = vdwg.mxu0
        %3254 = vmatprep.subr.mxu0 0.0
        %v3255 = vand.u32 %v1895, 4294901760
        %v3256 = vsub.f32 %v1895, %v3255
        %v3257 = vand.u32 %v3256, 4294901760
        %3258 = vmatpush1.msra.mxu0 %v3257
        %3259 = vmatprep.subr.mxu0 0.0
        %3260 = vmatpush1.msra.mxu0 0.0
        %3261 = vmatprep.subr.mxu0 0.0
        %3262 = vmatpush1.msra.mxu0 0.0
        %3263 = vmatprep.subr.mxu0 0.0
        %3264 = vmatpush1.msra.mxu0 0.0
        %3265 = vmatprep.subr.mxu0 0.0
        %3266 = vmatpush1.msra.mxu0 0.0
        %3267 = vmatprep.subr.mxu0 0.0
        %3268 = vmatpush1.msra.mxu0 0.0
        %3269 = vmatprep.subr.mxu0 0.0
        %3270 = vmatpush1.msra.mxu0 0.0
        %3271 = vmatprep.subr.mxu0 0.0
        %3272 = vmatpush1.msra.mxu0 0.0
        %3273 = vmatprep.subr.mxu0 0.0
        %3274 = vmatpush1.msra.mxu0 0.0
        %3275 = vmatprep.subr.mxu0 0.0
        %3276 = vmatpush1.msra.mxu0 0.0
        %3277 = vmatprep.subr.mxu0 0.0
        %3278 = vmatpush1.msra.mxu0 0.0
        %3279 = vmatprep.subr.mxu0 0.0
        %3280 = vmatpush1.msra.mxu0 0.0
        %3281 = vmatprep.subr.mxu0 0.0
        %3282 = vmatpush1.msra.mxu0 0.0
        %3283 = vmatprep.subr.mxu0 0.0
        %3284 = vmatpush1.msra.mxu0 0.0
        %3285 = vmatprep.subr.mxu0 0.0
        %3286 = vmatpush1.msra.mxu0 0.0
        %3287 = vmatprep.subr.mxu0 0.0
        %3288 = vmatpush1.msra.mxu0 0.0
        %3289 = vmatprep.subr.mxu0 0.0
        %3290 = vmatpush1.msra.mxu0 0.0
        %3291 = vmatprep.subr.mxu0 0.0
        %3292 = vmatpush1.msra.mxu0 0.0
        %3293 = vmatprep.subr.mxu0 0.0
        %3294 = vmatpush1.msra.mxu0 0.0
        %3295 = vmatprep.subr.mxu0 0.0
        %3296 = vmatpush1.msra.mxu0 0.0
        %3297 = vmatprep.subr.mxu0 0.0
        %3298 = vmatpush1.msra.mxu0 0.0
        %3299 = vmatprep.subr.mxu0 0.0
        %3300 = vmatpush1.msra.mxu0 0.0
        %3301 = vmatprep.subr.mxu0 0.0
        %3302 = vmatpush1.msra.mxu0 0.0
        %3303 = vmatprep.subr.mxu0 0.0
        %3304 = vmatpush1.msra.mxu0 0.0
        %3305 = vmatprep.subr.mxu0 0.0
        %3306 = vmatpush1.msra.mxu0 0.0
        %3307 = vmatprep.subr.mxu0 0.0
        %3308 = vmatpush1.msra.mxu0 0.0
        %3309 = vmatprep.subr.mxu0 0.0
        %3310 = vmatpush1.msra.mxu0 0.0
        %3311 = vmatprep.subr.mxu0 0.0
        %3312 = vmatpush1.msra.mxu0 0.0
        %3313 = vmatprep.subr.mxu0 0.0
        %3314 = vmatpush1.msra.mxu0 0.0
        %3315 = vmatprep.subr.mxu0 0.0
        %3316 = vmatpush1.msra.mxu0 0.0
        %3317 = vmatprep.subr.mxu0 0.0
        %3318 = vmatpush1.msra.mxu0 0.0
        %3319 = vmatprep.subr.mxu0 0.0
        %3320 = vmatpush1.msra.mxu0 0.0
        %3321 = vmatprep.mubr.f32.mxu0 0.0
        %v3322 = vand.u32 %v1898, 4294901760
        %3323 = vmatmul.mubr.f32.gmra.mrb[0].mxu0 %v3322
        %v3324 = vpop.f32.mrb[0].mxu0
        %v3325 = vadd.f32 %v3003, %v3324
        %v3326 = vpop.f32.mrb[0].mxu0
        %3327 = vmatprep.mubr.f32.mxu0 0.0
        %v3328 = vand.u32 %v1901, 4294901760
        %3329 = vmatmul.mubr.f32.gmra.mrb[0].mxu0 %v3328
        %v3330 = vpop.f32.mrb[0].mxu0
        %v3331 = vadd.f32 %v3011, %v3330
        %v3332 = vpop.f32.mrb[0].mxu0
        %3333 = vmatprep.mubr.f32.mxu0 0.0
        %v3334 = vand.u32 %v1904, 4294901760
        %3335 = vmatmul.mubr.f32.gmra.mrb[0].mxu0 %v3334
        %v3336 = vpop.f32.mrb[0].mxu0
        %v3337 = vadd.f32 %v3019, %v3336
        %v3338 = vpop.f32.mrb[0].mxu0
        %3339 = vmatprep.mubr.f32.mxu0 0.0
        %v3340 = vand.u32 %v1907, 4294901760
        %3341 = vmatmul.mubr.f32.gmra.mrb[0].mxu0 %v3340
        %v3342 = vpop.f32.mrb[0].mxu0
        %v3343 = vadd.f32 %v3027, %v3342
        %v3344 = vpop.f32.mrb[0].mxu0
        %3345 = vmatprep.mubr.f32.mxu0 0.0
        %v3346 = vand.u32 %v1910, 4294901760
        %3347 = vmatmul.mubr.f32.gmra.mrb[0].mxu0 %v3346
        %v3348 = vpop.f32.mrb[0].mxu0
        %v3349 = vadd.f32 %v3035, %v3348
        %v3350 = vpop.f32.mrb[0].mxu0
        %3351 = vmatprep.mubr.f32.mxu0 0.0
        %v3352 = vand.u32 %v1913, 4294901760
        %3353 = vmatmul.mubr.f32.gmra.mrb[0].mxu0 %v3352
        %v3354 = vpop.f32.mrb[0].mxu0
        %v3355 = vadd.f32 %v3043, %v3354
        %v3356 = vpop.f32.mrb[0].mxu0
        %3357 = vmatprep.mubr.f32.mxu0 0.0
        %v3358 = vand.u32 %v1916, 4294901760
        %3359 = vmatmul.mubr.f32.gmra.mrb[0].mxu0 %v3358
        %v3360 = vpop.f32.mrb[0].mxu0
        %v3361 = vadd.f32 %v3051, %v3360
        %v3362 = vpop.f32.mrb[0].mxu0
        %3363 = vmatprep.mubr.f32.mxu0 0.0
        %v3364 = vand.u32 %v1919, 4294901760
        %3365 = vmatmul.mubr.f32.gmra.mrb[0].mxu0 %v3364
        %v3366 = vpop.f32.mrb[0].mxu0
        %v3367 = vadd.f32 %v3059, %v3366
        %v3368 = vpop.f32.mrb[0].mxu0
        %3369 = vmatprep.mubr.f32.mxu0 0.0
        %v3370 = vand.u32 %v1922, 4294901760
        %3371 = vmatmul.mubr.f32.gmra.mrb[0].mxu0 %v3370
        %v3372 = vpop.f32.mrb[0].mxu0
        %v3373 = vadd.f32 %v3067, %v3372
        %v3374 = vpop.f32.mrb[0].mxu0
        %3375 = vmatprep.mubr.f32.mxu0 0.0
        %v3376 = vand.u32 %v1925, 4294901760
        %3377 = vmatmul.mubr.f32.gmra.mrb[0].mxu0 %v3376
        %v3378 = vpop.f32.mrb[0].mxu0
        %v3379 = vadd.f32 %v3075, %v3378
        %v3380 = vpop.f32.mrb[0].mxu0
        %3381 = vmatprep.mubr.f32.mxu0 0.0
        %v3382 = vand.u32 %v1928, 4294901760
        %3383 = vmatmul.mubr.f32.gmra.mrb[0].mxu0 %v3382
        %v3384 = vpop.f32.mrb[0].mxu0
        %v3385 = vadd.f32 %v3083, %v3384
        %v3386 = vpop.f32.mrb[0].mxu0
        %3387 = vmatprep.mubr.f32.mxu0 0.0
        %v3388 = vand.u32 %v1931, 4294901760
        %3389 = vmatmul.mubr.f32.gmra.mrb[0].mxu0 %v3388
        %v3390 = vpop.f32.mrb[0].mxu0
        %v3391 = vadd.f32 %v3091, %v3390
        %v3392 = vpop.f32.mrb[0].mxu0
        %3393 = vmatprep.mubr.f32.mxu0 0.0
        %v3394 = vand.u32 %v1934, 4294901760
        %3395 = vmatmul.mubr.f32.gmra.mrb[0].mxu0 %v3394
        %v3396 = vpop.f32.mrb[0].mxu0
        %v3397 = vadd.f32 %v3099, %v3396
        %v3398 = vpop.f32.mrb[0].mxu0
        %3399 = vmatprep.mubr.f32.mxu0 0.0
        %v3400 = vand.u32 %v1937, 4294901760
        %3401 = vmatmul.mubr.f32.gmra.mrb[0].mxu0 %v3400
        %v3402 = vpop.f32.mrb[0].mxu0
        %v3403 = vadd.f32 %v3107, %v3402
        %v3404 = vpop.f32.mrb[0].mxu0
        %3405 = vmatprep.mubr.f32.mxu0 0.0
        %v3406 = vand.u32 %v1940, 4294901760
        %3407 = vmatmul.mubr.f32.gmra.mrb[0].mxu0 %v3406
        %v3408 = vpop.f32.mrb[0].mxu0
        %v3409 = vadd.f32 %v3115, %v3408
        %v3410 = vpop.f32.mrb[0].mxu0
        %3411 = vmatprep.mubr.f32.mxu0 0.0
        %v3412 = vand.u32 %v1943, 4294901760
        %3413 = vmatmul.mubr.f32.gmra.mrb[0].mxu0 %v3412
        %v3414 = vpop.f32.mrb[0].mxu0
        %v3415 = vadd.f32 %v3123, %v3414
        %v3416 = vpop.f32.mrb[0].mxu0
        %3417 = vmatprep.mubr.f32.mxu0 0.0
        %v3418 = vand.u32 %v1946, 4294901760
        %3419 = vmatmul.mubr.f32.gmra.mrb[0].mxu0 %v3418
        %v3420 = vpop.f32.mrb[0].mxu0
        %v3421 = vadd.f32 %v3131, %v3420
        %v3422 = vpop.f32.mrb[0].mxu0
        %3423 = vmatprep.mubr.f32.mxu0 0.0
        %v3424 = vand.u32 %v1949, 4294901760
        %3425 = vmatmul.mubr.f32.gmra.mrb[0].mxu0 %v3424
        %v3426 = vpop.f32.mrb[0].mxu0
        %v3427 = vadd.f32 %v3139, %v3426
        %v3428 = vpop.f32.mrb[0].mxu0
        %3429 = vmatprep.mubr.f32.mxu0 0.0
        %v3430 = vand.u32 %v1952, 4294901760
        %3431 = vmatmul.mubr.f32.gmra.mrb[0].mxu0 %v3430
        %v3432 = vpop.f32.mrb[0].mxu0
        %v3433 = vadd.f32 %v3147, %v3432
        %v3434 = vpop.f32.mrb[0].mxu0
        %3435 = vmatprep.mubr.f32.mxu0 0.0
        %v3436 = vand.u32 %v1955, 4294901760
        %3437 = vmatmul.mubr.f32.gmra.mrb[0].mxu0 %v3436
        %v3438 = vpop.f32.mrb[0].mxu0
        %v3439 = vadd.f32 %v3155, %v3438
        %v3440 = vpop.f32.mrb[0].mxu0
        %3441 = vmatprep.mubr.f32.mxu0 0.0
        %v3442 = vand.u32 %v1958, 4294901760
        %3443 = vmatmul.mubr.f32.gmra.mrb[0].mxu0 %v3442
        %v3444 = vpop.f32.mrb[0].mxu0
        %v3445 = vadd.f32 %v3163, %v3444
        %v3446 = vpop.f32.mrb[0].mxu0
        %3447 = vmatprep.mubr.f32.mxu0 0.0
        %v3448 = vand.u32 %v1961, 4294901760
        %3449 = vmatmul.mubr.f32.gmra.mrb[0].mxu0 %v3448
        %v3450 = vpop.f32.mrb[0].mxu0
        %v3451 = vadd.f32 %v3171, %v3450
        %v3452 = vpop.f32.mrb[0].mxu0
        %3453 = vmatprep.mubr.f32.mxu0 0.0
        %v3454 = vand.u32 %v1964, 4294901760
        %3455 = vmatmul.mubr.f32.gmra.mrb[0].mxu0 %v3454
        %v3456 = vpop.f32.mrb[0].mxu0
        %v3457 = vadd.f32 %v3179, %v3456
        %v3458 = vpop.f32.mrb[0].mxu0
        %3459 = vmatprep.mubr.f32.mxu0 0.0
        %v3460 = vand.u32 %v1967, 4294901760
        %3461 = vmatmul.mubr.f32.gmra.mrb[0].mxu0 %v3460
        %v3462 = vpop.f32.mrb[0].mxu0
        %v3463 = vadd.f32 %v3187, %v3462
        %v3464 = vpop.f32.mrb[0].mxu0
        %3465 = vmatprep.mubr.f32.mxu0 0.0
        %v3466 = vand.u32 %v1970, 4294901760
        %3467 = vmatmul.mubr.f32.gmra.mrb[0].mxu0 %v3466
        %v3468 = vpop.f32.mrb[0].mxu0
        %v3469 = vadd.f32 %v3195, %v3468
        %v3470 = vpop.f32.mrb[0].mxu0
        %3471 = vmatprep.mubr.f32.mxu0 0.0
        %v3472 = vand.u32 %v1973, 4294901760
        %3473 = vmatmul.mubr.f32.gmra.mrb[0].mxu0 %v3472
        %v3474 = vpop.f32.mrb[0].mxu0
        %v3475 = vadd.f32 %v3203, %v3474
        %v3476 = vpop.f32.mrb[0].mxu0
        %3477 = vmatprep.mubr.f32.mxu0 0.0
        %v3478 = vand.u32 %v1976, 4294901760
        %3479 = vmatmul.mubr.f32.gmra.mrb[0].mxu0 %v3478
        %v3480 = vpop.f32.mrb[0].mxu0
        %v3481 = vadd.f32 %v3211, %v3480
        %v3482 = vpop.f32.mrb[0].mxu0
        %3483 = vmatprep.mubr.f32.mxu0 0.0
        %v3484 = vand.u32 %v1979, 4294901760
        %3485 = vmatmul.mubr.f32.gmra.mrb[0].mxu0 %v3484
        %v3486 = vpop.f32.mrb[0].mxu0
        %v3487 = vadd.f32 %v3219, %v3486
        %v3488 = vpop.f32.mrb[0].mxu0
        %3489 = vmatprep.mubr.f32.mxu0 0.0
        %v3490 = vand.u32 %v1982, 4294901760
        %3491 = vmatmul.mubr.f32.gmra.mrb[0].mxu0 %v3490
        %v3492 = vpop.f32.mrb[0].mxu0
        %v3493 = vadd.f32 %v3227, %v3492
        %v3494 = vpop.f32.mrb[0].mxu0
        %3495 = vmatprep.mubr.f32.mxu0 0.0
        %v3496 = vand.u32 %v1985, 4294901760
        %3497 = vmatmul.mubr.f32.gmra.mrb[0].mxu0 %v3496
        %v3498 = vpop.f32.mrb[0].mxu0
        %v3499 = vadd.f32 %v3235, %v3498
        %v3500 = vpop.f32.mrb[0].mxu0
        %3501 = vmatprep.mubr.f32.mxu0 0.0
        %v3502 = vand.u32 %v1988, 4294901760
        %3503 = vmatmul.mubr.f32.gmra.mrb[0].mxu0 %v3502
        %v3504 = vpop.f32.mrb[0].mxu0
        %v3505 = vadd.f32 %v3243, %v3504
        %v3506 = vpop.f32.mrb[0].mxu0
        %3507 = vmatprep.mubr.f32.mxu0 0.0
        %v3508 = vand.u32 %v1991, 4294901760
        %3509 = vmatmul.mubr.f32.gmra.mrb[0].mxu0 %v3508
        %v3510 = vpop.f32.mrb[0].mxu0
        %v3511 = vadd.f32 %v3251, %v3510
        %v3512 = vpop.f32.mrb[0].mxu0
        %3513 = vdwg.mxu0
        %3514 = vmatprep.subr.mxu0 0.0
        %v3515 = vand.u32 %v1895, 4294901760
        %3516 = vmatpush1.msra.mxu0 %v3515
        %3517 = vmatprep.subr.mxu0 0.0
        %3518 = vmatpush1.msra.mxu0 0.0
        %3519 = vmatprep.subr.mxu0 0.0
        %3520 = vmatpush1.msra.mxu0 0.0
        %3521 = vmatprep.subr.mxu0 0.0
        %3522 = vmatpush1.msra.mxu0 0.0
        %3523 = vmatprep.subr.mxu0 0.0
        %3524 = vmatpush1.msra.mxu0 0.0
        %3525 = vmatprep.subr.mxu0 0.0
        %3526 = vmatpush1.msra.mxu0 0.0
        %3527 = vmatprep.subr.mxu0 0.0
        %3528 = vmatpush1.msra.mxu0 0.0
        %3529 = vmatprep.subr.mxu0 0.0
        %3530 = vmatpush1.msra.mxu0 0.0
        %3531 = vmatprep.subr.mxu0 0.0
        %3532 = vmatpush1.msra.mxu0 0.0
        %3533 = vmatprep.subr.mxu0 0.0
        %3534 = vmatpush1.msra.mxu0 0.0
        %3535 = vmatprep.subr.mxu0 0.0
        %3536 = vmatpush1.msra.mxu0 0.0
        %3537 = vmatprep.subr.mxu0 0.0
        %3538 = vmatpush1.msra.mxu0 0.0
        %3539 = vmatprep.subr.mxu0 0.0
        %3540 = vmatpush1.msra.mxu0 0.0
        %3541 = vmatprep.subr.mxu0 0.0
        %3542 = vmatpush1.msra.mxu0 0.0
        %3543 = vmatprep.subr.mxu0 0.0
        %3544 = vmatpush1.msra.mxu0 0.0
        %3545 = vmatprep.subr.mxu0 0.0
        %3546 = vmatpush1.msra.mxu0 0.0
        %3547 = vmatprep.subr.mxu0 0.0
        %3548 = vmatpush1.msra.mxu0 0.0
        %3549 = vmatprep.subr.mxu0 0.0
        %3550 = vmatpush1.msra.mxu0 0.0
        %3551 = vmatprep.subr.mxu0 0.0
        %3552 = vmatpush1.msra.mxu0 0.0
        %3553 = vmatprep.subr.mxu0 0.0
        %3554 = vmatpush1.msra.mxu0 0.0
        %3555 = vmatprep.subr.mxu0 0.0
        %3556 = vmatpush1.msra.mxu0 0.0
        %3557 = vmatprep.subr.mxu0 0.0
        %3558 = vmatpush1.msra.mxu0 0.0
        %3559 = vmatprep.subr.mxu0 0.0
        %3560 = vmatpush1.msra.mxu0 0.0
        %3561 = vmatprep.subr.mxu0 0.0
        %3562 = vmatpush1.msra.mxu0 0.0
        %3563 = vmatprep.subr.mxu0 0.0
        %3564 = vmatpush1.msra.mxu0 0.0
        %3565 = vmatprep.subr.mxu0 0.0
        %3566 = vmatpush1.msra.mxu0 0.0
        %3567 = vmatprep.subr.mxu0 0.0
        %3568 = vmatpush1.msra.mxu0 0.0
        %3569 = vmatprep.subr.mxu0 0.0
        %3570 = vmatpush1.msra.mxu0 0.0
        %3571 = vmatprep.subr.mxu0 0.0
        %3572 = vmatpush1.msra.mxu0 0.0
        %3573 = vmatprep.subr.mxu0 0.0
        %3574 = vmatpush1.msra.mxu0 0.0
        %3575 = vmatprep.subr.mxu0 0.0
        %3576 = vmatpush1.msra.mxu0 0.0
        %3577 = vmatprep.subr.mxu0 0.0
        %3578 = vmatpush1.msra.mxu0 0.0
        %3579 = vmatprep.mubr.f32.mxu0 0.0
        %v3580 = vand.u32 %v1898, 4294901760
        %3581 = vmatmul.mubr.f32.gmra.mrb[0].mxu0 %v3580
        %v3582 = vpop.f32.mrb[0].mxu0
        %v3583 = vadd.f32 %v3325, %v3582
        %v3584 = vpop.f32.mrb[0].mxu0
        %3585 = vmatprep.mubr.f32.mxu0 0.0
        %v3586 = vand.u32 %v1901, 4294901760
        %3587 = vmatmul.mubr.f32.gmra.mrb[0].mxu0 %v3586
        %v3588 = vpop.f32.mrb[0].mxu0
        %v3589 = vadd.f32 %v3331, %v3588
        %v3590 = vpop.f32.mrb[0].mxu0
        %3591 = vmatprep.mubr.f32.mxu0 0.0
        %v3592 = vand.u32 %v1904, 4294901760
        %3593 = vmatmul.mubr.f32.gmra.mrb[0].mxu0 %v3592
        %v3594 = vpop.f32.mrb[0].mxu0
        %v3595 = vadd.f32 %v3337, %v3594
        %v3596 = vpop.f32.mrb[0].mxu0
        %3597 = vmatprep.mubr.f32.mxu0 0.0
        %v3598 = vand.u32 %v1907, 4294901760
        %3599 = vmatmul.mubr.f32.gmra.mrb[0].mxu0 %v3598
        %v3600 = vpop.f32.mrb[0].mxu0
        %v3601 = vadd.f32 %v3343, %v3600
        %v3602 = vpop.f32.mrb[0].mxu0
        %3603 = vmatprep.mubr.f32.mxu0 0.0
        %v3604 = vand.u32 %v1910, 4294901760
        %3605 = vmatmul.mubr.f32.gmra.mrb[0].mxu0 %v3604
        %v3606 = vpop.f32.mrb[0].mxu0
        %v3607 = vadd.f32 %v3349, %v3606
        %v3608 = vpop.f32.mrb[0].mxu0
        %3609 = vmatprep.mubr.f32.mxu0 0.0
        %v3610 = vand.u32 %v1913, 4294901760
        %3611 = vmatmul.mubr.f32.gmra.mrb[0].mxu0 %v3610
        %v3612 = vpop.f32.mrb[0].mxu0
        %v3613 = vadd.f32 %v3355, %v3612
        %v3614 = vpop.f32.mrb[0].mxu0
        %3615 = vmatprep.mubr.f32.mxu0 0.0
        %v3616 = vand.u32 %v1916, 4294901760
        %3617 = vmatmul.mubr.f32.gmra.mrb[0].mxu0 %v3616
        %v3618 = vpop.f32.mrb[0].mxu0
        %v3619 = vadd.f32 %v3361, %v3618
        %v3620 = vpop.f32.mrb[0].mxu0
        %3621 = vmatprep.mubr.f32.mxu0 0.0
        %v3622 = vand.u32 %v1919, 4294901760
        %3623 = vmatmul.mubr.f32.gmra.mrb[0].mxu0 %v3622
        %v3624 = vpop.f32.mrb[0].mxu0
        %v3625 = vadd.f32 %v3367, %v3624
        %v3626 = vpop.f32.mrb[0].mxu0
        %3627 = vmatprep.mubr.f32.mxu0 0.0
        %v3628 = vand.u32 %v1922, 4294901760
        %3629 = vmatmul.mubr.f32.gmra.mrb[0].mxu0 %v3628
        %v3630 = vpop.f32.mrb[0].mxu0
        %v3631 = vadd.f32 %v3373, %v3630
        %v3632 = vpop.f32.mrb[0].mxu0
        %3633 = vmatprep.mubr.f32.mxu0 0.0
        %v3634 = vand.u32 %v1925, 4294901760
        %3635 = vmatmul.mubr.f32.gmra.mrb[0].mxu0 %v3634
        %v3636 = vpop.f32.mrb[0].mxu0
        %v3637 = vadd.f32 %v3379, %v3636
        %v3638 = vpop.f32.mrb[0].mxu0
        %3639 = vmatprep.mubr.f32.mxu0 0.0
        %v3640 = vand.u32 %v1928, 4294901760
        %3641 = vmatmul.mubr.f32.gmra.mrb[0].mxu0 %v3640
        %v3642 = vpop.f32.mrb[0].mxu0
        %v3643 = vadd.f32 %v3385, %v3642
        %v3644 = vpop.f32.mrb[0].mxu0
        %3645 = vmatprep.mubr.f32.mxu0 0.0
        %v3646 = vand.u32 %v1931, 4294901760
        %3647 = vmatmul.mubr.f32.gmra.mrb[0].mxu0 %v3646
        %v3648 = vpop.f32.mrb[0].mxu0
        %v3649 = vadd.f32 %v3391, %v3648
        %v3650 = vpop.f32.mrb[0].mxu0
        %3651 = vmatprep.mubr.f32.mxu0 0.0
        %v3652 = vand.u32 %v1934, 4294901760
        %3653 = vmatmul.mubr.f32.gmra.mrb[0].mxu0 %v3652
        %v3654 = vpop.f32.mrb[0].mxu0
        %v3655 = vadd.f32 %v3397, %v3654
        %v3656 = vpop.f32.mrb[0].mxu0
        %3657 = vmatprep.mubr.f32.mxu0 0.0
        %v3658 = vand.u32 %v1937, 4294901760
        %3659 = vmatmul.mubr.f32.gmra.mrb[0].mxu0 %v3658
        %v3660 = vpop.f32.mrb[0].mxu0
        %v3661 = vadd.f32 %v3403, %v3660
        %v3662 = vpop.f32.mrb[0].mxu0
        %3663 = vmatprep.mubr.f32.mxu0 0.0
        %v3664 = vand.u32 %v1940, 4294901760
        %3665 = vmatmul.mubr.f32.gmra.mrb[0].mxu0 %v3664
        %v3666 = vpop.f32.mrb[0].mxu0
        %v3667 = vadd.f32 %v3409, %v3666
        %v3668 = vpop.f32.mrb[0].mxu0
        %3669 = vmatprep.mubr.f32.mxu0 0.0
        %v3670 = vand.u32 %v1943, 4294901760
        %3671 = vmatmul.mubr.f32.gmra.mrb[0].mxu0 %v3670
        %v3672 = vpop.f32.mrb[0].mxu0
        %v3673 = vadd.f32 %v3415, %v3672
        %v3674 = vpop.f32.mrb[0].mxu0
        %3675 = vmatprep.mubr.f32.mxu0 0.0
        %v3676 = vand.u32 %v1946, 4294901760
        %3677 = vmatmul.mubr.f32.gmra.mrb[0].mxu0 %v3676
        %v3678 = vpop.f32.mrb[0].mxu0
        %v3679 = vadd.f32 %v3421, %v3678
        %v3680 = vpop.f32.mrb[0].mxu0
        %3681 = vmatprep.mubr.f32.mxu0 0.0
        %v3682 = vand.u32 %v1949, 4294901760
        %3683 = vmatmul.mubr.f32.gmra.mrb[0].mxu0 %v3682
        %v3684 = vpop.f32.mrb[0].mxu0
        %v3685 = vadd.f32 %v3427, %v3684
        %v3686 = vpop.f32.mrb[0].mxu0
        %3687 = vmatprep.mubr.f32.mxu0 0.0
        %v3688 = vand.u32 %v1952, 4294901760
        %3689 = vmatmul.mubr.f32.gmra.mrb[0].mxu0 %v3688
        %v3690 = vpop.f32.mrb[0].mxu0
        %v3691 = vadd.f32 %v3433, %v3690
        %v3692 = vpop.f32.mrb[0].mxu0
        %3693 = vmatprep.mubr.f32.mxu0 0.0
        %v3694 = vand.u32 %v1955, 4294901760
        %3695 = vmatmul.mubr.f32.gmra.mrb[0].mxu0 %v3694
        %v3696 = vpop.f32.mrb[0].mxu0
        %v3697 = vadd.f32 %v3439, %v3696
        %v3698 = vpop.f32.mrb[0].mxu0
        %3699 = vmatprep.mubr.f32.mxu0 0.0
        %v3700 = vand.u32 %v1958, 4294901760
        %3701 = vmatmul.mubr.f32.gmra.mrb[0].mxu0 %v3700
        %v3702 = vpop.f32.mrb[0].mxu0
        %v3703 = vadd.f32 %v3445, %v3702
        %v3704 = vpop.f32.mrb[0].mxu0
        %3705 = vmatprep.mubr.f32.mxu0 0.0
        %v3706 = vand.u32 %v1961, 4294901760
        %3707 = vmatmul.mubr.f32.gmra.mrb[0].mxu0 %v3706
        %v3708 = vpop.f32.mrb[0].mxu0
        %v3709 = vadd.f32 %v3451, %v3708
        %v3710 = vpop.f32.mrb[0].mxu0
        %3711 = vmatprep.mubr.f32.mxu0 0.0
        %v3712 = vand.u32 %v1964, 4294901760
        %3713 = vmatmul.mubr.f32.gmra.mrb[0].mxu0 %v3712
        %v3714 = vpop.f32.mrb[0].mxu0
        %v3715 = vadd.f32 %v3457, %v3714
        %v3716 = vpop.f32.mrb[0].mxu0
        %3717 = vmatprep.mubr.f32.mxu0 0.0
        %v3718 = vand.u32 %v1967, 4294901760
        %3719 = vmatmul.mubr.f32.gmra.mrb[0].mxu0 %v3718
        %v3720 = vpop.f32.mrb[0].mxu0
        %v3721 = vadd.f32 %v3463, %v3720
        %v3722 = vpop.f32.mrb[0].mxu0
        %3723 = vmatprep.mubr.f32.mxu0 0.0
        %v3724 = vand.u32 %v1970, 4294901760
        %3725 = vmatmul.mubr.f32.gmra.mrb[0].mxu0 %v3724
        %v3726 = vpop.f32.mrb[0].mxu0
        %v3727 = vadd.f32 %v3469, %v3726
        %v3728 = vpop.f32.mrb[0].mxu0
        %3729 = vmatprep.mubr.f32.mxu0 0.0
        %v3730 = vand.u32 %v1973, 4294901760
        %3731 = vmatmul.mubr.f32.gmra.mrb[0].mxu0 %v3730
        %v3732 = vpop.f32.mrb[0].mxu0
        %v3733 = vadd.f32 %v3475, %v3732
        %v3734 = vpop.f32.mrb[0].mxu0
        %3735 = vmatprep.mubr.f32.mxu0 0.0
        %v3736 = vand.u32 %v1976, 4294901760
        %3737 = vmatmul.mubr.f32.gmra.mrb[0].mxu0 %v3736
        %v3738 = vpop.f32.mrb[0].mxu0
        %v3739 = vadd.f32 %v3481, %v3738
        %v3740 = vpop.f32.mrb[0].mxu0
        %3741 = vmatprep.mubr.f32.mxu0 0.0
        %v3742 = vand.u32 %v1979, 4294901760
        %3743 = vmatmul.mubr.f32.gmra.mrb[0].mxu0 %v3742
        %v3744 = vpop.f32.mrb[0].mxu0
        %v3745 = vadd.f32 %v3487, %v3744
        %v3746 = vpop.f32.mrb[0].mxu0
        %3747 = vmatprep.mubr.f32.mxu0 0.0
        %v3748 = vand.u32 %v1982, 4294901760
        %3749 = vmatmul.mubr.f32.gmra.mrb[0].mxu0 %v3748
        %v3750 = vpop.f32.mrb[0].mxu0
        %v3751 = vadd.f32 %v3493, %v3750
        %v3752 = vpop.f32.mrb[0].mxu0
        %3753 = vmatprep.mubr.f32.mxu0 0.0
        %v3754 = vand.u32 %v1985, 4294901760
        %3755 = vmatmul.mubr.f32.gmra.mrb[0].mxu0 %v3754
        %v3756 = vpop.f32.mrb[0].mxu0
        %v3757 = vadd.f32 %v3499, %v3756
        %v3758 = vpop.f32.mrb[0].mxu0
        %3759 = vmatprep.mubr.f32.mxu0 0.0
        %v3760 = vand.u32 %v1988, 4294901760
        %3761 = vmatmul.mubr.f32.gmra.mrb[0].mxu0 %v3760
        %v3762 = vpop.f32.mrb[0].mxu0
        %v3763 = vadd.f32 %v3505, %v3762
        %v3764 = vpop.f32.mrb[0].mxu0
        %3765 = vmatprep.mubr.f32.mxu0 0.0
        %v3766 = vand.u32 %v1991, 4294901760
        %3767 = vmatmul.mubr.f32.gmra.mrb[0].mxu0 %v3766
        %v3768 = vpop.f32.mrb[0].mxu0
        %v3769 = vadd.f32 %v3511, %v3768
        %v3770 = vpop.f32.mrb[0].mxu0
        %3771 = vdwg.mxu0
        %vm3772 = vcmask 130048
        %3773 = vst.msk [vmem:[%s163] sm:$0xff] %vm3772, %v3583
        %3774 = vst.msk [vmem:[%s163 + $0x8] sm:$0xff] %vm3772, %v3589
        %3775 = vst.msk [vmem:[%s163 + $0x10] sm:$0xff] %vm3772, %v3595
        %3776 = vst.msk [vmem:[%s163 + $0x18] sm:$0xff] %vm3772, %v3601
        %3777 = vst.msk [vmem:[%s163 + $0x20] sm:$0xff] %vm3772, %v3607
        %3778 = vst.msk [vmem:[%s163 + $0x28] sm:$0xff] %vm3772, %v3613
        %3779 = vst.msk [vmem:[%s163 + $0x30] sm:$0xff] %vm3772, %v3619
        %3780 = vst.msk [vmem:[%s163 + $0x38] sm:$0xff] %vm3772, %v3625
        %3781 = vst.msk [vmem:[%s163 + $0x40] sm:$0xff] %vm3772, %v3631
        %3782 = vst.msk [vmem:[%s163 + $0x48] sm:$0xff] %vm3772, %v3637
        %3783 = vst.msk [vmem:[%s163 + $0x50] sm:$0xff] %vm3772, %v3643
        %3784 = vst.msk [vmem:[%s163 + $0x58] sm:$0xff] %vm3772, %v3649
        %3785 = vst.msk [vmem:[%s163 + $0x60] sm:$0xff] %vm3772, %v3655
        %3786 = vst.msk [vmem:[%s163 + $0x68] sm:$0xff] %vm3772, %v3661
        %3787 = vst.msk [vmem:[%s163 + $0x70] sm:$0xff] %vm3772, %v3667
        %3788 = vst.msk [vmem:[%s163 + $0x78] sm:$0xff] %vm3772, %v3673
        %3789 = vst.msk [vmem:[%s163 + $0x80] sm:$0xff] %vm3772, %v3679
        %3790 = vst.msk [vmem:[%s163 + $0x88] sm:$0xff] %vm3772, %v3685
        %3791 = vst.msk [vmem:[%s163 + $0x90] sm:$0xff] %vm3772, %v3691
        %3792 = vst.msk [vmem:[%s163 + $0x98] sm:$0xff] %vm3772, %v3697
        %3793 = vst.msk [vmem:[%s163 + $0xa0] sm:$0xff] %vm3772, %v3703
        %3794 = vst.msk [vmem:[%s163 + $0xa8] sm:$0xff] %vm3772, %v3709
        %3795 = vst.msk [vmem:[%s163 + $0xb0] sm:$0xff] %vm3772, %v3715
        %3796 = vst.msk [vmem:[%s163 + $0xb8] sm:$0xff] %vm3772, %v3721
        %3797 = vst.msk [vmem:[%s163 + $0xc0] sm:$0xff] %vm3772, %v3727
        %3798 = vst.msk [vmem:[%s163 + $0xc8] sm:$0xff] %vm3772, %v3733
        %3799 = vst.msk [vmem:[%s163 + $0xd0] sm:$0xff] %vm3772, %v3739
        %3800 = vst.msk [vmem:[%s163 + $0xd8] sm:$0xff] %vm3772, %v3745
        %3801 = vst.msk [vmem:[%s163 + $0xe0] sm:$0xff] %vm3772, %v3751
        %3802 = vst.msk [vmem:[%s163 + $0xe8] sm:$0xff] %vm3772, %v3757
        %3803 = vst.msk [vmem:[%s163 + $0xf0] sm:$0xff] %vm3772, %v3763
        %3804 = vst.msk [vmem:[%s163 + $0xf8] sm:$0xff] %vm3772, %v3769
        %s3805 = sand.u32 %s93, 1
        %s3806 = scalar_lea.sflag [#allocation3], %s3805
        %s3807 = sand.u32 %s93, 1
        %s3808 = smul.addr %s3807, 256
        %s3809 = scalar_lea.vmem [#allocation2], %s3808
        // Predicated region
        $region33: #{tpu_custom_call.1} parent=31 // pred_check
          %p3810 = pneg %p103
        $region34: #{tpu_custom_call.1} parent=31 // pred_check_branch
          %3812 = sbr.rel (%p3810) target = $region36
        $region35: #{tpu_custom_call.1} parent=31 // pred_region
          %s3814 = ssub.s32 4096, 4096
          %3815 = vsyncadd %s3806, %s3814
          %s3816 = smul.addr %s17, 32
          %s3817 = smul.addr %s3816, 128
          %s3818 = scalar_lea.hbm %s3, %s3817
          %s3819 = sshll.u32 %s3809, 4
          %s3820 = int_to_ptr.vmem [resolvable:$true] %s3819
          %3825 = dma.vmem_to_hbm [thread:$0]  %s3820, 4096, %s3818, %s3806, 128, 128, 8
        $region36: #{tpu_custom_call.1} parent=31 // pred_fallthru
          _
      $region32: #{tpu_custom_call.1} parent=5 // pred_fallthru
        _
      %p3826 = scmp.le.s32.totalorder 2, %s12
      // Predicated region
      $region37: #{tpu_custom_call.1} parent=5 // pred_check
        %p3827 = pneg %p3826
      $region38: #{tpu_custom_call.1} parent=5 // pred_check_branch
        %3829 = sbr.rel (%p3827) target = $region40
      $region39: #{tpu_custom_call.1} parent=5 // pred_region
        %s3830 = ssub.s32 %s12, 2
        // Predicated region
        $region41: #{tpu_custom_call.1} parent=39 // pred_check
          %p3831 = pneg %p109
        $region42: #{tpu_custom_call.1} parent=39 // pred_check_branch
          %3833 = sbr.rel (%p3831) target = $region44
        $region43: #{tpu_custom_call.1} parent=39 // pred_region
          %s3834 = sand.u32 %s94, 1
          %s3835 = scalar_lea.sflag [#allocation3], %s3834
          %s3836 = sand.u32 %s94, 1
          %s3837 = smul.addr %s3836, 256
          %s3838 = scalar_lea.vmem [#allocation2], %s3837
          %3839 = dma.done %s3835, 4096
        $region44: #{tpu_custom_call.1} parent=39 // pred_fallthru
          _
      $region40: #{tpu_custom_call.1} parent=5 // pred_fallthru
        _
    $region6: #{tpu_custom_call.1} parent=1 // loop_footer
      %s16 = sadd.s32 1, %s12
    $region7: #{tpu_custom_call.1} parent=1 // loop_footer_branch
      %11 = sbr.rel target = $region3
    $region8: #{tpu_custom_call.1} parent=1 // loop_exit
      _
    %3840 = vsyncpa [#allocation3], 1
    %s3841 = scalar_lea.sflag [#allocation3], 1
    %3842 = vsyncpa %s3841, 1

</llo_original>
